<compile_context>
chip_gen: v5e
topology: v5e:2x2
jax: 0.10.0
libtpu: 0.0.40
codegen_flags: <defaults>
</compile_context>

<pallas_src>
import numpy as np
import jax
import jax.numpy as jnp
from jax.experimental import pallas as pl
from jax.experimental.pallas import tpu as pltpu


def _bn_fold(gamma, beta, mean, var, eps=1e-5):
    scale = (gamma / jnp.sqrt(var + eps)).astype(jnp.float32)
    bias = (beta - mean * scale).astype(jnp.float32)
    return scale.reshape(-1, 1), bias.reshape(-1, 1)          # (C, 1) columns


def _conv_taps(downsample):
    """Tap offsets in output-grid coordinates."""
    taps2 = [(di, dj) for di in (-1, 0, 1) for dj in (-1, 0, 1)]   # conv2: 3x3 stride 1
    if downsample:
        taps1 = [(di, dj) for di in (-1, 0) for dj in (-1, 0)]     # conv1 on s2d input
    else:
        taps1 = taps2                                              # conv1: 3x3 stride 1
    return taps1, taps2


def _tap_masks(taps, Ho, Wo, Nb):
    """(T, 1, Nb*Ho*Wo) f32 validity mask per tap, tiled over the Nb images stacked on
    the lane axis (1.0 where the source pixel of that image is in-bounds)."""
    ii, jj = np.meshgrid(np.arange(Ho), np.arange(Wo), indexing="ij")
    m = np.zeros((len(taps), 1, Ho * Wo), np.float32)
    for t, (di, dj) in enumerate(taps):
        ok = (ii + di >= 0) & (ii + di < Ho) & (jj + dj >= 0) & (jj + dj < Wo)
        m[t, 0] = ok.reshape(-1)
    return jnp.asarray(np.tile(m, (1, 1, Nb)))


def _make_kernel(downsample, Nb, Cin, Cout, Ho, Wo):
    HWo = Ho * Wo
    L = Nb * HWo                                # lane width of every spatial tile
    taps1, taps2 = _conv_taps(downsample)
    C1 = 4 * Cin if downsample else Cin

    def shifted(val, di, dj, mask):
        """val: (C, L) f32 with Nb images stacked on lanes.  For every image b,
        out[:, b*HWo + i*Wo + j] = val[:, b*HWo + (i+di)*Wo + (j+dj)], zero when the
        source falls outside that image's (Ho, Wo) grid (mask is a precomputed 0/1 row).
        The roll wraps across row / image boundaries only at positions the mask zeroes."""
        off = di * Wo + dj
        y = val if off == 0 else pltpu.roll(val, shift=(-off) % L, axis=1)
        if di == 0 and dj == 0:
            return y
        return y * mask

    def kernel(*refs):
        if downsample:
            (x_ref, w1_ref, s1_ref, b1_ref, m1_ref,
             w2_ref, s2_ref, b2_ref, m2_ref,
             wd_ref, bd_ref, sd_ref, cd_ref,
             wu_ref, bu_ref, su_ref, cu_ref,
             wm_ref, sm_ref, bm_ref,
             out_ref, col1_ref, col2_ref) = refs
        else:
            (x_ref, w1_ref, s1_ref, b1_ref, m1_ref,
             w2_ref, s2_ref, b2_ref, m2_ref,
             wd_ref, bd_ref, sd_ref, cd_ref,
             wu_ref, bu_ref, su_ref, cu_ref,
             out_ref, col1_ref, col2_ref) = refs
            wm_ref = sm_ref = bm_ref = None

        # Hoist constant loads (no re-loads inside the tap loops).
        w1m = w1_ref[...]                         # (Cout, T1*C1)  bf16
        w2m = w2_ref[...]                         # (Cout, 9*Cout) bf16
        s1, b1 = s1_ref[...], b1_ref[...]         # (Cout, 1) f32
        s2, b2 = s2_ref[...], b2_ref[...]
        wd, bd = wd_ref[...], bd_ref[...]         # (Cr, Cout), (Cr, 1)
        sd, cd = sd_ref[...], cd_ref[...]
        wu, bu = wu_ref[...], bu_ref[...]         # (Cout, Cr), (Cout, 1)
        su, cu = su_ref[...], cu_ref[...]
        m1 = [m1_ref[t] for t in range(len(taps1))]   # each (1, L) f32
        m2 = [m2_ref[t] for t in range(len(taps2))]

        xb = x_ref[0].astype(jnp.float32)         # (C1, L), spatial*batch on lanes

        # --- conv1: ONE K = len(taps1)*C1 matmul for all Nb images (im2col in VMEM) ---
        for t, (di, dj) in enumerate(taps1):
            col1_ref[t * C1:(t + 1) * C1, :] = shifted(xb, di, dj, m1[t]).astype(jnp.bfloat16)
        h1 = jnp.dot(w1m, col1_ref[...], preferred_element_type=jnp.float32)  # (Cout, L)
        h1 = jnp.maximum(h1 * s1 + b1, 0.0)       # batch_norm1 (eval) + ReLU

        # --- conv2: 3x3 stride 1, same im2col scheme (K = 9*Cout) ---
        for t, (di, dj) in enumerate(taps2):
            col2_ref[t * Cout:(t + 1) * Cout, :] = shifted(h1, di, dj, m2[t]).astype(jnp.bfloat16)
        h2 = jnp.dot(w2m, col2_ref[...], preferred_element_type=jnp.float32)  # (Cout, L)
        h2 = h2 * s2 + b2                          # batch_norm2 (eval)

        # --- squeeze-excite (per image): pool -> fc -> bn -> relu -> fc -> bn -> sigmoid ---
        pooled = jnp.concatenate(
            [jnp.mean(h2[:, b * HWo:(b + 1) * HWo], axis=1, keepdims=True)
             for b in range(Nb)], axis=1)                                 # (Cout, Nb)
        z = jnp.dot(wd, pooled, preferred_element_type=jnp.float32) + bd  # (Cr, Nb)
        z = jnp.maximum(z * sd + cd, 0.0)                                 # bn_down + ReLU
        z = jnp.dot(wu, z, preferred_element_type=jnp.float32) + bu       # (Cout, Nb)
        z = z * su + cu                                                   # bn_up
        gate = 1.0 / (1.0 + jnp.exp(-z))                                  # sigmoid (Cout, Nb)

        # --- shortcut ---
        if downsample:
            sc = jnp.dot(wm_ref[...], xb[0:Cin, :].astype(jnp.bfloat16),  # phase (0,0)
                         preferred_element_type=jnp.float32)              # (Cout, L)
            sc = sc * sm_ref[...] + bm_ref[...]                           # batch_norm_main
        else:
            sc = xb                                                       # identity (f32)

        # --- gate * h2 + shortcut, ReLU; one lane-dense store for the whole step ---
        parts = []
        for b in range(Nb):
            sl = slice(b * HWo, (b + 1) * HWo)
            parts.append(jnp.maximum(h2[:, sl] * gate[:, b:b + 1] + sc[:, sl], 0.0))
        out_ref[0] = parts[0] if Nb == 1 else jnp.concatenate(parts, axis=1)

    return kernel


def bottleneck_forward(x_nchw, params, *, downsample, nb_max=8):
    """x_nchw: (N, Cin, H, W) float32 (PyTorch layout). Returns (N, Cout, Ho, Wo) float32."""
    N, Cin, H, W = x_nchw.shape
    Cout = params['w1'].shape[-1]
    stride = 2 if downsample else 1
    Ho, Wo = H // stride, W // stride
    HWo = Ho * Wo
    taps1, taps2 = _conv_taps(downsample)

    # Images per grid step: largest divisor of N up to nb_max (amortizes per-step overhead
    # and widens every lane-axis tile to Nb*HWo).
    Nb = max(d for d in range(1, min(N, nb_max) + 1) if N % d == 0)
    steps = N // Nb

    w1 = params['w1'].astype(jnp.float32)                   # (3, 3, Cin, Cout) HWIO
    w2 = params['w2'].astype(jnp.float32)
    w1t = jnp.transpose(w1, (3, 0, 1, 2))                   # (Cout, 3, 3, Cin)
    w2t = jnp.transpose(w2, (3, 0, 1, 2))

    if downsample:
        assert H % 2 == 0 and W % 2 == 0, "downsample path assumes even H and W"
        # Space-to-depth: x_s2d[n, phase*Cin+ci, i*Wo+j] = x[n, ci, 2i+ph_r, 2j+ph_c],
        # phase = 2*ph_r + ph_c.  Turns the stride-2 3x3 conv into a dense 4-tap conv.
        xr = x_nchw.reshape(N, Cin, Ho, 2, Wo, 2)
        x_img = jnp.transpose(xr, (0, 3, 5, 1, 2, 4)).reshape(N, 4 * Cin, HWo)
        C1 = 4 * Cin
        kmap = {0: (1, -1), 1: (0, 0), 2: (1, 0)}           # kernel index -> (phase, block offset)
        w1g = jnp.zeros((Cout, len(taps1), 4, Cin), jnp.float32)
        for kh in range(3):
            ph_r, dbr = kmap[kh]
            for kw in range(3):
                ph_c, dbc = kmap[kw]
                t = taps1.index((dbr, dbc))
                w1g = w1g.at[:, t, ph_r * 2 + ph_c, :].set(w1t[:, kh, kw, :])
        w1_mat = w1g.reshape(Cout, len(taps1) * C1)
    else:
        assert Cin == Cout, "identity shortcut requires in_channels == out_channels"
        x_img = x_nchw.reshape(N, Cin, HWo)                 # free reshape, no pad / no copy
        C1 = Cin
        w1_mat = w1t.reshape(Cout, 9 * Cin)

    # Stack Nb images along the lane axis: (steps, C1, Nb*HWo).
    x_in = jnp.transpose(x_img.reshape(steps, Nb, C1, HWo),
                         (0, 2, 1, 3)).reshape(steps, C1, Nb * HWo)

    w2_mat = w2t.reshape(Cout, 9 * Cout)

    s1, b1 = _bn_fold(*params['bn1'])                       # (Cout, 1)
    s2, b2 = _bn_fold(*params['bn2'])
    wd_t = params['wd'].T.astype(jnp.float32)               # (Cr, Cout)
    bd = params['bd'].reshape(-1, 1).astype(jnp.float32)    # (Cr, 1)
    sd, cd = _bn_fold(*params['bn_down'])
    wu_t = params['wu'].T.astype(jnp.float32)               # (Cout, Cr)
    bu = params['bu'].reshape(-1, 1).astype(jnp.float32)
    su, cu = _bn_fold(*params['bn_up'])

    mask1 = _tap_masks(taps1, Ho, Wo, Nb)                   # (T1, 1, Nb*HWo)
    mask2 = _tap_masks(taps2, Ho, Wo, Nb)                   # (9, 1, Nb*HWo)

    inputs = [x_in,
              w1_mat.astype(jnp.bfloat16), s1, b1, mask1,
              w2_mat.astype(jnp.bfloat16), s2, b2, mask2,
              wd_t, bd, sd, cd, wu_t, bu, su, cu]
    if downsample:
        wm_t = jnp.transpose(params['wm'].reshape(Cin, Cout)).astype(jnp.bfloat16)  # (Cout, Cin)
        sm, bm = _bn_fold(*params['bn_main'])
        inputs += [wm_t, sm, bm]

    def const_spec(a):
        nd = a.ndim
        return pl.BlockSpec(a.shape, lambda n, _nd=nd: (0,) * _nd)

    in_specs = [pl.BlockSpec((1, C1, Nb * HWo), lambda n: (n, 0, 0))]
    in_specs += [const_spec(a) for a in inputs[1:]]

    kernel = _make_kernel(downsample, Nb, Cin, Cout, Ho, Wo)

    out = pl.pallas_call(
        kernel,
        out_shape=jax.ShapeDtypeStruct((steps, Cout, Nb * HWo), jnp.float32),
        grid=(steps,),
        in_specs=in_specs,
        out_specs=pl.BlockSpec((1, Cout, Nb * HWo), lambda n: (n, 0, 0)),
        scratch_shapes=[pltpu.VMEM((len(taps1) * C1, Nb * HWo), jnp.bfloat16),    # conv1 im2col
                        pltpu.VMEM((len(taps2) * Cout, Nb * HWo), jnp.bfloat16)],  # conv2 im2col
        # Batch axis is fully independent -> "parallel" lets v7x shard it across its 2 TCs.
        compiler_params=pltpu.CompilerParams(dimension_semantics=("parallel",)),
    )(*inputs)

    out = out.reshape(steps, Cout, Nb, HWo)
    out = jnp.transpose(out, (0, 2, 1, 3)).reshape(N, Cout, Ho, Wo)
    return out


def bottleneck_reference(x_nchw, params, *, downsample):
    """Plain-JAX reference (eval-mode BN), used only for correctness checking."""
    stride = 2 if downsample else 1
    dn = ('NCHW', 'HWIO', 'NCHW')
    eps = 1e-5

    def bn2d(y, p):
        g, b, m, v = [a.reshape(1, -1, 1, 1) for a in p]
        return (y - m) / jnp.sqrt(v + eps) * g + b

    def bn1d(y, p):
        g, b, m, v = p
        return (y - m) / jnp.sqrt(v + eps) * g + b

    if downsample:
        sc = jax.lax.conv_general_dilated(x_nchw, params['wm'], (stride, stride),
                                          'VALID', dimension_numbers=dn)
        sc = bn2d(sc, params['bn_main'])
    else:
        sc = x_nchw
    h = jax.lax.conv_general_dilated(x_nchw, params['w1'], (stride, stride),
                                     ((1, 1), (1, 1)), dimension_numbers=dn)
    h = jnp.maximum(bn2d(h, params['bn1']), 0.0)
    h = jax.lax.conv_general_dilated(h, params['w2'], (1, 1),
                                     ((1, 1), (1, 1)), dimension_numbers=dn)
    h = bn2d(h, params['bn2'])
    pooled = jnp.mean(h, axis=(2, 3))                        # (N, Cout)
    z = pooled @ params['wd'] + params['bd']
    z = jnp.maximum(bn1d(z, params['bn_down']), 0.0)
    z = z @ params['wu'] + params['bu']
    gate = jax.nn.sigmoid(bn1d(z, params['bn_up']))[:, :, None, None]
    return jnp.maximum(h * gate + sc, 0.0)


def init_params(key, in_channels, out_channels, downsample):
    Cr = out_channels // 16
    ks = jax.random.split(key, 12)

    def bn_init(k, c):
        k1, k2, k3, k4 = jax.random.split(k, 4)
        gamma = jax.random.uniform(k1, (c,), jnp.float32, 0.5, 1.5)
        beta = 0.1 * jax.random.normal(k2, (c,), jnp.float32)
        mean = 0.1 * jax.random.normal(k3, (c,), jnp.float32)
        var = jax.random.uniform(k4, (c,), jnp.float32, 0.5, 1.5)
        return gamma, beta, mean, var

    params = {
        'w1': 0.05 * jax.random.normal(ks[0], (3, 3, in_channels, out_channels), jnp.float32),
        'bn1': bn_init(ks[1], out_channels),
        'w2': 0.05 * jax.random.normal(ks[2], (3, 3, out_channels, out_channels), jnp.float32),
        'bn2': bn_init(ks[3], out_channels),
        'wd': 0.2 * jax.random.normal(ks[4], (out_channels, Cr), jnp.float32),
        'bd': 0.1 * jax.random.normal(ks[5], (Cr,), jnp.float32),
        'bn_down': bn_init(ks[6], Cr),
        'wu': 0.2 * jax.random.normal(ks[7], (Cr, out_channels), jnp.float32),
        'bu': 0.1 * jax.random.normal(ks[8], (out_channels,), jnp.float32),
        'bn_up': bn_init(ks[9], out_channels),
    }
    if downsample:
        params['wm'] = 0.1 * jax.random.normal(
            ks[10], (1, 1, in_channels, out_channels), jnp.float32)
        params['bn_main'] = bn_init(ks[11], out_channels)
    return params


if __name__ == "__main__":
    key = jax.random.PRNGKey(0)
    kx, kp = jax.random.split(key)

    # Small shapes consistent with the module: BottleNeck(32, 32, downsample=False).
    # (out_channels must be >= 16 so the SE bottleneck out_channels // 16 >= 1.)
    N, Cin, H, W = 2, 32, 16, 16
    Cout = 32
    downsample = False

    x_nchw = jax.random.normal(kx, (N, Cin, H, W), jnp.float32)   # PyTorch NCHW layout
    params = init_params(kp, Cin, Cout, downsample)

    out = bottleneck_forward(x_nchw, params, downsample=downsample)
    out = jax.block_until_ready(out)

    ref = bottleneck_reference(x_nchw, params, downsample=downsample)
    assert out.shape == ref.shape, (out.shape, ref.shape)
    # Convs run on the bf16 MXU path (f32 accumulation); tolerance sized for bf16 rounding.
    err = float(jnp.max(jnp.abs(out - ref)))
    assert err < 8e-2, f"max abs error vs reference too large: {err}"

    print("KERNEL_OK")
</pallas_src>

<mosaic_0001>
module attributes {stable_mosaic.version = 11 : i64} {
  func.func @kernel(%arg0: i32, %arg1: memref<1x32x512xf32, #tpu.memory_space<vmem>>, %arg2: memref<32x288xbf16, #tpu.memory_space<vmem>>, %arg3: memref<32x1xf32, #tpu.memory_space<vmem>>, %arg4: memref<32x1xf32, #tpu.memory_space<vmem>>, %arg5: memref<9x1x512xf32, #tpu.memory_space<vmem>>, %arg6: memref<32x288xbf16, #tpu.memory_space<vmem>>, %arg7: memref<32x1xf32, #tpu.memory_space<vmem>>, %arg8: memref<32x1xf32, #tpu.memory_space<vmem>>, %arg9: memref<9x1x512xf32, #tpu.memory_space<vmem>>, %arg10: memref<2x32xf32, #tpu.memory_space<vmem>>, %arg11: memref<2x1xf32, #tpu.memory_space<vmem>>, %arg12: memref<2x1xf32, #tpu.memory_space<vmem>>, %arg13: memref<2x1xf32, #tpu.memory_space<vmem>>, %arg14: memref<32x2xf32, #tpu.memory_space<vmem>>, %arg15: memref<32x1xf32, #tpu.memory_space<vmem>>, %arg16: memref<32x1xf32, #tpu.memory_space<vmem>>, %arg17: memref<32x1xf32, #tpu.memory_space<vmem>>, %arg18: memref<1x32x512xf32, #tpu.memory_space<vmem>>, %arg19: memref<288x512xbf16, #tpu.memory_space<vmem>>, %arg20: memref<288x512xbf16, #tpu.memory_space<vmem>>) attributes {dimension_semantics = [#tpu.dimension_semantics<parallel>], iteration_bounds = array<i64: 1>, scalar_prefetch = 0 : i64, scratch_operands = 2 : i64, tpu.core_type = #tpu.core_type<tc>, window_params = [{transform_indices = @transform_0, window_bounds = array<i64: 1, 32, 512>}, {pipeline_mode = #tpu.pipeline_mode<synchronous>, transform_indices = @transform_1, window_bounds = array<i64: 32, 288>}, {pipeline_mode = #tpu.pipeline_mode<synchronous>, transform_indices = @transform_2, window_bounds = array<i64: 32, 1>}, {pipeline_mode = #tpu.pipeline_mode<synchronous>, transform_indices = @transform_3, window_bounds = array<i64: 32, 1>}, {pipeline_mode = #tpu.pipeline_mode<synchronous>, transform_indices = @transform_4, window_bounds = array<i64: 9, 1, 512>}, {pipeline_mode = #tpu.pipeline_mode<synchronous>, transform_indices = @transform_5, window_bounds = array<i64: 32, 288>}, {pipeline_mode = #tpu.pipeline_mode<synchronous>, transform_indices = @transform_6, window_bounds = array<i64: 32, 1>}, {pipeline_mode = #tpu.pipeline_mode<synchronous>, transform_indices = @transform_7, window_bounds = array<i64: 32, 1>}, {pipeline_mode = #tpu.pipeline_mode<synchronous>, transform_indices = @transform_8, window_bounds = array<i64: 9, 1, 512>}, {pipeline_mode = #tpu.pipeline_mode<synchronous>, transform_indices = @transform_9, window_bounds = array<i64: 2, 32>}, {pipeline_mode = #tpu.pipeline_mode<synchronous>, transform_indices = @transform_10, window_bounds = array<i64: 2, 1>}, {pipeline_mode = #tpu.pipeline_mode<synchronous>, transform_indices = @transform_11, window_bounds = array<i64: 2, 1>}, {pipeline_mode = #tpu.pipeline_mode<synchronous>, transform_indices = @transform_12, window_bounds = array<i64: 2, 1>}, {pipeline_mode = #tpu.pipeline_mode<synchronous>, transform_indices = @transform_13, window_bounds = array<i64: 32, 2>}, {pipeline_mode = #tpu.pipeline_mode<synchronous>, transform_indices = @transform_14, window_bounds = array<i64: 32, 1>}, {pipeline_mode = #tpu.pipeline_mode<synchronous>, transform_indices = @transform_15, window_bounds = array<i64: 32, 1>}, {pipeline_mode = #tpu.pipeline_mode<synchronous>, transform_indices = @transform_16, window_bounds = array<i64: 32, 1>}, {transform_indices = @transform_17, window_bounds = array<i64: 1, 32, 512>}]} {
    %c0 = arith.constant 0 : index
    %c0_0 = arith.constant 0 : index
    %0 = vector.load %arg2[%c0, %c0_0] : memref<32x288xbf16, #tpu.memory_space<vmem>>, vector<32x288xbf16>
    %c0_1 = arith.constant 0 : index
    %c0_2 = arith.constant 0 : index
    %1 = vector.load %arg6[%c0_1, %c0_2] : memref<32x288xbf16, #tpu.memory_space<vmem>>, vector<32x288xbf16>
    %c0_3 = arith.constant 0 : index
    %c0_4 = arith.constant 0 : index
    %2 = vector.load %arg3[%c0_3, %c0_4] : memref<32x1xf32, #tpu.memory_space<vmem>>, vector<32x1xf32>
    %c0_5 = arith.constant 0 : index
    %c0_6 = arith.constant 0 : index
    %3 = vector.load %arg4[%c0_5, %c0_6] : memref<32x1xf32, #tpu.memory_space<vmem>>, vector<32x1xf32>
    %c0_7 = arith.constant 0 : index
    %c0_8 = arith.constant 0 : index
    %4 = vector.load %arg7[%c0_7, %c0_8] : memref<32x1xf32, #tpu.memory_space<vmem>>, vector<32x1xf32>
    %c0_9 = arith.constant 0 : index
    %c0_10 = arith.constant 0 : index
    %5 = vector.load %arg8[%c0_9, %c0_10] : memref<32x1xf32, #tpu.memory_space<vmem>>, vector<32x1xf32>
    %c0_11 = arith.constant 0 : index
    %c0_12 = arith.constant 0 : index
    %6 = vector.load %arg10[%c0_11, %c0_12] : memref<2x32xf32, #tpu.memory_space<vmem>>, vector<2x32xf32>
    %c0_13 = arith.constant 0 : index
    %c0_14 = arith.constant 0 : index
    %7 = vector.load %arg11[%c0_13, %c0_14] : memref<2x1xf32, #tpu.memory_space<vmem>>, vector<2x1xf32>
    %c0_15 = arith.constant 0 : index
    %c0_16 = arith.constant 0 : index
    %8 = vector.load %arg12[%c0_15, %c0_16] : memref<2x1xf32, #tpu.memory_space<vmem>>, vector<2x1xf32>
    %c0_17 = arith.constant 0 : index
    %c0_18 = arith.constant 0 : index
    %9 = vector.load %arg13[%c0_17, %c0_18] : memref<2x1xf32, #tpu.memory_space<vmem>>, vector<2x1xf32>
    %c0_19 = arith.constant 0 : index
    %c0_20 = arith.constant 0 : index
    %10 = vector.load %arg14[%c0_19, %c0_20] : memref<32x2xf32, #tpu.memory_space<vmem>>, vector<32x2xf32>
    %c0_21 = arith.constant 0 : index
    %c0_22 = arith.constant 0 : index
    %11 = vector.load %arg15[%c0_21, %c0_22] : memref<32x1xf32, #tpu.memory_space<vmem>>, vector<32x1xf32>
    %c0_23 = arith.constant 0 : index
    %c0_24 = arith.constant 0 : index
    %12 = vector.load %arg16[%c0_23, %c0_24] : memref<32x1xf32, #tpu.memory_space<vmem>>, vector<32x1xf32>
    %c0_25 = arith.constant 0 : index
    %c0_26 = arith.constant 0 : index
    %13 = vector.load %arg17[%c0_25, %c0_26] : memref<32x1xf32, #tpu.memory_space<vmem>>, vector<32x1xf32>
    %c0_27 = arith.constant 0 : index
    %c0_28 = arith.constant 0 : index
    %c0_29 = arith.constant 0 : index
    %14 = vector.load %arg5[%c0_27, %c0_28, %c0_29] : memref<9x1x512xf32, #tpu.memory_space<vmem>>, vector<1x1x512xf32>
    %15 = vector.shape_cast %14 : vector<1x1x512xf32> to vector<1x512xf32>
    %c1 = arith.constant 1 : index
    %c0_30 = arith.constant 0 : index
    %c0_31 = arith.constant 0 : index
    %16 = vector.load %arg5[%c1, %c0_30, %c0_31] : memref<9x1x512xf32, #tpu.memory_space<vmem>>, vector<1x1x512xf32>
    %17 = vector.shape_cast %16 : vector<1x1x512xf32> to vector<1x512xf32>
    %c2 = arith.constant 2 : index
    %c0_32 = arith.constant 0 : index
    %c0_33 = arith.constant 0 : index
    %18 = vector.load %arg5[%c2, %c0_32, %c0_33] : memref<9x1x512xf32, #tpu.memory_space<vmem>>, vector<1x1x512xf32>
    %19 = vector.shape_cast %18 : vector<1x1x512xf32> to vector<1x512xf32>
    %c3 = arith.constant 3 : index
    %c0_34 = arith.constant 0 : index
    %c0_35 = arith.constant 0 : index
    %20 = vector.load %arg5[%c3, %c0_34, %c0_35] : memref<9x1x512xf32, #tpu.memory_space<vmem>>, vector<1x1x512xf32>
    %21 = vector.shape_cast %20 : vector<1x1x512xf32> to vector<1x512xf32>
    %c5 = arith.constant 5 : index
    %c0_36 = arith.constant 0 : index
    %c0_37 = arith.constant 0 : index
    %22 = vector.load %arg5[%c5, %c0_36, %c0_37] : memref<9x1x512xf32, #tpu.memory_space<vmem>>, vector<1x1x512xf32>
    %23 = vector.shape_cast %22 : vector<1x1x512xf32> to vector<1x512xf32>
    %c6 = arith.constant 6 : index
    %c0_38 = arith.constant 0 : index
    %c0_39 = arith.constant 0 : index
    %24 = vector.load %arg5[%c6, %c0_38, %c0_39] : memref<9x1x512xf32, #tpu.memory_space<vmem>>, vector<1x1x512xf32>
    %25 = vector.shape_cast %24 : vector<1x1x512xf32> to vector<1x512xf32>
    %c7 = arith.constant 7 : index
    %c0_40 = arith.constant 0 : index
    %c0_41 = arith.constant 0 : index
    %26 = vector.load %arg5[%c7, %c0_40, %c0_41] : memref<9x1x512xf32, #tpu.memory_space<vmem>>, vector<1x1x512xf32>
    %27 = vector.shape_cast %26 : vector<1x1x512xf32> to vector<1x512xf32>
    %c8 = arith.constant 8 : index
    %c0_42 = arith.constant 0 : index
    %c0_43 = arith.constant 0 : index
    %28 = vector.load %arg5[%c8, %c0_42, %c0_43] : memref<9x1x512xf32, #tpu.memory_space<vmem>>, vector<1x1x512xf32>
    %29 = vector.shape_cast %28 : vector<1x1x512xf32> to vector<1x512xf32>
    %c0_44 = arith.constant 0 : index
    %c0_45 = arith.constant 0 : index
    %c0_46 = arith.constant 0 : index
    %30 = vector.load %arg9[%c0_44, %c0_45, %c0_46] : memref<9x1x512xf32, #tpu.memory_space<vmem>>, vector<1x1x512xf32>
    %31 = vector.shape_cast %30 : vector<1x1x512xf32> to vector<1x512xf32>
    %c1_47 = arith.constant 1 : index
    %c0_48 = arith.constant 0 : index
    %c0_49 = arith.constant 0 : index
    %32 = vector.load %arg9[%c1_47, %c0_48, %c0_49] : memref<9x1x512xf32, #tpu.memory_space<vmem>>, vector<1x1x512xf32>
    %33 = vector.shape_cast %32 : vector<1x1x512xf32> to vector<1x512xf32>
    %c2_50 = arith.constant 2 : index
    %c0_51 = arith.constant 0 : index
    %c0_52 = arith.constant 0 : index
    %34 = vector.load %arg9[%c2_50, %c0_51, %c0_52] : memref<9x1x512xf32, #tpu.memory_space<vmem>>, vector<1x1x512xf32>
    %35 = vector.shape_cast %34 : vector<1x1x512xf32> to vector<1x512xf32>
    %c3_53 = arith.constant 3 : index
    %c0_54 = arith.constant 0 : index
    %c0_55 = arith.constant 0 : index
    %36 = vector.load %arg9[%c3_53, %c0_54, %c0_55] : memref<9x1x512xf32, #tpu.memory_space<vmem>>, vector<1x1x512xf32>
    %37 = vector.shape_cast %36 : vector<1x1x512xf32> to vector<1x512xf32>
    %c5_56 = arith.constant 5 : index
    %c0_57 = arith.constant 0 : index
    %c0_58 = arith.constant 0 : index
    %38 = vector.load %arg9[%c5_56, %c0_57, %c0_58] : memref<9x1x512xf32, #tpu.memory_space<vmem>>, vector<1x1x512xf32>
    %39 = vector.shape_cast %38 : vector<1x1x512xf32> to vector<1x512xf32>
    %c6_59 = arith.constant 6 : index
    %c0_60 = arith.constant 0 : index
    %c0_61 = arith.constant 0 : index
    %40 = vector.load %arg9[%c6_59, %c0_60, %c0_61] : memref<9x1x512xf32, #tpu.memory_space<vmem>>, vector<1x1x512xf32>
    %41 = vector.shape_cast %40 : vector<1x1x512xf32> to vector<1x512xf32>
    %c7_62 = arith.constant 7 : index
    %c0_63 = arith.constant 0 : index
    %c0_64 = arith.constant 0 : index
    %42 = vector.load %arg9[%c7_62, %c0_63, %c0_64] : memref<9x1x512xf32, #tpu.memory_space<vmem>>, vector<1x1x512xf32>
    %43 = vector.shape_cast %42 : vector<1x1x512xf32> to vector<1x512xf32>
    %c8_65 = arith.constant 8 : index
    %c0_66 = arith.constant 0 : index
    %c0_67 = arith.constant 0 : index
    %44 = vector.load %arg9[%c8_65, %c0_66, %c0_67] : memref<9x1x512xf32, #tpu.memory_space<vmem>>, vector<1x1x512xf32>
    %45 = vector.shape_cast %44 : vector<1x1x512xf32> to vector<1x512xf32>
    %c0_68 = arith.constant 0 : index
    %c0_69 = arith.constant 0 : index
    %c0_70 = arith.constant 0 : index
    %46 = vector.load %arg1[%c0_68, %c0_69, %c0_70] : memref<1x32x512xf32, #tpu.memory_space<vmem>>, vector<1x32x512xf32>
    %47 = vector.shape_cast %46 : vector<1x32x512xf32> to vector<32x512xf32>
    %c17_i32 = arith.constant 17 : i32
    %48 = tpu.dynamic_rotate %47 by %c17_i32 dim 1 : vector<32x512xf32>, i32 -> vector<32x512xf32>
    %49 = vector.broadcast %15 : vector<1x512xf32> to vector<32x512xf32>
    %50 = arith.mulf %48, %49 : vector<32x512xf32>
    %51 = arith.truncf %50 : vector<32x512xf32> to vector<32x512xbf16>
    %c0_71 = arith.constant 0 : index
    %c0_72 = arith.constant 0 : index
    %52 = vector.load %arg19[%c0_71, %c0_72] : memref<288x512xbf16, #tpu.memory_space<vmem>>, vector<32x512xbf16>
    tpu.vector_store %arg19[%c0_71, %c0_72], %51 {strides = array<i32>} : memref<288x512xbf16, #tpu.memory_space<vmem>>, vector<32x512xbf16>,
    %c16_i32 = arith.constant 16 : i32
    %53 = tpu.dynamic_rotate %47 by %c16_i32 dim 1 : vector<32x512xf32>, i32 -> vector<32x512xf32>
    %54 = vector.broadcast %17 : vector<1x512xf32> to vector<32x512xf32>
    %55 = arith.mulf %53, %54 : vector<32x512xf32>
    %56 = arith.truncf %55 : vector<32x512xf32> to vector<32x512xbf16>
    %c32 = arith.constant 32 : index
    %c0_73 = arith.constant 0 : index
    %57 = vector.load %arg19[%c32, %c0_73] : memref<288x512xbf16, #tpu.memory_space<vmem>>, vector<32x512xbf16>
    tpu.vector_store %arg19[%c32, %c0_73], %56 {strides = array<i32>} : memref<288x512xbf16, #tpu.memory_space<vmem>>, vector<32x512xbf16>,
    %c15_i32 = arith.constant 15 : i32
    %58 = tpu.dynamic_rotate %47 by %c15_i32 dim 1 : vector<32x512xf32>, i32 -> vector<32x512xf32>
    %59 = vector.broadcast %19 : vector<1x512xf32> to vector<32x512xf32>
    %60 = arith.mulf %58, %59 : vector<32x512xf32>
    %61 = arith.truncf %60 : vector<32x512xf32> to vector<32x512xbf16>
    %c64 = arith.constant 64 : index
    %c0_74 = arith.constant 0 : index
    %62 = vector.load %arg19[%c64, %c0_74] : memref<288x512xbf16, #tpu.memory_space<vmem>>, vector<32x512xbf16>
    tpu.vector_store %arg19[%c64, %c0_74], %61 {strides = array<i32>} : memref<288x512xbf16, #tpu.memory_space<vmem>>, vector<32x512xbf16>,
    %c1_i32 = arith.constant 1 : i32
    %63 = tpu.dynamic_rotate %47 by %c1_i32 dim 1 : vector<32x512xf32>, i32 -> vector<32x512xf32>
    %64 = vector.broadcast %21 : vector<1x512xf32> to vector<32x512xf32>
    %65 = arith.mulf %63, %64 : vector<32x512xf32>
    %66 = arith.truncf %65 : vector<32x512xf32> to vector<32x512xbf16>
    %c96 = arith.constant 96 : index
    %c0_75 = arith.constant 0 : index
    %67 = vector.load %arg19[%c96, %c0_75] : memref<288x512xbf16, #tpu.memory_space<vmem>>, vector<32x512xbf16>
    tpu.vector_store %arg19[%c96, %c0_75], %66 {strides = array<i32>} : memref<288x512xbf16, #tpu.memory_space<vmem>>, vector<32x512xbf16>,
    %68 = arith.truncf %47 : vector<32x512xf32> to vector<32x512xbf16>
    %c128 = arith.constant 128 : index
    %c0_76 = arith.constant 0 : index
    %69 = vector.load %arg19[%c128, %c0_76] : memref<288x512xbf16, #tpu.memory_space<vmem>>, vector<32x512xbf16>
    tpu.vector_store %arg19[%c128, %c0_76], %68 {strides = array<i32>} : memref<288x512xbf16, #tpu.memory_space<vmem>>, vector<32x512xbf16>,
    %c511_i32 = arith.constant 511 : i32
    %70 = tpu.dynamic_rotate %47 by %c511_i32 dim 1 : vector<32x512xf32>, i32 -> vector<32x512xf32>
    %71 = vector.broadcast %23 : vector<1x512xf32> to vector<32x512xf32>
    %72 = arith.mulf %70, %71 : vector<32x512xf32>
    %73 = arith.truncf %72 : vector<32x512xf32> to vector<32x512xbf16>
    %c160 = arith.constant 160 : index
    %c0_77 = arith.constant 0 : index
    %74 = vector.load %arg19[%c160, %c0_77] : memref<288x512xbf16, #tpu.memory_space<vmem>>, vector<32x512xbf16>
    tpu.vector_store %arg19[%c160, %c0_77], %73 {strides = array<i32>} : memref<288x512xbf16, #tpu.memory_space<vmem>>, vector<32x512xbf16>,
    %c497_i32 = arith.constant 497 : i32
    %75 = tpu.dynamic_rotate %47 by %c497_i32 dim 1 : vector<32x512xf32>, i32 -> vector<32x512xf32>
    %76 = vector.broadcast %25 : vector<1x512xf32> to vector<32x512xf32>
    %77 = arith.mulf %75, %76 : vector<32x512xf32>
    %78 = arith.truncf %77 : vector<32x512xf32> to vector<32x512xbf16>
    %c192 = arith.constant 192 : index
    %c0_78 = arith.constant 0 : index
    %79 = vector.load %arg19[%c192, %c0_78] : memref<288x512xbf16, #tpu.memory_space<vmem>>, vector<32x512xbf16>
    tpu.vector_store %arg19[%c192, %c0_78], %78 {strides = array<i32>} : memref<288x512xbf16, #tpu.memory_space<vmem>>, vector<32x512xbf16>,
    %c496_i32 = arith.constant 496 : i32
    %80 = tpu.dynamic_rotate %47 by %c496_i32 dim 1 : vector<32x512xf32>, i32 -> vector<32x512xf32>
    %81 = vector.broadcast %27 : vector<1x512xf32> to vector<32x512xf32>
    %82 = arith.mulf %80, %81 : vector<32x512xf32>
    %83 = arith.truncf %82 : vector<32x512xf32> to vector<32x512xbf16>
    %c224 = arith.constant 224 : index
    %c0_79 = arith.constant 0 : index
    %84 = vector.load %arg19[%c224, %c0_79] : memref<288x512xbf16, #tpu.memory_space<vmem>>, vector<32x512xbf16>
    tpu.vector_store %arg19[%c224, %c0_79], %83 {strides = array<i32>} : memref<288x512xbf16, #tpu.memory_space<vmem>>, vector<32x512xbf16>,
    %c495_i32 = arith.constant 495 : i32
    %85 = tpu.dynamic_rotate %47 by %c495_i32 dim 1 : vector<32x512xf32>, i32 -> vector<32x512xf32>
    %86 = vector.broadcast %29 : vector<1x512xf32> to vector<32x512xf32>
    %87 = arith.mulf %85, %86 : vector<32x512xf32>
    %88 = arith.truncf %87 : vector<32x512xf32> to vector<32x512xbf16>
    %c256 = arith.constant 256 : index
    %c0_80 = arith.constant 0 : index
    %89 = vector.load %arg19[%c256, %c0_80] : memref<288x512xbf16, #tpu.memory_space<vmem>>, vector<32x512xbf16>
    tpu.vector_store %arg19[%c256, %c0_80], %88 {strides = array<i32>} : memref<288x512xbf16, #tpu.memory_space<vmem>>, vector<32x512xbf16>,
    %c0_81 = arith.constant 0 : index
    %c0_82 = arith.constant 0 : index
    %90 = vector.load %arg19[%c0_81, %c0_82] : memref<288x512xbf16, #tpu.memory_space<vmem>>, vector<288x512xbf16>
    %cst = arith.constant dense<0.000000e+00> : vector<32x512xf32>
    %91 = tpu.matmul %0, %90, %cst {dimension_numbers = #tpu.dot_dimension_numbers<[1], [0], [0], [1], [0, 0, 1, 1], [], []>} : vector<32x288xbf16>, vector<288x512xbf16>, vector<32x512xf32> -> vector<32x512xf32>
    %92 = vector.broadcast %2 : vector<32x1xf32> to vector<32x512xf32>
    %93 = arith.mulf %91, %92 : vector<32x512xf32>
    %94 = vector.broadcast %3 : vector<32x1xf32> to vector<32x512xf32>
    %95 = arith.addf %93, %94 : vector<32x512xf32>
    %cst_83 = arith.constant 0.000000e+00 : f32
    %96 = vector.broadcast %cst_83 : f32 to vector<32x512xf32>
    %97 = arith.maximumf %95, %96 : vector<32x512xf32>
    %c17_i32_84 = arith.constant 17 : i32
    %98 = tpu.dynamic_rotate %97 by %c17_i32_84 dim 1 : vector<32x512xf32>, i32 -> vector<32x512xf32>
    %99 = vector.broadcast %31 : vector<1x512xf32> to vector<32x512xf32>
    %100 = arith.mulf %98, %99 : vector<32x512xf32>
    %101 = arith.truncf %100 : vector<32x512xf32> to vector<32x512xbf16>
    %c0_85 = arith.constant 0 : index
    %c0_86 = arith.constant 0 : index
    %102 = vector.load %arg20[%c0_85, %c0_86] : memref<288x512xbf16, #tpu.memory_space<vmem>>, vector<32x512xbf16>
    tpu.vector_store %arg20[%c0_85, %c0_86], %101 {strides = array<i32>} : memref<288x512xbf16, #tpu.memory_space<vmem>>, vector<32x512xbf16>,
    %c16_i32_87 = arith.constant 16 : i32
    %103 = tpu.dynamic_rotate %97 by %c16_i32_87 dim 1 : vector<32x512xf32>, i32 -> vector<32x512xf32>
    %104 = vector.broadcast %33 : vector<1x512xf32> to vector<32x512xf32>
    %105 = arith.mulf %103, %104 : vector<32x512xf32>
    %106 = arith.truncf %105 : vector<32x512xf32> to vector<32x512xbf16>
    %c32_88 = arith.constant 32 : index
    %c0_89 = arith.constant 0 : index
    %107 = vector.load %arg20[%c32_88, %c0_89] : memref<288x512xbf16, #tpu.memory_space<vmem>>, vector<32x512xbf16>
    tpu.vector_store %arg20[%c32_88, %c0_89], %106 {strides = array<i32>} : memref<288x512xbf16, #tpu.memory_space<vmem>>, vector<32x512xbf16>,
    %c15_i32_90 = arith.constant 15 : i32
    %108 = tpu.dynamic_rotate %97 by %c15_i32_90 dim 1 : vector<32x512xf32>, i32 -> vector<32x512xf32>
    %109 = vector.broadcast %35 : vector<1x512xf32> to vector<32x512xf32>
    %110 = arith.mulf %108, %109 : vector<32x512xf32>
    %111 = arith.truncf %110 : vector<32x512xf32> to vector<32x512xbf16>
    %c64_91 = arith.constant 64 : index
    %c0_92 = arith.constant 0 : index
    %112 = vector.load %arg20[%c64_91, %c0_92] : memref<288x512xbf16, #tpu.memory_space<vmem>>, vector<32x512xbf16>
    tpu.vector_store %arg20[%c64_91, %c0_92], %111 {strides = array<i32>} : memref<288x512xbf16, #tpu.memory_space<vmem>>, vector<32x512xbf16>,
    %c1_i32_93 = arith.constant 1 : i32
    %113 = tpu.dynamic_rotate %97 by %c1_i32_93 dim 1 : vector<32x512xf32>, i32 -> vector<32x512xf32>
    %114 = vector.broadcast %37 : vector<1x512xf32> to vector<32x512xf32>
    %115 = arith.mulf %113, %114 : vector<32x512xf32>
    %116 = arith.truncf %115 : vector<32x512xf32> to vector<32x512xbf16>
    %c96_94 = arith.constant 96 : index
    %c0_95 = arith.constant 0 : index
    %117 = vector.load %arg20[%c96_94, %c0_95] : memref<288x512xbf16, #tpu.memory_space<vmem>>, vector<32x512xbf16>
    tpu.vector_store %arg20[%c96_94, %c0_95], %116 {strides = array<i32>} : memref<288x512xbf16, #tpu.memory_space<vmem>>, vector<32x512xbf16>,
    %118 = arith.truncf %97 : vector<32x512xf32> to vector<32x512xbf16>
    %c128_96 = arith.constant 128 : index
    %c0_97 = arith.constant 0 : index
    %119 = vector.load %arg20[%c128_96, %c0_97] : memref<288x512xbf16, #tpu.memory_space<vmem>>, vector<32x512xbf16>
    tpu.vector_store %arg20[%c128_96, %c0_97], %118 {strides = array<i32>} : memref<288x512xbf16, #tpu.memory_space<vmem>>, vector<32x512xbf16>,
    %c511_i32_98 = arith.constant 511 : i32
    %120 = tpu.dynamic_rotate %97 by %c511_i32_98 dim 1 : vector<32x512xf32>, i32 -> vector<32x512xf32>
    %121 = vector.broadcast %39 : vector<1x512xf32> to vector<32x512xf32>
    %122 = arith.mulf %120, %121 : vector<32x512xf32>
    %123 = arith.truncf %122 : vector<32x512xf32> to vector<32x512xbf16>
    %c160_99 = arith.constant 160 : index
    %c0_100 = arith.constant 0 : index
    %124 = vector.load %arg20[%c160_99, %c0_100] : memref<288x512xbf16, #tpu.memory_space<vmem>>, vector<32x512xbf16>
    tpu.vector_store %arg20[%c160_99, %c0_100], %123 {strides = array<i32>} : memref<288x512xbf16, #tpu.memory_space<vmem>>, vector<32x512xbf16>,
    %c497_i32_101 = arith.constant 497 : i32
    %125 = tpu.dynamic_rotate %97 by %c497_i32_101 dim 1 : vector<32x512xf32>, i32 -> vector<32x512xf32>
    %126 = vector.broadcast %41 : vector<1x512xf32> to vector<32x512xf32>
    %127 = arith.mulf %125, %126 : vector<32x512xf32>
    %128 = arith.truncf %127 : vector<32x512xf32> to vector<32x512xbf16>
    %c192_102 = arith.constant 192 : index
    %c0_103 = arith.constant 0 : index
    %129 = vector.load %arg20[%c192_102, %c0_103] : memref<288x512xbf16, #tpu.memory_space<vmem>>, vector<32x512xbf16>
    tpu.vector_store %arg20[%c192_102, %c0_103], %128 {strides = array<i32>} : memref<288x512xbf16, #tpu.memory_space<vmem>>, vector<32x512xbf16>,
    %c496_i32_104 = arith.constant 496 : i32
    %130 = tpu.dynamic_rotate %97 by %c496_i32_104 dim 1 : vector<32x512xf32>, i32 -> vector<32x512xf32>
    %131 = vector.broadcast %43 : vector<1x512xf32> to vector<32x512xf32>
    %132 = arith.mulf %130, %131 : vector<32x512xf32>
    %133 = arith.truncf %132 : vector<32x512xf32> to vector<32x512xbf16>
    %c224_105 = arith.constant 224 : index
    %c0_106 = arith.constant 0 : index
    %134 = vector.load %arg20[%c224_105, %c0_106] : memref<288x512xbf16, #tpu.memory_space<vmem>>, vector<32x512xbf16>
    tpu.vector_store %arg20[%c224_105, %c0_106], %133 {strides = array<i32>} : memref<288x512xbf16, #tpu.memory_space<vmem>>, vector<32x512xbf16>,
    %c495_i32_107 = arith.constant 495 : i32
    %135 = tpu.dynamic_rotate %97 by %c495_i32_107 dim 1 : vector<32x512xf32>, i32 -> vector<32x512xf32>
    %136 = vector.broadcast %45 : vector<1x512xf32> to vector<32x512xf32>
    %137 = arith.mulf %135, %136 : vector<32x512xf32>
    %138 = arith.truncf %137 : vector<32x512xf32> to vector<32x512xbf16>
    %c256_108 = arith.constant 256 : index
    %c0_109 = arith.constant 0 : index
    %139 = vector.load %arg20[%c256_108, %c0_109] : memref<288x512xbf16, #tpu.memory_space<vmem>>, vector<32x512xbf16>
    tpu.vector_store %arg20[%c256_108, %c0_109], %138 {strides = array<i32>} : memref<288x512xbf16, #tpu.memory_space<vmem>>, vector<32x512xbf16>,
    %c0_110 = arith.constant 0 : index
    %c0_111 = arith.constant 0 : index
    %140 = vector.load %arg20[%c0_110, %c0_111] : memref<288x512xbf16, #tpu.memory_space<vmem>>, vector<288x512xbf16>
    %cst_112 = arith.constant dense<0.000000e+00> : vector<32x512xf32>
    %141 = tpu.matmul %1, %140, %cst_112 {dimension_numbers = #tpu.dot_dimension_numbers<[1], [0], [0], [1], [0, 0, 1, 1], [], []>} : vector<32x288xbf16>, vector<288x512xbf16>, vector<32x512xf32> -> vector<32x512xf32>
    %142 = vector.broadcast %4 : vector<32x1xf32> to vector<32x512xf32>
    %143 = arith.mulf %141, %142 : vector<32x512xf32>
    %144 = vector.broadcast %5 : vector<32x1xf32> to vector<32x512xf32>
    %145 = arith.addf %143, %144 : vector<32x512xf32>
    %146 = vector.extract_strided_slice %145 {offsets = [0, 0], sizes = [32, 256], strides = [1, 1]} : vector<32x512xf32> to vector<32x256xf32>
    %cst_113 = arith.constant dense<0.000000e+00> : vector<32xf32>
    %147 = vector.multi_reduction <add>, %146, %cst_113 [1] : vector<32x256xf32> to vector<32xf32>
    %148 = vector.shape_cast %147 : vector<32xf32> to vector<32x1xf32>
    %cst_114 = arith.constant 2.560000e+02 : f32
    %149 = vector.broadcast %cst_114 : f32 to vector<32x1xf32>
    %150 = arith.divf %148, %149 : vector<32x1xf32>
    %151 = vector.extract_strided_slice %145 {offsets = [0, 256], sizes = [32, 256], strides = [1, 1]} : vector<32x512xf32> to vector<32x256xf32>
    %cst_115 = arith.constant dense<0.000000e+00> : vector<32xf32>
    %152 = vector.multi_reduction <add>, %151, %cst_115 [1] : vector<32x256xf32> to vector<32xf32>
    %153 = vector.shape_cast %152 : vector<32xf32> to vector<32x1xf32>
    %cst_116 = arith.constant 2.560000e+02 : f32
    %154 = vector.broadcast %cst_116 : f32 to vector<32x1xf32>
    %155 = arith.divf %153, %154 : vector<32x1xf32>
    %156 = tpu.concatenate %150, %155 in 1 : vector<32x1xf32>, vector<32x1xf32> -> vector<32x2xf32>
    %cst_117 = arith.constant dense<0.000000e+00> : vector<2x2xf32>
    %157 = tpu.matmul %6, %156, %cst_117 {dimension_numbers = #tpu.dot_dimension_numbers<[1], [0], [0], [1], [0, 0, 1, 1], [], []>} : vector<2x32xf32>, vector<32x2xf32>, vector<2x2xf32> -> vector<2x2xf32>
    %158 = vector.broadcast %7 : vector<2x1xf32> to vector<2x2xf32>
    %159 = arith.addf %157, %158 : vector<2x2xf32>
    %160 = vector.broadcast %8 : vector<2x1xf32> to vector<2x2xf32>
    %161 = arith.mulf %159, %160 : vector<2x2xf32>
    %162 = vector.broadcast %9 : vector<2x1xf32> to vector<2x2xf32>
    %163 = arith.addf %161, %162 : vector<2x2xf32>
    %cst_118 = arith.constant 0.000000e+00 : f32
    %164 = vector.broadcast %cst_118 : f32 to vector<2x2xf32>
    %165 = arith.maximumf %163, %164 : vector<2x2xf32>
    %cst_119 = arith.constant dense<0.000000e+00> : vector<32x2xf32>
    %166 = tpu.matmul %10, %165, %cst_119 {dimension_numbers = #tpu.dot_dimension_numbers<[1], [0], [0], [1], [0, 0, 1, 1], [], []>} : vector<32x2xf32>, vector<2x2xf32>, vector<32x2xf32> -> vector<32x2xf32>
    %167 = vector.broadcast %11 : vector<32x1xf32> to vector<32x2xf32>
    %168 = arith.addf %166, %167 : vector<32x2xf32>
    %169 = vector.broadcast %12 : vector<32x1xf32> to vector<32x2xf32>
    %170 = arith.mulf %168, %169 : vector<32x2xf32>
    %171 = vector.broadcast %13 : vector<32x1xf32> to vector<32x2xf32>
    %172 = arith.addf %170, %171 : vector<32x2xf32>
    %cst_120 = arith.constant 0.000000e+00 : f32
    %173 = vector.broadcast %cst_120 : f32 to vector<32x2xf32>
    %174 = arith.subf %173, %172 : vector<32x2xf32>
    %175 = math.exp %174 : vector<32x2xf32>
    %cst_121 = arith.constant 1.000000e+00 : f32
    %176 = vector.broadcast %cst_121 : f32 to vector<32x2xf32>
    %177 = arith.addf %176, %175 : vector<32x2xf32>
    %cst_122 = arith.constant 1.000000e+00 : f32
    %178 = vector.broadcast %cst_122 : f32 to vector<32x2xf32>
    %179 = arith.divf %178, %177 : vector<32x2xf32>
    %180 = vector.extract_strided_slice %145 {offsets = [0, 0], sizes = [32, 256], strides = [1, 1]} : vector<32x512xf32> to vector<32x256xf32>
    %181 = vector.extract_strided_slice %179 {offsets = [0, 0], sizes = [32, 1], strides = [1, 1]} : vector<32x2xf32> to vector<32x1xf32>
    %182 = vector.broadcast %181 : vector<32x1xf32> to vector<32x256xf32>
    %183 = arith.mulf %180, %182 : vector<32x256xf32>
    %184 = vector.extract_strided_slice %47 {offsets = [0, 0], sizes = [32, 256], strides = [1, 1]} : vector<32x512xf32> to vector<32x256xf32>
    %185 = arith.addf %183, %184 : vector<32x256xf32>
    %cst_123 = arith.constant 0.000000e+00 : f32
    %186 = vector.broadcast %cst_123 : f32 to vector<32x256xf32>
    %187 = arith.maximumf %185, %186 : vector<32x256xf32>
    %188 = vector.extract_strided_slice %145 {offsets = [0, 256], sizes = [32, 256], strides = [1, 1]} : vector<32x512xf32> to vector<32x256xf32>
    %189 = vector.extract_strided_slice %179 {offsets = [0, 1], sizes = [32, 1], strides = [1, 1]} : vector<32x2xf32> to vector<32x1xf32>
    %190 = vector.broadcast %189 : vector<32x1xf32> to vector<32x256xf32>
    %191 = arith.mulf %188, %190 : vector<32x256xf32>
    %192 = vector.extract_strided_slice %47 {offsets = [0, 256], sizes = [32, 256], strides = [1, 1]} : vector<32x512xf32> to vector<32x256xf32>
    %193 = arith.addf %191, %192 : vector<32x256xf32>
    %cst_124 = arith.constant 0.000000e+00 : f32
    %194 = vector.broadcast %cst_124 : f32 to vector<32x256xf32>
    %195 = arith.maximumf %193, %194 : vector<32x256xf32>
    %196 = tpu.concatenate %187, %195 in 1 : vector<32x256xf32>, vector<32x256xf32> -> vector<32x512xf32>
    %c0_125 = arith.constant 0 : index
    %c0_126 = arith.constant 0 : index
    %c0_127 = arith.constant 0 : index
    %197 = vector.load %arg18[%c0_125, %c0_126, %c0_127] : memref<1x32x512xf32, #tpu.memory_space<vmem>>, vector<1x32x512xf32>
    %198 = vector.shape_cast %197 : vector<1x32x512xf32> to vector<32x512xf32>
    %199 = vector.shape_cast %196 : vector<32x512xf32> to vector<1x32x512xf32>
    tpu.vector_store %arg18[%c0_125, %c0_126, %c0_127], %199 {strides = array<i32>} : memref<1x32x512xf32, #tpu.memory_space<vmem>>, vector<1x32x512xf32>,
    return
  }
  func.func @transform_0(%arg0: i32) -> (i32, i32, i32) {
    %c0_i32 = arith.constant 0 : i32
    %c0_i32_0 = arith.constant 0 : i32
    %c0_i32_1 = arith.constant 0 : i32
    return %arg0, %c0_i32, %c0_i32_0 : i32, i32, i32
  }
  func.func @transform_1(%arg0: i32) -> (i32, i32) {
    %c0_i32 = arith.constant 0 : i32
    %c0_i32_0 = arith.constant 0 : i32
    %c0_i32_1 = arith.constant 0 : i32
    return %c0_i32, %c0_i32_0 : i32, i32
  }
  func.func @transform_2(%arg0: i32) -> (i32, i32) {
    %c0_i32 = arith.constant 0 : i32
    %c0_i32_0 = arith.constant 0 : i32
    %c0_i32_1 = arith.constant 0 : i32
    return %c0_i32, %c0_i32_0 : i32, i32
  }
  func.func @transform_3(%arg0: i32) -> (i32, i32) {
    %c0_i32 = arith.constant 0 : i32
    %c0_i32_0 = arith.constant 0 : i32
    %c0_i32_1 = arith.constant 0 : i32
    return %c0_i32, %c0_i32_0 : i32, i32
  }
  func.func @transform_4(%arg0: i32) -> (i32, i32, i32) {
    %c0_i32 = arith.constant 0 : i32
    %c0_i32_0 = arith.constant 0 : i32
    %c0_i32_1 = arith.constant 0 : i32
    %c0_i32_2 = arith.constant 0 : i32
    return %c0_i32, %c0_i32_0, %c0_i32_1 : i32, i32, i32
  }
  func.func @transform_5(%arg0: i32) -> (i32, i32) {
    %c0_i32 = arith.constant 0 : i32
    %c0_i32_0 = arith.constant 0 : i32
    %c0_i32_1 = arith.constant 0 : i32
    return %c0_i32, %c0_i32_0 : i32, i32
  }
  func.func @transform_6(%arg0: i32) -> (i32, i32) {
    %c0_i32 = arith.constant 0 : i32
    %c0_i32_0 = arith.constant 0 : i32
    %c0_i32_1 = arith.constant 0 : i32
    return %c0_i32, %c0_i32_0 : i32, i32
  }
  func.func @transform_7(%arg0: i32) -> (i32, i32) {
    %c0_i32 = arith.constant 0 : i32
    %c0_i32_0 = arith.constant 0 : i32
    %c0_i32_1 = arith.constant 0 : i32
    return %c0_i32, %c0_i32_0 : i32, i32
  }
  func.func @transform_8(%arg0: i32) -> (i32, i32, i32) {
    %c0_i32 = arith.constant 0 : i32
    %c0_i32_0 = arith.constant 0 : i32
    %c0_i32_1 = arith.constant 0 : i32
    %c0_i32_2 = arith.constant 0 : i32
    return %c0_i32, %c0_i32_0, %c0_i32_1 : i32, i32, i32
  }
  func.func @transform_9(%arg0: i32) -> (i32, i32) {
    %c0_i32 = arith.constant 0 : i32
    %c0_i32_0 = arith.constant 0 : i32
    %c0_i32_1 = arith.constant 0 : i32
    return %c0_i32, %c0_i32_0 : i32, i32
  }
  func.func @transform_10(%arg0: i32) -> (i32, i32) {
    %c0_i32 = arith.constant 0 : i32
    %c0_i32_0 = arith.constant 0 : i32
    %c0_i32_1 = arith.constant 0 : i32
    return %c0_i32, %c0_i32_0 : i32, i32
  }
  func.func @transform_11(%arg0: i32) -> (i32, i32) {
    %c0_i32 = arith.constant 0 : i32
    %c0_i32_0 = arith.constant 0 : i32
    %c0_i32_1 = arith.constant 0 : i32
    return %c0_i32, %c0_i32_0 : i32, i32
  }
  func.func @transform_12(%arg0: i32) -> (i32, i32) {
    %c0_i32 = arith.constant 0 : i32
    %c0_i32_0 = arith.constant 0 : i32
    %c0_i32_1 = arith.constant 0 : i32
    return %c0_i32, %c0_i32_0 : i32, i32
  }
  func.func @transform_13(%arg0: i32) -> (i32, i32) {
    %c0_i32 = arith.constant 0 : i32
    %c0_i32_0 = arith.constant 0 : i32
    %c0_i32_1 = arith.constant 0 : i32
    return %c0_i32, %c0_i32_0 : i32, i32
  }
  func.func @transform_14(%arg0: i32) -> (i32, i32) {
    %c0_i32 = arith.constant 0 : i32
    %c0_i32_0 = arith.constant 0 : i32
    %c0_i32_1 = arith.constant 0 : i32
    return %c0_i32, %c0_i32_0 : i32, i32
  }
  func.func @transform_15(%arg0: i32) -> (i32, i32) {
    %c0_i32 = arith.constant 0 : i32
    %c0_i32_0 = arith.constant 0 : i32
    %c0_i32_1 = arith.constant 0 : i32
    return %c0_i32, %c0_i32_0 : i32, i32
  }
  func.func @transform_16(%arg0: i32) -> (i32, i32) {
    %c0_i32 = arith.constant 0 : i32
    %c0_i32_0 = arith.constant 0 : i32
    %c0_i32_1 = arith.constant 0 : i32
    return %c0_i32, %c0_i32_0 : i32, i32
  }
  func.func @transform_17(%arg0: i32) -> (i32, i32, i32) {
    %c0_i32 = arith.constant 0 : i32
    %c0_i32_0 = arith.constant 0 : i32
    %c0_i32_1 = arith.constant 0 : i32
    return %arg0, %c0_i32, %c0_i32_0 : i32, i32, i32
  }
}

</mosaic_0001>

<llo_original>
// kernel: tpu_custom_call.1
$region0: #{tpu_custom_call.1}
  #allocation0 [shape = 'u32[]', space=smem, size = 0x4, offset = 0x4, fixed_abs, tag = 'smem constant byte address 0x4 - core index']
  #allocation1 [shape = 'u32[72,128]{1,0:T(1,128)}', space=vmem, size = 0x9000, scoped, tag = 'internal scratch']
  #allocation2 [shape = 'bf16[288,512]{1,0:T(8,128)(2,1)}', space=vmem, size = 0x48000, scoped, tag = 'scratch operand']
  #allocation3 [shape = 'bf16[288,512]{1,0:T(8,128)(2,1)}', space=vmem, size = 0x48000, scoped, tag = 'scratch operand']
  %s0 = inlined_call_operand.hbm [shape: f32[1,32,512], index: 0, kind: input, shape index: {}]
  %s1 = inlined_call_operand.vmem [shape: bf16[32,288], index: 1, kind: input, shape index: {}]
  %s2 = inlined_call_operand.vmem [shape: f32[32,1], index: 2, kind: input, shape index: {}]
  %s3 = inlined_call_operand.vmem [shape: f32[32,1], index: 3, kind: input, shape index: {}]
  %s4 = inlined_call_operand.vmem [shape: f32[9,1,512], index: 4, kind: input, shape index: {}]
  %s5 = inlined_call_operand.vmem [shape: bf16[32,288], index: 5, kind: input, shape index: {}]
  %s6 = inlined_call_operand.vmem [shape: f32[32,1], index: 6, kind: input, shape index: {}]
  %s7 = inlined_call_operand.vmem [shape: f32[32,1], index: 7, kind: input, shape index: {}]
  %s8 = inlined_call_operand.vmem [shape: f32[9,1,512], index: 8, kind: input, shape index: {}]
  %s9 = inlined_call_operand.vmem [shape: f32[2,32], index: 9, kind: input, shape index: {}]
  %s10 = inlined_call_operand.vmem [shape: f32[2,1], index: 10, kind: input, shape index: {}]
  %s11 = inlined_call_operand.vmem [shape: f32[2,1], index: 11, kind: input, shape index: {}]
  %s12 = inlined_call_operand.vmem [shape: f32[2,1], index: 12, kind: input, shape index: {}]
  %s13 = inlined_call_operand.vmem [shape: f32[32,2], index: 13, kind: input, shape index: {}]
  %s14 = inlined_call_operand.vmem [shape: f32[32,1], index: 14, kind: input, shape index: {}]
  %s15 = inlined_call_operand.vmem [shape: f32[32,1], index: 15, kind: input, shape index: {}]
  %s16 = inlined_call_operand.vmem [shape: f32[32,1], index: 16, kind: input, shape index: {}]
  %s17 = inlined_call_operand.hbm [shape: f32[1,32,512], index: 17, kind: output, shape index: {}]
  %s18 = sld [smem:[#allocation0]]
  $region82: #{tpu_custom_call.1} parent=0
    _
  %s20 = ssub.s32 1, %s18
  %s21 = scalar_select 0, %s20, %s18
  $region1: #{tpu_custom_call.1} parent=0
    #allocation4 [shape = 'u8[65536]{0}', space=vmem, size = 0x10000, scoped, tag = 'input window, operand 0, single buffered']
    #allocation5 [shape = 's32[1]{0}', space=sflag, size = 0x4, scoped, tag = 'scoped memory for tpu_custom_call.1']
    #allocation6 [shape = 's32[1]{0}', space=sflag, size = 0x4, scoped, tag = 'scoped memory for tpu_custom_call.1']
    #allocation7 [shape = 'u8[65536]{0}', space=vmem, size = 0x10000, scoped, tag = 'output window, operand 0, single buffered']
    %22 = vsyncpa [#allocation5], 0
    %23 = vsyncpa [#allocation6], 0
    // Predicated region
    $region2: #{tpu_custom_call.1} parent=1 // pred_check
      _
    $region3: #{tpu_custom_call.1} parent=1 // pred_check_branch
      %25 = sbr.rel (0) target = $region5
    $region4: #{tpu_custom_call.1} parent=1 // pred_region
      %27 = vsyncadd [#allocation5], 0
      %s28 = sshll.u32 %s0, 4
      %s29 = int_to_ptr.hbm [resolvable:$true] %s28
      %s30 = sshll.u32 [#allocation4], 4
      %s31 = int_to_ptr.vmem [resolvable:$true] %s30
      %36 = dma.hbm_to_vmem [thread:$0]  %s29, 2048, %s31, [#allocation5], 512, 512, 32
    $region5: #{tpu_custom_call.1} parent=1 // pred_fallthru
      _
    // Predicated region
    $region6: #{tpu_custom_call.1} parent=1 // pred_check
      _
    $region7: #{tpu_custom_call.1} parent=1 // pred_check_branch
      %38 = sbr.rel (0) target = $region9
    $region8: #{tpu_custom_call.1} parent=1 // pred_region
      _
    $region9: #{tpu_custom_call.1} parent=1 // pred_fallthru
      _
    // Predicated region
    $region10: #{tpu_custom_call.1} parent=1 // pred_check
      _
    $region11: #{tpu_custom_call.1} parent=1 // pred_check_branch
      %40 = sbr.rel (0) target = $region13
    $region12: #{tpu_custom_call.1} parent=1 // pred_region
      _
    $region13: #{tpu_custom_call.1} parent=1 // pred_fallthru
      _
    // Predicated region
    $region14: #{tpu_custom_call.1} parent=1 // pred_check
      _
    $region15: #{tpu_custom_call.1} parent=1 // pred_check_branch
      %42 = sbr.rel (0) target = $region17
    $region16: #{tpu_custom_call.1} parent=1 // pred_region
      _
    $region17: #{tpu_custom_call.1} parent=1 // pred_fallthru
      _
    // Predicated region
    $region18: #{tpu_custom_call.1} parent=1 // pred_check
      _
    $region19: #{tpu_custom_call.1} parent=1 // pred_check_branch
      %44 = sbr.rel (0) target = $region21
    $region20: #{tpu_custom_call.1} parent=1 // pred_region
      _
    $region21: #{tpu_custom_call.1} parent=1 // pred_fallthru
      _
    // Predicated region
    $region22: #{tpu_custom_call.1} parent=1 // pred_check
      _
    $region23: #{tpu_custom_call.1} parent=1 // pred_check_branch
      %46 = sbr.rel (0) target = $region25
    $region24: #{tpu_custom_call.1} parent=1 // pred_region
      _
    $region25: #{tpu_custom_call.1} parent=1 // pred_fallthru
      _
    // Predicated region
    $region26: #{tpu_custom_call.1} parent=1 // pred_check
      _
    $region27: #{tpu_custom_call.1} parent=1 // pred_check_branch
      %48 = sbr.rel (0) target = $region29
    $region28: #{tpu_custom_call.1} parent=1 // pred_region
      _
    $region29: #{tpu_custom_call.1} parent=1 // pred_fallthru
      _
    // Predicated region
    $region30: #{tpu_custom_call.1} parent=1 // pred_check
      _
    $region31: #{tpu_custom_call.1} parent=1 // pred_check_branch
      %50 = sbr.rel (0) target = $region33
    $region32: #{tpu_custom_call.1} parent=1 // pred_region
      _
    $region33: #{tpu_custom_call.1} parent=1 // pred_fallthru
      _
    // Predicated region
    $region34: #{tpu_custom_call.1} parent=1 // pred_check
      _
    $region35: #{tpu_custom_call.1} parent=1 // pred_check_branch
      %52 = sbr.rel (0) target = $region37
    $region36: #{tpu_custom_call.1} parent=1 // pred_region
      _
    $region37: #{tpu_custom_call.1} parent=1 // pred_fallthru
      _
    // Predicated region
    $region38: #{tpu_custom_call.1} parent=1 // pred_check
      _
    $region39: #{tpu_custom_call.1} parent=1 // pred_check_branch
      %54 = sbr.rel (0) target = $region41
    $region40: #{tpu_custom_call.1} parent=1 // pred_region
      _
    $region41: #{tpu_custom_call.1} parent=1 // pred_fallthru
      _
    // Predicated region
    $region42: #{tpu_custom_call.1} parent=1 // pred_check
      _
    $region43: #{tpu_custom_call.1} parent=1 // pred_check_branch
      %56 = sbr.rel (0) target = $region45
    $region44: #{tpu_custom_call.1} parent=1 // pred_region
      _
    $region45: #{tpu_custom_call.1} parent=1 // pred_fallthru
      _
    // Predicated region
    $region46: #{tpu_custom_call.1} parent=1 // pred_check
      _
    $region47: #{tpu_custom_call.1} parent=1 // pred_check_branch
      %58 = sbr.rel (0) target = $region49
    $region48: #{tpu_custom_call.1} parent=1 // pred_region
      _
    $region49: #{tpu_custom_call.1} parent=1 // pred_fallthru
      _
    // Predicated region
    $region50: #{tpu_custom_call.1} parent=1 // pred_check
      _
    $region51: #{tpu_custom_call.1} parent=1 // pred_check_branch
      %60 = sbr.rel (0) target = $region53
    $region52: #{tpu_custom_call.1} parent=1 // pred_region
      _
    $region53: #{tpu_custom_call.1} parent=1 // pred_fallthru
      _
    // Predicated region
    $region54: #{tpu_custom_call.1} parent=1 // pred_check
      _
    $region55: #{tpu_custom_call.1} parent=1 // pred_check_branch
      %62 = sbr.rel (0) target = $region57
    $region56: #{tpu_custom_call.1} parent=1 // pred_region
      _
    $region57: #{tpu_custom_call.1} parent=1 // pred_fallthru
      _
    // Predicated region
    $region58: #{tpu_custom_call.1} parent=1 // pred_check
      _
    $region59: #{tpu_custom_call.1} parent=1 // pred_check_branch
      %64 = sbr.rel (0) target = $region61
    $region60: #{tpu_custom_call.1} parent=1 // pred_region
      _
    $region61: #{tpu_custom_call.1} parent=1 // pred_fallthru
      _
    // Predicated region
    $region62: #{tpu_custom_call.1} parent=1 // pred_check
      _
    $region63: #{tpu_custom_call.1} parent=1 // pred_check_branch
      %66 = sbr.rel (0) target = $region65
    $region64: #{tpu_custom_call.1} parent=1 // pred_region
      _
    $region65: #{tpu_custom_call.1} parent=1 // pred_fallthru
      _
    // Predicated region
    $region66: #{tpu_custom_call.1} parent=1 // pred_check
      _
    $region67: #{tpu_custom_call.1} parent=1 // pred_check_branch
      %68 = sbr.rel (0) target = $region69
    $region68: #{tpu_custom_call.1} parent=1 // pred_region
      _
    $region69: #{tpu_custom_call.1} parent=1 // pred_fallthru
      _
    // Predicated region
    $region70: #{tpu_custom_call.1} parent=1 // pred_check
      _
    $region71: #{tpu_custom_call.1} parent=1 // pred_check_branch
      %70 = sbr.rel (0) target = $region73
    $region72: #{tpu_custom_call.1} parent=1 // pred_region
      %72 = dma.done [#allocation5], 2048
    $region73: #{tpu_custom_call.1} parent=1 // pred_fallthru
      _
    %v74 = vld [vmem:[%s1] sm:$0xff]
    %v75 = vld [vmem:[%s1 + $0x8] sm:$0xf]
    %v76 = vld [vmem:[%s1 + $0xc] sm:$0xff]
    %v77 = vld [vmem:[%s1 + $0x14] sm:$0xf]
    %v78 = vld [vmem:[%s1 + $0x18] sm:$0xff]
    %v79 = vld [vmem:[%s1 + $0x20] sm:$0xf]
    %v80 = vld [vmem:[%s1 + $0x24] sm:$0xff]
    %v81 = vld [vmem:[%s1 + $0x2c] sm:$0xf]
    %v82 = vld [vmem:[%s5] sm:$0xff]
    %v83 = vld [vmem:[%s5 + $0x8] sm:$0xf]
    %v84 = vld [vmem:[%s5 + $0xc] sm:$0xff]
    %v85 = vld [vmem:[%s5 + $0x14] sm:$0xf]
    %v86 = vld [vmem:[%s5 + $0x18] sm:$0xff]
    %v87 = vld [vmem:[%s5 + $0x20] sm:$0xf]
    %v88 = vld [vmem:[%s5 + $0x24] sm:$0xff]
    %v89 = vld [vmem:[%s5 + $0x2c] sm:$0xf]
    %v90 = vld [vmem:[%s2] sm:$0xff]
    %v91 = vld [vmem:[%s2 + $0x8] sm:$0xff]
    %v92 = vld [vmem:[%s2 + $0x10] sm:$0xff]
    %v93 = vld [vmem:[%s2 + $0x18] sm:$0xff]
    %v94 = vld [vmem:[%s3] sm:$0xff]
    %v95 = vld [vmem:[%s3 + $0x8] sm:$0xff]
    %v96 = vld [vmem:[%s3 + $0x10] sm:$0xff]
    %v97 = vld [vmem:[%s3 + $0x18] sm:$0xff]
    %v98 = vld [vmem:[%s6] sm:$0xff]
    %v99 = vld [vmem:[%s6 + $0x8] sm:$0xff]
    %v100 = vld [vmem:[%s6 + $0x10] sm:$0xff]
    %v101 = vld [vmem:[%s6 + $0x18] sm:$0xff]
    %v102 = vld [vmem:[%s7] sm:$0xff]
    %v103 = vld [vmem:[%s7 + $0x8] sm:$0xff]
    %v104 = vld [vmem:[%s7 + $0x10] sm:$0xff]
    %v105 = vld [vmem:[%s7 + $0x18] sm:$0xff]
    %v106 = vld [vmem:[%s9] sm:$0x3]
    %v107 = vld [vmem:[%s10] sm:$0x3]
    %v108 = vld [vmem:[%s11] sm:$0x3]
    %v109 = vld [vmem:[%s12] sm:$0x3]
    %v110 = vld [vmem:[%s13] sm:$0xff]
    %v111 = vld [vmem:[%s13 + $0x8] sm:$0xff]
    %v112 = vld [vmem:[%s13 + $0x10] sm:$0xff]
    %v113 = vld [vmem:[%s13 + $0x18] sm:$0xff]
    %v114 = vld [vmem:[%s14] sm:$0xff]
    %v115 = vld [vmem:[%s14 + $0x8] sm:$0xff]
    %v116 = vld [vmem:[%s14 + $0x10] sm:$0xff]
    %v117 = vld [vmem:[%s14 + $0x18] sm:$0xff]
    %v118 = vld [vmem:[%s15] sm:$0xff]
    %v119 = vld [vmem:[%s15 + $0x8] sm:$0xff]
    %v120 = vld [vmem:[%s15 + $0x10] sm:$0xff]
    %v121 = vld [vmem:[%s15 + $0x18] sm:$0xff]
    %v122 = vld [vmem:[%s16] sm:$0xff]
    %v123 = vld [vmem:[%s16 + $0x8] sm:$0xff]
    %v124 = vld [vmem:[%s16 + $0x10] sm:$0xff]
    %v125 = vld [vmem:[%s16 + $0x18] sm:$0xff]
    %v126 = vld [vmem:[%s4] sm:$0xf]
    %s127 = scalar_lea.vmem %s4, 4
    %v128 = vld [vmem:[%s127] sm:$0xf]
    %s129 = scalar_lea.vmem %s4, 8
    %v130 = vld [vmem:[%s129] sm:$0xf]
    %s131 = scalar_lea.vmem %s4, 12
    %v132 = vld [vmem:[%s131] sm:$0xf]
    %s133 = scalar_lea.vmem %s4, 20
    %v134 = vld [vmem:[%s133] sm:$0xf]
    %s135 = scalar_lea.vmem %s4, 24
    %v136 = vld [vmem:[%s135] sm:$0xf]
    %s137 = scalar_lea.vmem %s4, 28
    %v138 = vld [vmem:[%s137] sm:$0xf]
    %s139 = scalar_lea.vmem %s4, 32
    %v140 = vld [vmem:[%s139] sm:$0xf]
    %v141 = vld [vmem:[%s8] sm:$0xf]
    %s142 = scalar_lea.vmem %s8, 4
    %v143 = vld [vmem:[%s142] sm:$0xf]
    %s144 = scalar_lea.vmem %s8, 8
    %v145 = vld [vmem:[%s144] sm:$0xf]
    %s146 = scalar_lea.vmem %s8, 12
    %v147 = vld [vmem:[%s146] sm:$0xf]
    %s148 = scalar_lea.vmem %s8, 20
    %v149 = vld [vmem:[%s148] sm:$0xf]
    %s150 = scalar_lea.vmem %s8, 24
    %v151 = vld [vmem:[%s150] sm:$0xf]
    %s152 = scalar_lea.vmem %s8, 28
    %v153 = vld [vmem:[%s152] sm:$0xf]
    %s154 = scalar_lea.vmem %s8, 32
    %v155 = vld [vmem:[%s154] sm:$0xf]
    %v156 = vld [vmem:[#allocation4] sm:$0xff]
    %v157 = vld [vmem:[#allocation4 + $0x8] sm:$0xff]
    %v158 = vld [vmem:[#allocation4 + $0x10] sm:$0xff]
    %v159 = vld [vmem:[#allocation4 + $0x18] sm:$0xff]
    %v160 = vld [vmem:[#allocation4 + $0x20] sm:$0xff]
    %v161 = vld [vmem:[#allocation4 + $0x28] sm:$0xff]
    %v162 = vld [vmem:[#allocation4 + $0x30] sm:$0xff]
    %v163 = vld [vmem:[#allocation4 + $0x38] sm:$0xff]
    %v164 = vld [vmem:[#allocation4 + $0x40] sm:$0xff]
    %v165 = vld [vmem:[#allocation4 + $0x48] sm:$0xff]
    %v166 = vld [vmem:[#allocation4 + $0x50] sm:$0xff]
    %v167 = vld [vmem:[#allocation4 + $0x58] sm:$0xff]
    %v168 = vld [vmem:[#allocation4 + $0x60] sm:$0xff]
    %v169 = vld [vmem:[#allocation4 + $0x68] sm:$0xff]
    %v170 = vld [vmem:[#allocation4 + $0x70] sm:$0xff]
    %v171 = vld [vmem:[#allocation4 + $0x78] sm:$0xff]
    %172 = vrot.lane.b32.xlu0 %v156, 17
    %v173 = vpop.permute.xlu0 %172
    %174 = vrot.lane.b32.xlu0 %v160, 17
    %v175 = vpop.permute.xlu0 %174
    %176 = vrot.lane.b32.xlu0 %v164, 17
    %v177 = vpop.permute.xlu0 %176
    %178 = vrot.lane.b32.xlu0 %v168, 17
    %v179 = vpop.permute.xlu0 %178
    %180 = vrot.lane.b32.xlu0 %v157, 17
    %v181 = vpop.permute.xlu0 %180
    %182 = vrot.lane.b32.xlu0 %v161, 17
    %v183 = vpop.permute.xlu0 %182
    %184 = vrot.lane.b32.xlu0 %v165, 17
    %v185 = vpop.permute.xlu0 %184
    %186 = vrot.lane.b32.xlu0 %v169, 17
    %v187 = vpop.permute.xlu0 %186
    %188 = vrot.lane.b32.xlu0 %v158, 17
    %v189 = vpop.permute.xlu0 %188
    %190 = vrot.lane.b32.xlu0 %v162, 17
    %v191 = vpop.permute.xlu0 %190
    %192 = vrot.lane.b32.xlu0 %v166, 17
    %v193 = vpop.permute.xlu0 %192
    %194 = vrot.lane.b32.xlu0 %v170, 17
    %v195 = vpop.permute.xlu0 %194
    %196 = vrot.lane.b32.xlu0 %v159, 17
    %v197 = vpop.permute.xlu0 %196
    %198 = vrot.lane.b32.xlu0 %v163, 17
    %v199 = vpop.permute.xlu0 %198
    %200 = vrot.lane.b32.xlu0 %v167, 17
    %v201 = vpop.permute.xlu0 %200
    %202 = vrot.lane.b32.xlu0 %v171, 17
    %v203 = vpop.permute.xlu0 %202
    %v204 = vlaneseq
    %v205 = vand.u32 %v204, 127
    %vm206 = vcmp.lt.s32.totalorder %v205, 17
    %v207 = vsel %vm206, %v189, %v197
    %v208 = vsel %vm206, %v191, %v199
    %v209 = vsel %vm206, %v193, %v201
    %v210 = vsel %vm206, %v195, %v203
    %v211 = vsel %vm206, %v181, %v189
    %v212 = vsel %vm206, %v183, %v191
    %v213 = vsel %vm206, %v185, %v193
    %v214 = vsel %vm206, %v187, %v195
    %v215 = vsel %vm206, %v173, %v181
    %v216 = vsel %vm206, %v175, %v183
    %v217 = vsel %vm206, %v177, %v185
    %v218 = vsel %vm206, %v179, %v187
    %v219 = vsel %vm206, %v197, %v173
    %v220 = vsel %vm206, %v199, %v175
    %v221 = vsel %vm206, %v201, %v177
    %v222 = vsel %vm206, %v203, %v179
    %v224 = vperm.slane %v126, 0
    %v225 = vperm.slane %v126, 1
    %v226 = vperm.slane %v126, 2
    %v227 = vperm.slane %v126, 3
    %v232 = vmul.f32 %v219, %v224
    %v233 = vmul.f32 %v215, %v225
    %v234 = vmul.f32 %v211, %v226
    %v235 = vmul.f32 %v207, %v227
    %v236 = vmul.f32 %v220, %v224
    %v237 = vmul.f32 %v216, %v225
    %v238 = vmul.f32 %v212, %v226
    %v239 = vmul.f32 %v208, %v227
    %v240 = vmul.f32 %v221, %v224
    %v241 = vmul.f32 %v217, %v225
    %v242 = vmul.f32 %v213, %v226
    %v243 = vmul.f32 %v209, %v227
    %v244 = vmul.f32 %v222, %v224
    %v245 = vmul.f32 %v218, %v225
    %v246 = vmul.f32 %v214, %v226
    %v247 = vmul.f32 %v210, %v227
    %v248 = vpack.c.bf16 %v233, %v232
    %v249 = vpack.c.bf16 %v235, %v234
    %v250 = vpack.c.bf16 %v237, %v236
    %v251 = vpack.c.bf16 %v239, %v238
    %v252 = vpack.c.bf16 %v241, %v240
    %v253 = vpack.c.bf16 %v243, %v242
    %v254 = vpack.c.bf16 %v245, %v244
    %v255 = vpack.c.bf16 %v247, %v246
    %256 = vst [vmem:[#allocation2] sm:$0xff] %v248
    %257 = vst [vmem:[#allocation2 + $0x8] sm:$0xff] %v249
    %258 = vst [vmem:[#allocation2 + $0x10] sm:$0xff] %v250
    %259 = vst [vmem:[#allocation2 + $0x18] sm:$0xff] %v251
    %260 = vst [vmem:[#allocation2 + $0x20] sm:$0xff] %v252
    %261 = vst [vmem:[#allocation2 + $0x28] sm:$0xff] %v253
    %262 = vst [vmem:[#allocation2 + $0x30] sm:$0xff] %v254
    %263 = vst [vmem:[#allocation2 + $0x38] sm:$0xff] %v255
    %264 = vrot.lane.b32.xlu0 %v156, 16
    %v265 = vpop.permute.xlu0 %264
    %266 = vrot.lane.b32.xlu0 %v160, 16
    %v267 = vpop.permute.xlu0 %266
    %268 = vrot.lane.b32.xlu0 %v164, 16
    %v269 = vpop.permute.xlu0 %268
    %270 = vrot.lane.b32.xlu0 %v168, 16
    %v271 = vpop.permute.xlu0 %270
    %272 = vrot.lane.b32.xlu0 %v157, 16
    %v273 = vpop.permute.xlu0 %272
    %274 = vrot.lane.b32.xlu0 %v161, 16
    %v275 = vpop.permute.xlu0 %274
    %276 = vrot.lane.b32.xlu0 %v165, 16
    %v277 = vpop.permute.xlu0 %276
    %278 = vrot.lane.b32.xlu0 %v169, 16
    %v279 = vpop.permute.xlu0 %278
    %280 = vrot.lane.b32.xlu0 %v158, 16
    %v281 = vpop.permute.xlu0 %280
    %282 = vrot.lane.b32.xlu0 %v162, 16
    %v283 = vpop.permute.xlu0 %282
    %284 = vrot.lane.b32.xlu0 %v166, 16
    %v285 = vpop.permute.xlu0 %284
    %286 = vrot.lane.b32.xlu0 %v170, 16
    %v287 = vpop.permute.xlu0 %286
    %288 = vrot.lane.b32.xlu0 %v159, 16
    %v289 = vpop.permute.xlu0 %288
    %290 = vrot.lane.b32.xlu0 %v163, 16
    %v291 = vpop.permute.xlu0 %290
    %292 = vrot.lane.b32.xlu0 %v167, 16
    %v293 = vpop.permute.xlu0 %292
    %294 = vrot.lane.b32.xlu0 %v171, 16
    %v295 = vpop.permute.xlu0 %294
    %vm296 = vcmp.lt.s32.totalorder %v205, 16
    %v297 = vsel %vm296, %v281, %v289
    %v298 = vsel %vm296, %v283, %v291
    %v299 = vsel %vm296, %v285, %v293
    %v300 = vsel %vm296, %v287, %v295
    %v301 = vsel %vm296, %v273, %v281
    %v302 = vsel %vm296, %v275, %v283
    %v303 = vsel %vm296, %v277, %v285
    %v304 = vsel %vm296, %v279, %v287
    %v305 = vsel %vm296, %v265, %v273
    %v306 = vsel %vm296, %v267, %v275
    %v307 = vsel %vm296, %v269, %v277
    %v308 = vsel %vm296, %v271, %v279
    %v309 = vsel %vm296, %v289, %v265
    %v310 = vsel %vm296, %v291, %v267
    %v311 = vsel %vm296, %v293, %v269
    %v312 = vsel %vm296, %v295, %v271
    %v314 = vperm.slane %v128, 0
    %v315 = vperm.slane %v128, 1
    %v316 = vperm.slane %v128, 2
    %v317 = vperm.slane %v128, 3
    %v322 = vmul.f32 %v309, %v314
    %v323 = vmul.f32 %v305, %v315
    %v324 = vmul.f32 %v301, %v316
    %v325 = vmul.f32 %v297, %v317
    %v326 = vmul.f32 %v310, %v314
    %v327 = vmul.f32 %v306, %v315
    %v328 = vmul.f32 %v302, %v316
    %v329 = vmul.f32 %v298, %v317
    %v330 = vmul.f32 %v311, %v314
    %v331 = vmul.f32 %v307, %v315
    %v332 = vmul.f32 %v303, %v316
    %v333 = vmul.f32 %v299, %v317
    %v334 = vmul.f32 %v312, %v314
    %v335 = vmul.f32 %v308, %v315
    %v336 = vmul.f32 %v304, %v316
    %v337 = vmul.f32 %v300, %v317
    %v338 = vpack.c.bf16 %v323, %v322
    %v339 = vpack.c.bf16 %v325, %v324
    %v340 = vpack.c.bf16 %v327, %v326
    %v341 = vpack.c.bf16 %v329, %v328
    %v342 = vpack.c.bf16 %v331, %v330
    %v343 = vpack.c.bf16 %v333, %v332
    %v344 = vpack.c.bf16 %v335, %v334
    %v345 = vpack.c.bf16 %v337, %v336
    %346 = vst [vmem:[#allocation2 + $0x40] sm:$0xff] %v338
    %347 = vst [vmem:[#allocation2 + $0x48] sm:$0xff] %v339
    %348 = vst [vmem:[#allocation2 + $0x50] sm:$0xff] %v340
    %349 = vst [vmem:[#allocation2 + $0x58] sm:$0xff] %v341
    %350 = vst [vmem:[#allocation2 + $0x60] sm:$0xff] %v342
    %351 = vst [vmem:[#allocation2 + $0x68] sm:$0xff] %v343
    %352 = vst [vmem:[#allocation2 + $0x70] sm:$0xff] %v344
    %353 = vst [vmem:[#allocation2 + $0x78] sm:$0xff] %v345
    %354 = vrot.lane.b32.xlu0 %v156, 15
    %v355 = vpop.permute.xlu0 %354
    %356 = vrot.lane.b32.xlu0 %v160, 15
    %v357 = vpop.permute.xlu0 %356
    %358 = vrot.lane.b32.xlu0 %v164, 15
    %v359 = vpop.permute.xlu0 %358
    %360 = vrot.lane.b32.xlu0 %v168, 15
    %v361 = vpop.permute.xlu0 %360
    %362 = vrot.lane.b32.xlu0 %v157, 15
    %v363 = vpop.permute.xlu0 %362
    %364 = vrot.lane.b32.xlu0 %v161, 15
    %v365 = vpop.permute.xlu0 %364
    %366 = vrot.lane.b32.xlu0 %v165, 15
    %v367 = vpop.permute.xlu0 %366
    %368 = vrot.lane.b32.xlu0 %v169, 15
    %v369 = vpop.permute.xlu0 %368
    %370 = vrot.lane.b32.xlu0 %v158, 15
    %v371 = vpop.permute.xlu0 %370
    %372 = vrot.lane.b32.xlu0 %v162, 15
    %v373 = vpop.permute.xlu0 %372
    %374 = vrot.lane.b32.xlu0 %v166, 15
    %v375 = vpop.permute.xlu0 %374
    %376 = vrot.lane.b32.xlu0 %v170, 15
    %v377 = vpop.permute.xlu0 %376
    %378 = vrot.lane.b32.xlu0 %v159, 15
    %v379 = vpop.permute.xlu0 %378
    %380 = vrot.lane.b32.xlu0 %v163, 15
    %v381 = vpop.permute.xlu0 %380
    %382 = vrot.lane.b32.xlu0 %v167, 15
    %v383 = vpop.permute.xlu0 %382
    %384 = vrot.lane.b32.xlu0 %v171, 15
    %v385 = vpop.permute.xlu0 %384
    %vm386 = vcmp.lt.s32.totalorder %v205, 15
    %v387 = vsel %vm386, %v371, %v379
    %v388 = vsel %vm386, %v373, %v381
    %v389 = vsel %vm386, %v375, %v383
    %v390 = vsel %vm386, %v377, %v385
    %v391 = vsel %vm386, %v363, %v371
    %v392 = vsel %vm386, %v365, %v373
    %v393 = vsel %vm386, %v367, %v375
    %v394 = vsel %vm386, %v369, %v377
    %v395 = vsel %vm386, %v355, %v363
    %v396 = vsel %vm386, %v357, %v365
    %v397 = vsel %vm386, %v359, %v367
    %v398 = vsel %vm386, %v361, %v369
    %v399 = vsel %vm386, %v379, %v355
    %v400 = vsel %vm386, %v381, %v357
    %v401 = vsel %vm386, %v383, %v359
    %v402 = vsel %vm386, %v385, %v361
    %v404 = vperm.slane %v130, 0
    %v405 = vperm.slane %v130, 1
    %v406 = vperm.slane %v130, 2
    %v407 = vperm.slane %v130, 3
    %v412 = vmul.f32 %v399, %v404
    %v413 = vmul.f32 %v395, %v405
    %v414 = vmul.f32 %v391, %v406
    %v415 = vmul.f32 %v387, %v407
    %v416 = vmul.f32 %v400, %v404
    %v417 = vmul.f32 %v396, %v405
    %v418 = vmul.f32 %v392, %v406
    %v419 = vmul.f32 %v388, %v407
    %v420 = vmul.f32 %v401, %v404
    %v421 = vmul.f32 %v397, %v405
    %v422 = vmul.f32 %v393, %v406
    %v423 = vmul.f32 %v389, %v407
    %v424 = vmul.f32 %v402, %v404
    %v425 = vmul.f32 %v398, %v405
    %v426 = vmul.f32 %v394, %v406
    %v427 = vmul.f32 %v390, %v407
    %v428 = vpack.c.bf16 %v413, %v412
    %v429 = vpack.c.bf16 %v415, %v414
    %v430 = vpack.c.bf16 %v417, %v416
    %v431 = vpack.c.bf16 %v419, %v418
    %v432 = vpack.c.bf16 %v421, %v420
    %v433 = vpack.c.bf16 %v423, %v422
    %v434 = vpack.c.bf16 %v425, %v424
    %v435 = vpack.c.bf16 %v427, %v426
    %436 = vst [vmem:[#allocation2 + $0x80] sm:$0xff] %v428
    %437 = vst [vmem:[#allocation2 + $0x88] sm:$0xff] %v429
    %438 = vst [vmem:[#allocation2 + $0x90] sm:$0xff] %v430
    %439 = vst [vmem:[#allocation2 + $0x98] sm:$0xff] %v431
    %440 = vst [vmem:[#allocation2 + $0xa0] sm:$0xff] %v432
    %441 = vst [vmem:[#allocation2 + $0xa8] sm:$0xff] %v433
    %442 = vst [vmem:[#allocation2 + $0xb0] sm:$0xff] %v434
    %443 = vst [vmem:[#allocation2 + $0xb8] sm:$0xff] %v435
    %444 = vrot.lane.b32.xlu0 %v156, 1
    %v445 = vpop.permute.xlu0 %444
    %446 = vrot.lane.b32.xlu0 %v160, 1
    %v447 = vpop.permute.xlu0 %446
    %448 = vrot.lane.b32.xlu0 %v164, 1
    %v449 = vpop.permute.xlu0 %448
    %450 = vrot.lane.b32.xlu0 %v168, 1
    %v451 = vpop.permute.xlu0 %450
    %452 = vrot.lane.b32.xlu0 %v157, 1
    %v453 = vpop.permute.xlu0 %452
    %454 = vrot.lane.b32.xlu0 %v161, 1
    %v455 = vpop.permute.xlu0 %454
    %456 = vrot.lane.b32.xlu0 %v165, 1
    %v457 = vpop.permute.xlu0 %456
    %458 = vrot.lane.b32.xlu0 %v169, 1
    %v459 = vpop.permute.xlu0 %458
    %460 = vrot.lane.b32.xlu0 %v158, 1
    %v461 = vpop.permute.xlu0 %460
    %462 = vrot.lane.b32.xlu0 %v162, 1
    %v463 = vpop.permute.xlu0 %462
    %464 = vrot.lane.b32.xlu0 %v166, 1
    %v465 = vpop.permute.xlu0 %464
    %466 = vrot.lane.b32.xlu0 %v170, 1
    %v467 = vpop.permute.xlu0 %466
    %468 = vrot.lane.b32.xlu0 %v159, 1
    %v469 = vpop.permute.xlu0 %468
    %470 = vrot.lane.b32.xlu0 %v163, 1
    %v471 = vpop.permute.xlu0 %470
    %472 = vrot.lane.b32.xlu0 %v167, 1
    %v473 = vpop.permute.xlu0 %472
    %474 = vrot.lane.b32.xlu0 %v171, 1
    %v475 = vpop.permute.xlu0 %474
    %vm476 = vcmp.lt.s32.totalorder %v205, 1
    %v477 = vsel %vm476, %v461, %v469
    %v478 = vsel %vm476, %v463, %v471
    %v479 = vsel %vm476, %v465, %v473
    %v480 = vsel %vm476, %v467, %v475
    %v481 = vsel %vm476, %v453, %v461
    %v482 = vsel %vm476, %v455, %v463
    %v483 = vsel %vm476, %v457, %v465
    %v484 = vsel %vm476, %v459, %v467
    %v485 = vsel %vm476, %v445, %v453
    %v486 = vsel %vm476, %v447, %v455
    %v487 = vsel %vm476, %v449, %v457
    %v488 = vsel %vm476, %v451, %v459
    %v489 = vsel %vm476, %v469, %v445
    %v490 = vsel %vm476, %v471, %v447
    %v491 = vsel %vm476, %v473, %v449
    %v492 = vsel %vm476, %v475, %v451
    %v494 = vperm.slane %v132, 0
    %v495 = vperm.slane %v132, 1
    %v496 = vperm.slane %v132, 2
    %v497 = vperm.slane %v132, 3
    %v502 = vmul.f32 %v489, %v494
    %v503 = vmul.f32 %v485, %v495
    %v504 = vmul.f32 %v481, %v496
    %v505 = vmul.f32 %v477, %v497
    %v506 = vmul.f32 %v490, %v494
    %v507 = vmul.f32 %v486, %v495
    %v508 = vmul.f32 %v482, %v496
    %v509 = vmul.f32 %v478, %v497
    %v510 = vmul.f32 %v491, %v494
    %v511 = vmul.f32 %v487, %v495
    %v512 = vmul.f32 %v483, %v496
    %v513 = vmul.f32 %v479, %v497
    %v514 = vmul.f32 %v492, %v494
    %v515 = vmul.f32 %v488, %v495
    %v516 = vmul.f32 %v484, %v496
    %v517 = vmul.f32 %v480, %v497
    %v518 = vpack.c.bf16 %v503, %v502
    %v519 = vpack.c.bf16 %v505, %v504
    %v520 = vpack.c.bf16 %v507, %v506
    %v521 = vpack.c.bf16 %v509, %v508
    %v522 = vpack.c.bf16 %v511, %v510
    %v523 = vpack.c.bf16 %v513, %v512
    %v524 = vpack.c.bf16 %v515, %v514
    %v525 = vpack.c.bf16 %v517, %v516
    %526 = vst [vmem:[#allocation2 + $0xc0] sm:$0xff] %v518
    %527 = vst [vmem:[#allocation2 + $0xc8] sm:$0xff] %v519
    %528 = vst [vmem:[#allocation2 + $0xd0] sm:$0xff] %v520
    %529 = vst [vmem:[#allocation2 + $0xd8] sm:$0xff] %v521
    %530 = vst [vmem:[#allocation2 + $0xe0] sm:$0xff] %v522
    %531 = vst [vmem:[#allocation2 + $0xe8] sm:$0xff] %v523
    %532 = vst [vmem:[#allocation2 + $0xf0] sm:$0xff] %v524
    %533 = vst [vmem:[#allocation2 + $0xf8] sm:$0xff] %v525
    %v534 = vpack.c.bf16 %v157, %v156
    %v535 = vpack.c.bf16 %v159, %v158
    %v536 = vpack.c.bf16 %v161, %v160
    %v537 = vpack.c.bf16 %v163, %v162
    %v538 = vpack.c.bf16 %v165, %v164
    %v539 = vpack.c.bf16 %v167, %v166
    %v540 = vpack.c.bf16 %v169, %v168
    %v541 = vpack.c.bf16 %v171, %v170
    %542 = vst [vmem:[#allocation2 + $0x100] sm:$0xff] %v534
    %543 = vst [vmem:[#allocation2 + $0x108] sm:$0xff] %v535
    %544 = vst [vmem:[#allocation2 + $0x110] sm:$0xff] %v536
    %545 = vst [vmem:[#allocation2 + $0x118] sm:$0xff] %v537
    %546 = vst [vmem:[#allocation2 + $0x120] sm:$0xff] %v538
    %547 = vst [vmem:[#allocation2 + $0x128] sm:$0xff] %v539
    %548 = vst [vmem:[#allocation2 + $0x130] sm:$0xff] %v540
    %549 = vst [vmem:[#allocation2 + $0x138] sm:$0xff] %v541
    %550 = vrot.lane.b32.xlu0 %v156, 127
    %v551 = vpop.permute.xlu0 %550
    %552 = vrot.lane.b32.xlu0 %v160, 127
    %v553 = vpop.permute.xlu0 %552
    %554 = vrot.lane.b32.xlu0 %v164, 127
    %v555 = vpop.permute.xlu0 %554
    %556 = vrot.lane.b32.xlu0 %v168, 127
    %v557 = vpop.permute.xlu0 %556
    %558 = vrot.lane.b32.xlu0 %v157, 127
    %v559 = vpop.permute.xlu0 %558
    %560 = vrot.lane.b32.xlu0 %v161, 127
    %v561 = vpop.permute.xlu0 %560
    %562 = vrot.lane.b32.xlu0 %v165, 127
    %v563 = vpop.permute.xlu0 %562
    %564 = vrot.lane.b32.xlu0 %v169, 127
    %v565 = vpop.permute.xlu0 %564
    %566 = vrot.lane.b32.xlu0 %v158, 127
    %v567 = vpop.permute.xlu0 %566
    %568 = vrot.lane.b32.xlu0 %v162, 127
    %v569 = vpop.permute.xlu0 %568
    %570 = vrot.lane.b32.xlu0 %v166, 127
    %v571 = vpop.permute.xlu0 %570
    %572 = vrot.lane.b32.xlu0 %v170, 127
    %v573 = vpop.permute.xlu0 %572
    %574 = vrot.lane.b32.xlu0 %v159, 127
    %v575 = vpop.permute.xlu0 %574
    %576 = vrot.lane.b32.xlu0 %v163, 127
    %v577 = vpop.permute.xlu0 %576
    %578 = vrot.lane.b32.xlu0 %v167, 127
    %v579 = vpop.permute.xlu0 %578
    %580 = vrot.lane.b32.xlu0 %v171, 127
    %v581 = vpop.permute.xlu0 %580
    %vm582 = vcmp.lt.s32.totalorder %v205, 127
    %v583 = vsel %vm582, %v567, %v575
    %v584 = vsel %vm582, %v569, %v577
    %v585 = vsel %vm582, %v571, %v579
    %v586 = vsel %vm582, %v573, %v581
    %v587 = vsel %vm582, %v559, %v567
    %v588 = vsel %vm582, %v561, %v569
    %v589 = vsel %vm582, %v563, %v571
    %v590 = vsel %vm582, %v565, %v573
    %v591 = vsel %vm582, %v551, %v559
    %v592 = vsel %vm582, %v553, %v561
    %v593 = vsel %vm582, %v555, %v563
    %v594 = vsel %vm582, %v557, %v565
    %v595 = vsel %vm582, %v575, %v551
    %v596 = vsel %vm582, %v577, %v553
    %v597 = vsel %vm582, %v579, %v555
    %v598 = vsel %vm582, %v581, %v557
    %v600 = vperm.slane %v134, 0
    %v601 = vperm.slane %v134, 1
    %v602 = vperm.slane %v134, 2
    %v603 = vperm.slane %v134, 3
    %v608 = vmul.f32 %v591, %v600
    %v609 = vmul.f32 %v587, %v601
    %v610 = vmul.f32 %v583, %v602
    %v611 = vmul.f32 %v595, %v603
    %v612 = vmul.f32 %v592, %v600
    %v613 = vmul.f32 %v588, %v601
    %v614 = vmul.f32 %v584, %v602
    %v615 = vmul.f32 %v596, %v603
    %v616 = vmul.f32 %v593, %v600
    %v617 = vmul.f32 %v589, %v601
    %v618 = vmul.f32 %v585, %v602
    %v619 = vmul.f32 %v597, %v603
    %v620 = vmul.f32 %v594, %v600
    %v621 = vmul.f32 %v590, %v601
    %v622 = vmul.f32 %v586, %v602
    %v623 = vmul.f32 %v598, %v603
    %v624 = vpack.c.bf16 %v609, %v608
    %v625 = vpack.c.bf16 %v611, %v610
    %v626 = vpack.c.bf16 %v613, %v612
    %v627 = vpack.c.bf16 %v615, %v614
    %v628 = vpack.c.bf16 %v617, %v616
    %v629 = vpack.c.bf16 %v619, %v618
    %v630 = vpack.c.bf16 %v621, %v620
    %v631 = vpack.c.bf16 %v623, %v622
    %632 = vst [vmem:[#allocation2 + $0x140] sm:$0xff] %v624
    %633 = vst [vmem:[#allocation2 + $0x148] sm:$0xff] %v625
    %634 = vst [vmem:[#allocation2 + $0x150] sm:$0xff] %v626
    %635 = vst [vmem:[#allocation2 + $0x158] sm:$0xff] %v627
    %636 = vst [vmem:[#allocation2 + $0x160] sm:$0xff] %v628
    %637 = vst [vmem:[#allocation2 + $0x168] sm:$0xff] %v629
    %638 = vst [vmem:[#allocation2 + $0x170] sm:$0xff] %v630
    %639 = vst [vmem:[#allocation2 + $0x178] sm:$0xff] %v631
    %640 = vrot.lane.b32.xlu0 %v156, 113
    %v641 = vpop.permute.xlu0 %640
    %642 = vrot.lane.b32.xlu0 %v160, 113
    %v643 = vpop.permute.xlu0 %642
    %644 = vrot.lane.b32.xlu0 %v164, 113
    %v645 = vpop.permute.xlu0 %644
    %646 = vrot.lane.b32.xlu0 %v168, 113
    %v647 = vpop.permute.xlu0 %646
    %648 = vrot.lane.b32.xlu0 %v157, 113
    %v649 = vpop.permute.xlu0 %648
    %650 = vrot.lane.b32.xlu0 %v161, 113
    %v651 = vpop.permute.xlu0 %650
    %652 = vrot.lane.b32.xlu0 %v165, 113
    %v653 = vpop.permute.xlu0 %652
    %654 = vrot.lane.b32.xlu0 %v169, 113
    %v655 = vpop.permute.xlu0 %654
    %656 = vrot.lane.b32.xlu0 %v158, 113
    %v657 = vpop.permute.xlu0 %656
    %658 = vrot.lane.b32.xlu0 %v162, 113
    %v659 = vpop.permute.xlu0 %658
    %660 = vrot.lane.b32.xlu0 %v166, 113
    %v661 = vpop.permute.xlu0 %660
    %662 = vrot.lane.b32.xlu0 %v170, 113
    %v663 = vpop.permute.xlu0 %662
    %664 = vrot.lane.b32.xlu0 %v159, 113
    %v665 = vpop.permute.xlu0 %664
    %666 = vrot.lane.b32.xlu0 %v163, 113
    %v667 = vpop.permute.xlu0 %666
    %668 = vrot.lane.b32.xlu0 %v167, 113
    %v669 = vpop.permute.xlu0 %668
    %670 = vrot.lane.b32.xlu0 %v171, 113
    %v671 = vpop.permute.xlu0 %670
    %vm672 = vcmp.lt.s32.totalorder %v205, 113
    %v673 = vsel %vm672, %v657, %v665
    %v674 = vsel %vm672, %v659, %v667
    %v675 = vsel %vm672, %v661, %v669
    %v676 = vsel %vm672, %v663, %v671
    %v677 = vsel %vm672, %v649, %v657
    %v678 = vsel %vm672, %v651, %v659
    %v679 = vsel %vm672, %v653, %v661
    %v680 = vsel %vm672, %v655, %v663
    %v681 = vsel %vm672, %v641, %v649
    %v682 = vsel %vm672, %v643, %v651
    %v683 = vsel %vm672, %v645, %v653
    %v684 = vsel %vm672, %v647, %v655
    %v685 = vsel %vm672, %v665, %v641
    %v686 = vsel %vm672, %v667, %v643
    %v687 = vsel %vm672, %v669, %v645
    %v688 = vsel %vm672, %v671, %v647
    %v690 = vperm.slane %v136, 0
    %v691 = vperm.slane %v136, 1
    %v692 = vperm.slane %v136, 2
    %v693 = vperm.slane %v136, 3
    %v698 = vmul.f32 %v681, %v690
    %v699 = vmul.f32 %v677, %v691
    %v700 = vmul.f32 %v673, %v692
    %v701 = vmul.f32 %v685, %v693
    %v702 = vmul.f32 %v682, %v690
    %v703 = vmul.f32 %v678, %v691
    %v704 = vmul.f32 %v674, %v692
    %v705 = vmul.f32 %v686, %v693
    %v706 = vmul.f32 %v683, %v690
    %v707 = vmul.f32 %v679, %v691
    %v708 = vmul.f32 %v675, %v692
    %v709 = vmul.f32 %v687, %v693
    %v710 = vmul.f32 %v684, %v690
    %v711 = vmul.f32 %v680, %v691
    %v712 = vmul.f32 %v676, %v692
    %v713 = vmul.f32 %v688, %v693
    %v714 = vpack.c.bf16 %v699, %v698
    %v715 = vpack.c.bf16 %v701, %v700
    %v716 = vpack.c.bf16 %v703, %v702
    %v717 = vpack.c.bf16 %v705, %v704
    %v718 = vpack.c.bf16 %v707, %v706
    %v719 = vpack.c.bf16 %v709, %v708
    %v720 = vpack.c.bf16 %v711, %v710
    %v721 = vpack.c.bf16 %v713, %v712
    %722 = vst [vmem:[#allocation2 + $0x180] sm:$0xff] %v714
    %723 = vst [vmem:[#allocation2 + $0x188] sm:$0xff] %v715
    %724 = vst [vmem:[#allocation2 + $0x190] sm:$0xff] %v716
    %725 = vst [vmem:[#allocation2 + $0x198] sm:$0xff] %v717
    %726 = vst [vmem:[#allocation2 + $0x1a0] sm:$0xff] %v718
    %727 = vst [vmem:[#allocation2 + $0x1a8] sm:$0xff] %v719
    %728 = vst [vmem:[#allocation2 + $0x1b0] sm:$0xff] %v720
    %729 = vst [vmem:[#allocation2 + $0x1b8] sm:$0xff] %v721
    %730 = vrot.lane.b32.xlu0 %v156, 112
    %v731 = vpop.permute.xlu0 %730
    %732 = vrot.lane.b32.xlu0 %v160, 112
    %v733 = vpop.permute.xlu0 %732
    %734 = vrot.lane.b32.xlu0 %v164, 112
    %v735 = vpop.permute.xlu0 %734
    %736 = vrot.lane.b32.xlu0 %v168, 112
    %v737 = vpop.permute.xlu0 %736
    %738 = vrot.lane.b32.xlu0 %v157, 112
    %v739 = vpop.permute.xlu0 %738
    %740 = vrot.lane.b32.xlu0 %v161, 112
    %v741 = vpop.permute.xlu0 %740
    %742 = vrot.lane.b32.xlu0 %v165, 112
    %v743 = vpop.permute.xlu0 %742
    %744 = vrot.lane.b32.xlu0 %v169, 112
    %v745 = vpop.permute.xlu0 %744
    %746 = vrot.lane.b32.xlu0 %v158, 112
    %v747 = vpop.permute.xlu0 %746
    %748 = vrot.lane.b32.xlu0 %v162, 112
    %v749 = vpop.permute.xlu0 %748
    %750 = vrot.lane.b32.xlu0 %v166, 112
    %v751 = vpop.permute.xlu0 %750
    %752 = vrot.lane.b32.xlu0 %v170, 112
    %v753 = vpop.permute.xlu0 %752
    %754 = vrot.lane.b32.xlu0 %v159, 112
    %v755 = vpop.permute.xlu0 %754
    %756 = vrot.lane.b32.xlu0 %v163, 112
    %v757 = vpop.permute.xlu0 %756
    %758 = vrot.lane.b32.xlu0 %v167, 112
    %v759 = vpop.permute.xlu0 %758
    %760 = vrot.lane.b32.xlu0 %v171, 112
    %v761 = vpop.permute.xlu0 %760
    %vm762 = vcmp.lt.s32.totalorder %v205, 112
    %v763 = vsel %vm762, %v747, %v755
    %v764 = vsel %vm762, %v749, %v757
    %v765 = vsel %vm762, %v751, %v759
    %v766 = vsel %vm762, %v753, %v761
    %v767 = vsel %vm762, %v739, %v747
    %v768 = vsel %vm762, %v741, %v749
    %v769 = vsel %vm762, %v743, %v751
    %v770 = vsel %vm762, %v745, %v753
    %v771 = vsel %vm762, %v731, %v739
    %v772 = vsel %vm762, %v733, %v741
    %v773 = vsel %vm762, %v735, %v743
    %v774 = vsel %vm762, %v737, %v745
    %v775 = vsel %vm762, %v755, %v731
    %v776 = vsel %vm762, %v757, %v733
    %v777 = vsel %vm762, %v759, %v735
    %v778 = vsel %vm762, %v761, %v737
    %v780 = vperm.slane %v138, 0
    %v781 = vperm.slane %v138, 1
    %v782 = vperm.slane %v138, 2
    %v783 = vperm.slane %v138, 3
    %v788 = vmul.f32 %v771, %v780
    %v789 = vmul.f32 %v767, %v781
    %v790 = vmul.f32 %v763, %v782
    %v791 = vmul.f32 %v775, %v783
    %v792 = vmul.f32 %v772, %v780
    %v793 = vmul.f32 %v768, %v781
    %v794 = vmul.f32 %v764, %v782
    %v795 = vmul.f32 %v776, %v783
    %v796 = vmul.f32 %v773, %v780
    %v797 = vmul.f32 %v769, %v781
    %v798 = vmul.f32 %v765, %v782
    %v799 = vmul.f32 %v777, %v783
    %v800 = vmul.f32 %v774, %v780
    %v801 = vmul.f32 %v770, %v781
    %v802 = vmul.f32 %v766, %v782
    %v803 = vmul.f32 %v778, %v783
    %v804 = vpack.c.bf16 %v789, %v788
    %v805 = vpack.c.bf16 %v791, %v790
    %v806 = vpack.c.bf16 %v793, %v792
    %v807 = vpack.c.bf16 %v795, %v794
    %v808 = vpack.c.bf16 %v797, %v796
    %v809 = vpack.c.bf16 %v799, %v798
    %v810 = vpack.c.bf16 %v801, %v800
    %v811 = vpack.c.bf16 %v803, %v802
    %812 = vst [vmem:[#allocation2 + $0x1c0] sm:$0xff] %v804
    %813 = vst [vmem:[#allocation2 + $0x1c8] sm:$0xff] %v805
    %814 = vst [vmem:[#allocation2 + $0x1d0] sm:$0xff] %v806
    %815 = vst [vmem:[#allocation2 + $0x1d8] sm:$0xff] %v807
    %816 = vst [vmem:[#allocation2 + $0x1e0] sm:$0xff] %v808
    %817 = vst [vmem:[#allocation2 + $0x1e8] sm:$0xff] %v809
    %818 = vst [vmem:[#allocation2 + $0x1f0] sm:$0xff] %v810
    %819 = vst [vmem:[#allocation2 + $0x1f8] sm:$0xff] %v811
    %820 = vrot.lane.b32.xlu0 %v156, 111
    %v821 = vpop.permute.xlu0 %820
    %822 = vrot.lane.b32.xlu0 %v160, 111
    %v823 = vpop.permute.xlu0 %822
    %824 = vrot.lane.b32.xlu0 %v164, 111
    %v825 = vpop.permute.xlu0 %824
    %826 = vrot.lane.b32.xlu0 %v168, 111
    %v827 = vpop.permute.xlu0 %826
    %828 = vrot.lane.b32.xlu0 %v157, 111
    %v829 = vpop.permute.xlu0 %828
    %830 = vrot.lane.b32.xlu0 %v161, 111
    %v831 = vpop.permute.xlu0 %830
    %832 = vrot.lane.b32.xlu0 %v165, 111
    %v833 = vpop.permute.xlu0 %832
    %834 = vrot.lane.b32.xlu0 %v169, 111
    %v835 = vpop.permute.xlu0 %834
    %836 = vrot.lane.b32.xlu0 %v158, 111
    %v837 = vpop.permute.xlu0 %836
    %838 = vrot.lane.b32.xlu0 %v162, 111
    %v839 = vpop.permute.xlu0 %838
    %840 = vrot.lane.b32.xlu0 %v166, 111
    %v841 = vpop.permute.xlu0 %840
    %842 = vrot.lane.b32.xlu0 %v170, 111
    %v843 = vpop.permute.xlu0 %842
    %844 = vrot.lane.b32.xlu0 %v159, 111
    %v845 = vpop.permute.xlu0 %844
    %846 = vrot.lane.b32.xlu0 %v163, 111
    %v847 = vpop.permute.xlu0 %846
    %848 = vrot.lane.b32.xlu0 %v167, 111
    %v849 = vpop.permute.xlu0 %848
    %850 = vrot.lane.b32.xlu0 %v171, 111
    %v851 = vpop.permute.xlu0 %850
    %vm852 = vcmp.lt.s32.totalorder %v205, 111
    %v853 = vsel %vm852, %v837, %v845
    %v854 = vsel %vm852, %v839, %v847
    %v855 = vsel %vm852, %v841, %v849
    %v856 = vsel %vm852, %v843, %v851
    %v857 = vsel %vm852, %v829, %v837
    %v858 = vsel %vm852, %v831, %v839
    %v859 = vsel %vm852, %v833, %v841
    %v860 = vsel %vm852, %v835, %v843
    %v861 = vsel %vm852, %v821, %v829
    %v862 = vsel %vm852, %v823, %v831
    %v863 = vsel %vm852, %v825, %v833
    %v864 = vsel %vm852, %v827, %v835
    %v865 = vsel %vm852, %v845, %v821
    %v866 = vsel %vm852, %v847, %v823
    %v867 = vsel %vm852, %v849, %v825
    %v868 = vsel %vm852, %v851, %v827
    %v870 = vperm.slane %v140, 0
    %v871 = vperm.slane %v140, 1
    %v872 = vperm.slane %v140, 2
    %v873 = vperm.slane %v140, 3
    %v878 = vmul.f32 %v861, %v870
    %v879 = vmul.f32 %v857, %v871
    %v880 = vmul.f32 %v853, %v872
    %v881 = vmul.f32 %v865, %v873
    %v882 = vmul.f32 %v862, %v870
    %v883 = vmul.f32 %v858, %v871
    %v884 = vmul.f32 %v854, %v872
    %v885 = vmul.f32 %v866, %v873
    %v886 = vmul.f32 %v863, %v870
    %v887 = vmul.f32 %v859, %v871
    %v888 = vmul.f32 %v855, %v872
    %v889 = vmul.f32 %v867, %v873
    %v890 = vmul.f32 %v864, %v870
    %v891 = vmul.f32 %v860, %v871
    %v892 = vmul.f32 %v856, %v872
    %v893 = vmul.f32 %v868, %v873
    %v894 = vpack.c.bf16 %v879, %v878
    %v895 = vpack.c.bf16 %v881, %v880
    %v896 = vpack.c.bf16 %v883, %v882
    %v897 = vpack.c.bf16 %v885, %v884
    %v898 = vpack.c.bf16 %v887, %v886
    %v899 = vpack.c.bf16 %v889, %v888
    %v900 = vpack.c.bf16 %v891, %v890
    %v901 = vpack.c.bf16 %v893, %v892
    %902 = vst [vmem:[#allocation2 + $0x200] sm:$0xff] %v894
    %903 = vst [vmem:[#allocation2 + $0x208] sm:$0xff] %v895
    %904 = vst [vmem:[#allocation2 + $0x210] sm:$0xff] %v896
    %905 = vst [vmem:[#allocation2 + $0x218] sm:$0xff] %v897
    %906 = vst [vmem:[#allocation2 + $0x220] sm:$0xff] %v898
    %907 = vst [vmem:[#allocation2 + $0x228] sm:$0xff] %v899
    %908 = vst [vmem:[#allocation2 + $0x230] sm:$0xff] %v900
    %909 = vst [vmem:[#allocation2 + $0x238] sm:$0xff] %v901
    %v910 = vld [vmem:[#allocation2] sm:$0xff]
    %v911 = vld [vmem:[#allocation2 + $0x8] sm:$0xff]
    %v912 = vld [vmem:[#allocation2 + $0x10] sm:$0xff]
    %v913 = vld [vmem:[#allocation2 + $0x18] sm:$0xff]
    %v914 = vld [vmem:[#allocation2 + $0x20] sm:$0xff]
    %v915 = vld [vmem:[#allocation2 + $0x28] sm:$0xff]
    %v916 = vld [vmem:[#allocation2 + $0x30] sm:$0xff]
    %v917 = vld [vmem:[#allocation2 + $0x38] sm:$0xff]
    %v918 = vld [vmem:[#allocation2 + $0x40] sm:$0xff]
    %v919 = vld [vmem:[#allocation2 + $0x48] sm:$0xff]
    %v920 = vld [vmem:[#allocation2 + $0x50] sm:$0xff]
    %v921 = vld [vmem:[#allocation2 + $0x58] sm:$0xff]
    %v922 = vld [vmem:[#allocation2 + $0x60] sm:$0xff]
    %v923 = vld [vmem:[#allocation2 + $0x68] sm:$0xff]
    %v924 = vld [vmem:[#allocation2 + $0x70] sm:$0xff]
    %v925 = vld [vmem:[#allocation2 + $0x78] sm:$0xff]
    %v926 = vld [vmem:[#allocation2 + $0x80] sm:$0xff]
    %v927 = vld [vmem:[#allocation2 + $0x88] sm:$0xff]
    %v928 = vld [vmem:[#allocation2 + $0x90] sm:$0xff]
    %v929 = vld [vmem:[#allocation2 + $0x98] sm:$0xff]
    %v930 = vld [vmem:[#allocation2 + $0xa0] sm:$0xff]
    %v931 = vld [vmem:[#allocation2 + $0xa8] sm:$0xff]
    %v932 = vld [vmem:[#allocation2 + $0xb0] sm:$0xff]
    %v933 = vld [vmem:[#allocation2 + $0xb8] sm:$0xff]
    %v934 = vld [vmem:[#allocation2 + $0xc0] sm:$0xff]
    %v935 = vld [vmem:[#allocation2 + $0xc8] sm:$0xff]
    %v936 = vld [vmem:[#allocation2 + $0xd0] sm:$0xff]
    %v937 = vld [vmem:[#allocation2 + $0xd8] sm:$0xff]
    %v938 = vld [vmem:[#allocation2 + $0xe0] sm:$0xff]
    %v939 = vld [vmem:[#allocation2 + $0xe8] sm:$0xff]
    %v940 = vld [vmem:[#allocation2 + $0xf0] sm:$0xff]
    %v941 = vld [vmem:[#allocation2 + $0xf8] sm:$0xff]
    %v942 = vld [vmem:[#allocation2 + $0x100] sm:$0xff]
    %v943 = vld [vmem:[#allocation2 + $0x108] sm:$0xff]
    %v944 = vld [vmem:[#allocation2 + $0x110] sm:$0xff]
    %v945 = vld [vmem:[#allocation2 + $0x118] sm:$0xff]
    %v946 = vld [vmem:[#allocation2 + $0x120] sm:$0xff]
    %v947 = vld [vmem:[#allocation2 + $0x128] sm:$0xff]
    %v948 = vld [vmem:[#allocation2 + $0x130] sm:$0xff]
    %v949 = vld [vmem:[#allocation2 + $0x138] sm:$0xff]
    %v950 = vld [vmem:[#allocation2 + $0x140] sm:$0xff]
    %v951 = vld [vmem:[#allocation2 + $0x148] sm:$0xff]
    %v952 = vld [vmem:[#allocation2 + $0x150] sm:$0xff]
    %v953 = vld [vmem:[#allocation2 + $0x158] sm:$0xff]
    %v954 = vld [vmem:[#allocation2 + $0x160] sm:$0xff]
    %v955 = vld [vmem:[#allocation2 + $0x168] sm:$0xff]
    %v956 = vld [vmem:[#allocation2 + $0x170] sm:$0xff]
    %v957 = vld [vmem:[#allocation2 + $0x178] sm:$0xff]
    %v958 = vld [vmem:[#allocation2 + $0x180] sm:$0xff]
    %v959 = vld [vmem:[#allocation2 + $0x188] sm:$0xff]
    %v960 = vld [vmem:[#allocation2 + $0x190] sm:$0xff]
    %v961 = vld [vmem:[#allocation2 + $0x198] sm:$0xff]
    %v962 = vld [vmem:[#allocation2 + $0x1a0] sm:$0xff]
    %v963 = vld [vmem:[#allocation2 + $0x1a8] sm:$0xff]
    %v964 = vld [vmem:[#allocation2 + $0x1b0] sm:$0xff]
    %v965 = vld [vmem:[#allocation2 + $0x1b8] sm:$0xff]
    %v966 = vld [vmem:[#allocation2 + $0x1c0] sm:$0xff]
    %v967 = vld [vmem:[#allocation2 + $0x1c8] sm:$0xff]
    %v968 = vld [vmem:[#allocation2 + $0x1d0] sm:$0xff]
    %v969 = vld [vmem:[#allocation2 + $0x1d8] sm:$0xff]
    %v970 = vld [vmem:[#allocation2 + $0x1e0] sm:$0xff]
    %v971 = vld [vmem:[#allocation2 + $0x1e8] sm:$0xff]
    %v972 = vld [vmem:[#allocation2 + $0x1f0] sm:$0xff]
    %v973 = vld [vmem:[#allocation2 + $0x1f8] sm:$0xff]
    %v974 = vld [vmem:[#allocation2 + $0x200] sm:$0xff]
    %v975 = vld [vmem:[#allocation2 + $0x208] sm:$0xff]
    %v976 = vld [vmem:[#allocation2 + $0x210] sm:$0xff]
    %v977 = vld [vmem:[#allocation2 + $0x218] sm:$0xff]
    %v978 = vld [vmem:[#allocation2 + $0x220] sm:$0xff]
    %v979 = vld [vmem:[#allocation2 + $0x228] sm:$0xff]
    %v980 = vld [vmem:[#allocation2 + $0x230] sm:$0xff]
    %v981 = vld [vmem:[#allocation2 + $0x238] sm:$0xff]
    %v990 = vunpack.c.l.b16 %v74
    %v991 = vunpack.c.h.b16 %v74
    %v992 = vunpack.c.l.b16 %v75
    %v993 = vunpack.c.l.b16 %v76
    %v994 = vunpack.c.h.b16 %v76
    %v995 = vunpack.c.l.b16 %v77
    %v996 = vunpack.c.l.b16 %v78
    %v997 = vunpack.c.h.b16 %v78
    %v998 = vunpack.c.l.b16 %v79
    %v999 = vunpack.c.l.b16 %v80
    %v1000 = vunpack.c.h.b16 %v80
    %v1001 = vunpack.c.l.b16 %v81
    %v1002 = vpack.c.b16 %v993, %v990
    %v1003 = vpack.c.b16 %v994, %v991
    %v1004 = vpack.c.b16 %v995, %v992
    %v1005 = vpack.c.b16 %v999, %v996
    %v1006 = vpack.c.b16 %v1000, %v997
    %v1007 = vpack.c.b16 %v1001, %v998
    %v1084 = vunpack.c.l.b16 %v910
    %v1085 = vunpack.c.h.b16 %v910
    %v1086 = vunpack.c.l.b16 %v911
    %v1087 = vunpack.c.h.b16 %v911
    %v1088 = vunpack.c.l.b16 %v912
    %v1089 = vunpack.c.h.b16 %v912
    %v1090 = vunpack.c.l.b16 %v913
    %v1091 = vunpack.c.h.b16 %v913
    %v1092 = vunpack.c.l.b16 %v914
    %v1093 = vunpack.c.h.b16 %v914
    %v1094 = vunpack.c.l.b16 %v915
    %v1095 = vunpack.c.h.b16 %v915
    %v1096 = vunpack.c.l.b16 %v916
    %v1097 = vunpack.c.h.b16 %v916
    %v1098 = vunpack.c.l.b16 %v917
    %v1099 = vunpack.c.h.b16 %v917
    %v1100 = vunpack.c.l.b16 %v918
    %v1101 = vunpack.c.h.b16 %v918
    %v1102 = vunpack.c.l.b16 %v919
    %v1103 = vunpack.c.h.b16 %v919
    %v1104 = vunpack.c.l.b16 %v920
    %v1105 = vunpack.c.h.b16 %v920
    %v1106 = vunpack.c.l.b16 %v921
    %v1107 = vunpack.c.h.b16 %v921
    %v1108 = vunpack.c.l.b16 %v922
    %v1109 = vunpack.c.h.b16 %v922
    %v1110 = vunpack.c.l.b16 %v923
    %v1111 = vunpack.c.h.b16 %v923
    %v1112 = vunpack.c.l.b16 %v924
    %v1113 = vunpack.c.h.b16 %v924
    %v1114 = vunpack.c.l.b16 %v925
    %v1115 = vunpack.c.h.b16 %v925
    %v1116 = vunpack.c.l.b16 %v926
    %v1117 = vunpack.c.h.b16 %v926
    %v1118 = vunpack.c.l.b16 %v927
    %v1119 = vunpack.c.h.b16 %v927
    %v1120 = vunpack.c.l.b16 %v928
    %v1121 = vunpack.c.h.b16 %v928
    %v1122 = vunpack.c.l.b16 %v929
    %v1123 = vunpack.c.h.b16 %v929
    %v1124 = vunpack.c.l.b16 %v930
    %v1125 = vunpack.c.h.b16 %v930
    %v1126 = vunpack.c.l.b16 %v931
    %v1127 = vunpack.c.h.b16 %v931
    %v1128 = vunpack.c.l.b16 %v932
    %v1129 = vunpack.c.h.b16 %v932
    %v1130 = vunpack.c.l.b16 %v933
    %v1131 = vunpack.c.h.b16 %v933
    %v1132 = vunpack.c.l.b16 %v934
    %v1133 = vunpack.c.h.b16 %v934
    %v1134 = vunpack.c.l.b16 %v935
    %v1135 = vunpack.c.h.b16 %v935
    %v1136 = vunpack.c.l.b16 %v936
    %v1137 = vunpack.c.h.b16 %v936
    %v1138 = vunpack.c.l.b16 %v937
    %v1139 = vunpack.c.h.b16 %v937
    %v1140 = vunpack.c.l.b16 %v938
    %v1141 = vunpack.c.h.b16 %v938
    %v1142 = vunpack.c.l.b16 %v939
    %v1143 = vunpack.c.h.b16 %v939
    %v1144 = vunpack.c.l.b16 %v940
    %v1145 = vunpack.c.h.b16 %v940
    %v1146 = vunpack.c.l.b16 %v941
    %v1147 = vunpack.c.h.b16 %v941
    %v1148 = vunpack.c.l.b16 %v942
    %v1149 = vunpack.c.h.b16 %v942
    %v1150 = vunpack.c.l.b16 %v943
    %v1151 = vunpack.c.h.b16 %v943
    %v1152 = vunpack.c.l.b16 %v944
    %v1153 = vunpack.c.h.b16 %v944
    %v1154 = vunpack.c.l.b16 %v945
    %v1155 = vunpack.c.h.b16 %v945
    %v1156 = vunpack.c.l.b16 %v946
    %v1157 = vunpack.c.h.b16 %v946
    %v1158 = vunpack.c.l.b16 %v947
    %v1159 = vunpack.c.h.b16 %v947
    %v1160 = vunpack.c.l.b16 %v948
    %v1161 = vunpack.c.h.b16 %v948
    %v1162 = vunpack.c.l.b16 %v949
    %v1163 = vunpack.c.h.b16 %v949
    %v1164 = vunpack.c.l.b16 %v950
    %v1165 = vunpack.c.h.b16 %v950
    %v1166 = vunpack.c.l.b16 %v951
    %v1167 = vunpack.c.h.b16 %v951
    %v1168 = vunpack.c.l.b16 %v952
    %v1169 = vunpack.c.h.b16 %v952
    %v1170 = vunpack.c.l.b16 %v953
    %v1171 = vunpack.c.h.b16 %v953
    %v1172 = vunpack.c.l.b16 %v954
    %v1173 = vunpack.c.h.b16 %v954
    %v1174 = vunpack.c.l.b16 %v955
    %v1175 = vunpack.c.h.b16 %v955
    %v1176 = vunpack.c.l.b16 %v956
    %v1177 = vunpack.c.h.b16 %v956
    %v1178 = vunpack.c.l.b16 %v957
    %v1179 = vunpack.c.h.b16 %v957
    %v1180 = vunpack.c.l.b16 %v958
    %v1181 = vunpack.c.h.b16 %v958
    %v1182 = vunpack.c.l.b16 %v959
    %v1183 = vunpack.c.h.b16 %v959
    %v1184 = vunpack.c.l.b16 %v960
    %v1185 = vunpack.c.h.b16 %v960
    %v1186 = vunpack.c.l.b16 %v961
    %v1187 = vunpack.c.h.b16 %v961
    %v1188 = vunpack.c.l.b16 %v962
    %v1189 = vunpack.c.h.b16 %v962
    %v1190 = vunpack.c.l.b16 %v963
    %v1191 = vunpack.c.h.b16 %v963
    %v1192 = vunpack.c.l.b16 %v964
    %v1193 = vunpack.c.h.b16 %v964
    %v1194 = vunpack.c.l.b16 %v965
    %v1195 = vunpack.c.h.b16 %v965
    %v1196 = vunpack.c.l.b16 %v966
    %v1197 = vunpack.c.h.b16 %v966
    %v1198 = vunpack.c.l.b16 %v967
    %v1199 = vunpack.c.h.b16 %v967
    %v1200 = vunpack.c.l.b16 %v968
    %v1201 = vunpack.c.h.b16 %v968
    %v1202 = vunpack.c.l.b16 %v969
    %v1203 = vunpack.c.h.b16 %v969
    %v1204 = vunpack.c.l.b16 %v970
    %v1205 = vunpack.c.h.b16 %v970
    %v1206 = vunpack.c.l.b16 %v971
    %v1207 = vunpack.c.h.b16 %v971
    %v1208 = vunpack.c.l.b16 %v972
    %v1209 = vunpack.c.h.b16 %v972
    %v1210 = vunpack.c.l.b16 %v973
    %v1211 = vunpack.c.h.b16 %v973
    %v1212 = vunpack.c.l.b16 %v974
    %v1213 = vunpack.c.h.b16 %v974
    %v1214 = vunpack.c.l.b16 %v975
    %v1215 = vunpack.c.h.b16 %v975
    %v1216 = vunpack.c.l.b16 %v976
    %v1217 = vunpack.c.h.b16 %v976
    %v1218 = vunpack.c.l.b16 %v977
    %v1219 = vunpack.c.h.b16 %v977
    %v1220 = vunpack.c.l.b16 %v978
    %v1221 = vunpack.c.h.b16 %v978
    %v1222 = vunpack.c.l.b16 %v979
    %v1223 = vunpack.c.h.b16 %v979
    %v1224 = vunpack.c.l.b16 %v980
    %v1225 = vunpack.c.h.b16 %v980
    %v1226 = vunpack.c.l.b16 %v981
    %v1227 = vunpack.c.h.b16 %v981
    %v1228 = vpack.c.b16 %v1088, %v1084
    %v1229 = vpack.c.b16 %v1089, %v1085
    %v1230 = vpack.c.b16 %v1090, %v1086
    %v1231 = vpack.c.b16 %v1091, %v1087
    %v1232 = vpack.c.b16 %v1096, %v1092
    %v1233 = vpack.c.b16 %v1097, %v1093
    %v1234 = vpack.c.b16 %v1098, %v1094
    %v1235 = vpack.c.b16 %v1099, %v1095
    %v1236 = vpack.c.b16 %v1104, %v1100
    %v1237 = vpack.c.b16 %v1105, %v1101
    %v1238 = vpack.c.b16 %v1106, %v1102
    %v1239 = vpack.c.b16 %v1107, %v1103
    %v1240 = vpack.c.b16 %v1112, %v1108
    %v1241 = vpack.c.b16 %v1113, %v1109
    %v1242 = vpack.c.b16 %v1114, %v1110
    %v1243 = vpack.c.b16 %v1115, %v1111
    %v1244 = vpack.c.b16 %v1120, %v1116
    %v1245 = vpack.c.b16 %v1121, %v1117
    %v1246 = vpack.c.b16 %v1122, %v1118
    %v1247 = vpack.c.b16 %v1123, %v1119
    %v1248 = vpack.c.b16 %v1128, %v1124
    %v1249 = vpack.c.b16 %v1129, %v1125
    %v1250 = vpack.c.b16 %v1130, %v1126
    %v1251 = vpack.c.b16 %v1131, %v1127
    %v1252 = vpack.c.b16 %v1136, %v1132
    %v1253 = vpack.c.b16 %v1137, %v1133
    %v1254 = vpack.c.b16 %v1138, %v1134
    %v1255 = vpack.c.b16 %v1139, %v1135
    %v1256 = vpack.c.b16 %v1144, %v1140
    %v1257 = vpack.c.b16 %v1145, %v1141
    %v1258 = vpack.c.b16 %v1146, %v1142
    %v1259 = vpack.c.b16 %v1147, %v1143
    %v1260 = vpack.c.b16 %v1152, %v1148
    %v1261 = vpack.c.b16 %v1153, %v1149
    %v1262 = vpack.c.b16 %v1154, %v1150
    %v1263 = vpack.c.b16 %v1155, %v1151
    %v1264 = vpack.c.b16 %v1160, %v1156
    %v1265 = vpack.c.b16 %v1161, %v1157
    %v1266 = vpack.c.b16 %v1162, %v1158
    %v1267 = vpack.c.b16 %v1163, %v1159
    %v1268 = vpack.c.b16 %v1168, %v1164
    %v1269 = vpack.c.b16 %v1169, %v1165
    %v1270 = vpack.c.b16 %v1170, %v1166
    %v1271 = vpack.c.b16 %v1171, %v1167
    %v1272 = vpack.c.b16 %v1176, %v1172
    %v1273 = vpack.c.b16 %v1177, %v1173
    %v1274 = vpack.c.b16 %v1178, %v1174
    %v1275 = vpack.c.b16 %v1179, %v1175
    %v1276 = vpack.c.b16 %v1184, %v1180
    %v1277 = vpack.c.b16 %v1185, %v1181
    %v1278 = vpack.c.b16 %v1186, %v1182
    %v1279 = vpack.c.b16 %v1187, %v1183
    %v1280 = vpack.c.b16 %v1192, %v1188
    %v1281 = vpack.c.b16 %v1193, %v1189
    %v1282 = vpack.c.b16 %v1194, %v1190
    %v1283 = vpack.c.b16 %v1195, %v1191
    %v1284 = vpack.c.b16 %v1200, %v1196
    %v1285 = vpack.c.b16 %v1201, %v1197
    %v1286 = vpack.c.b16 %v1202, %v1198
    %v1287 = vpack.c.b16 %v1203, %v1199
    %v1288 = vpack.c.b16 %v1208, %v1204
    %v1289 = vpack.c.b16 %v1209, %v1205
    %v1290 = vpack.c.b16 %v1210, %v1206
    %v1291 = vpack.c.b16 %v1211, %v1207
    %v1292 = vpack.c.b16 %v1216, %v1212
    %v1293 = vpack.c.b16 %v1217, %v1213
    %v1294 = vpack.c.b16 %v1218, %v1214
    %v1295 = vpack.c.b16 %v1219, %v1215
    %v1296 = vpack.c.b16 %v1224, %v1220
    %v1297 = vpack.c.b16 %v1225, %v1221
    %v1298 = vpack.c.b16 %v1226, %v1222
    %v1299 = vpack.c.b16 %v1227, %v1223
    %vm1372 = vcmask 261120
    %v1374 = vsel %vm1372, %v1004, 0
    %v1377 = vsel %vm1372, %v1007, 0
    %1379 = vmatpush.bf16.msra.mxu0 %v1256
    %1380 = vmatpush.bf16.msra.mxu0 %v1252
    %1381 = vmatpush.bf16.msra.mxu0 %v1248
    %1382 = vmatpush.bf16.msra.mxu0 %v1244
    %1383 = vmatpush.bf16.msra.mxu0 %v1240
    %1384 = vmatpush.bf16.msra.mxu0 %v1236
    %1385 = vmatpush.bf16.msra.mxu0 %v1232
    %1386 = vmatpush.bf16.msra.mxu0 %v1228
    %1387 = vmatmul.bf16.gmra.mxu0 %v1002
    %v1388 = vpop.f32.mrf.mxu0
    %v1389 = vadd.f32 0.0, %v1388
    %v1390 = vpop.f32.mrf.mxu0
    %v1391 = vadd.f32 0.0, %v1390
    %1392 = vmatmul.bf16.gmra.mxu0 %v1005
    %v1393 = vpop.f32.mrf.mxu0
    %v1394 = vadd.f32 0.0, %v1393
    %v1395 = vpop.f32.mrf.mxu0
    %v1396 = vadd.f32 0.0, %v1395
    %1397 = vdwg.mxu0
    %1398 = vmatpush.bf16.msra.mxu0 %v1288
    %1399 = vmatpush.bf16.msra.mxu0 %v1284
    %1400 = vmatpush.bf16.msra.mxu0 %v1280
    %1401 = vmatpush.bf16.msra.mxu0 %v1276
    %1402 = vmatpush.bf16.msra.mxu0 %v1272
    %1403 = vmatpush.bf16.msra.mxu0 %v1268
    %1404 = vmatpush.bf16.msra.mxu0 %v1264
    %1405 = vmatpush.bf16.msra.mxu0 %v1260
    %1406 = vmatmul.bf16.gmra.mxu0 %v1003
    %v1407 = vpop.f32.mrf.mxu0
    %v1408 = vadd.f32 %v1389, %v1407
    %v1409 = vpop.f32.mrf.mxu0
    %v1410 = vadd.f32 %v1391, %v1409
    %1411 = vmatmul.bf16.gmra.mxu0 %v1006
    %v1412 = vpop.f32.mrf.mxu0
    %v1413 = vadd.f32 %v1394, %v1412
    %v1414 = vpop.f32.mrf.mxu0
    %v1415 = vadd.f32 %v1396, %v1414
    %1416 = vdwg.mxu0
    %1417 = vmatpush.bf16.msra.mxu0 0
    %1418 = vmatpush.bf16.msra.mxu0 0
    %1419 = vmatpush.bf16.msra.mxu0 0
    %1420 = vmatpush.bf16.msra.mxu0 0
    %1421 = vmatpush.bf16.msra.mxu0 0
    %1422 = vmatpush.bf16.msra.mxu0 0
    %1423 = vmatpush.bf16.msra.mxu0 %v1296
    %1424 = vmatpush.bf16.msra.mxu0 %v1292
    %1425 = vmatmul.bf16.gmra.mxu0 %v1374
    %v1426 = vpop.f32.mrf.mxu0
    %v1427 = vadd.f32 %v1408, %v1426
    %v1428 = vpop.f32.mrf.mxu0
    %v1429 = vadd.f32 %v1410, %v1428
    %1430 = vmatmul.bf16.gmra.mxu0 %v1377
    %v1431 = vpop.f32.mrf.mxu0
    %v1432 = vadd.f32 %v1413, %v1431
    %v1433 = vpop.f32.mrf.mxu0
    %v1434 = vadd.f32 %v1415, %v1433
    %1435 = vdwg.mxu0
    %1436 = vmatpush.bf16.msra.mxu0 %v1257
    %1437 = vmatpush.bf16.msra.mxu0 %v1253
    %1438 = vmatpush.bf16.msra.mxu0 %v1249
    %1439 = vmatpush.bf16.msra.mxu0 %v1245
    %1440 = vmatpush.bf16.msra.mxu0 %v1241
    %1441 = vmatpush.bf16.msra.mxu0 %v1237
    %1442 = vmatpush.bf16.msra.mxu0 %v1233
    %1443 = vmatpush.bf16.msra.mxu0 %v1229
    %1444 = vmatmul.bf16.gmra.mxu0 %v1002
    %v1445 = vpop.f32.mrf.mxu0
    %v1446 = vadd.f32 0.0, %v1445
    %v1447 = vpop.f32.mrf.mxu0
    %v1448 = vadd.f32 0.0, %v1447
    %1449 = vmatmul.bf16.gmra.mxu0 %v1005
    %v1450 = vpop.f32.mrf.mxu0
    %v1451 = vadd.f32 0.0, %v1450
    %v1452 = vpop.f32.mrf.mxu0
    %v1453 = vadd.f32 0.0, %v1452
    %1454 = vdwg.mxu0
    %1455 = vmatpush.bf16.msra.mxu0 %v1289
    %1456 = vmatpush.bf16.msra.mxu0 %v1285
    %1457 = vmatpush.bf16.msra.mxu0 %v1281
    %1458 = vmatpush.bf16.msra.mxu0 %v1277
    %1459 = vmatpush.bf16.msra.mxu0 %v1273
    %1460 = vmatpush.bf16.msra.mxu0 %v1269
    %1461 = vmatpush.bf16.msra.mxu0 %v1265
    %1462 = vmatpush.bf16.msra.mxu0 %v1261
    %1463 = vmatmul.bf16.gmra.mxu0 %v1003
    %v1464 = vpop.f32.mrf.mxu0
    %v1465 = vadd.f32 %v1446, %v1464
    %v1466 = vpop.f32.mrf.mxu0
    %v1467 = vadd.f32 %v1448, %v1466
    %1468 = vmatmul.bf16.gmra.mxu0 %v1006
    %v1469 = vpop.f32.mrf.mxu0
    %v1470 = vadd.f32 %v1451, %v1469
    %v1471 = vpop.f32.mrf.mxu0
    %v1472 = vadd.f32 %v1453, %v1471
    %1473 = vdwg.mxu0
    %1474 = vmatpush.bf16.msra.mxu0 0
    %1475 = vmatpush.bf16.msra.mxu0 0
    %1476 = vmatpush.bf16.msra.mxu0 0
    %1477 = vmatpush.bf16.msra.mxu0 0
    %1478 = vmatpush.bf16.msra.mxu0 0
    %1479 = vmatpush.bf16.msra.mxu0 0
    %1480 = vmatpush.bf16.msra.mxu0 %v1297
    %1481 = vmatpush.bf16.msra.mxu0 %v1293
    %1482 = vmatmul.bf16.gmra.mxu0 %v1374
    %v1483 = vpop.f32.mrf.mxu0
    %v1484 = vadd.f32 %v1465, %v1483
    %v1485 = vpop.f32.mrf.mxu0
    %v1486 = vadd.f32 %v1467, %v1485
    %1487 = vmatmul.bf16.gmra.mxu0 %v1377
    %v1488 = vpop.f32.mrf.mxu0
    %v1489 = vadd.f32 %v1470, %v1488
    %v1490 = vpop.f32.mrf.mxu0
    %v1491 = vadd.f32 %v1472, %v1490
    %1492 = vdwg.mxu0
    %1493 = vmatpush.bf16.msra.mxu0 %v1258
    %1494 = vmatpush.bf16.msra.mxu0 %v1254
    %1495 = vmatpush.bf16.msra.mxu0 %v1250
    %1496 = vmatpush.bf16.msra.mxu0 %v1246
    %1497 = vmatpush.bf16.msra.mxu0 %v1242
    %1498 = vmatpush.bf16.msra.mxu0 %v1238
    %1499 = vmatpush.bf16.msra.mxu0 %v1234
    %1500 = vmatpush.bf16.msra.mxu0 %v1230
    %1501 = vmatmul.bf16.gmra.mxu0 %v1002
    %v1502 = vpop.f32.mrf.mxu0
    %v1503 = vadd.f32 0.0, %v1502
    %v1504 = vpop.f32.mrf.mxu0
    %v1505 = vadd.f32 0.0, %v1504
    %1506 = vmatmul.bf16.gmra.mxu0 %v1005
    %v1507 = vpop.f32.mrf.mxu0
    %v1508 = vadd.f32 0.0, %v1507
    %v1509 = vpop.f32.mrf.mxu0
    %v1510 = vadd.f32 0.0, %v1509
    %1511 = vdwg.mxu0
    %1512 = vmatpush.bf16.msra.mxu0 %v1290
    %1513 = vmatpush.bf16.msra.mxu0 %v1286
    %1514 = vmatpush.bf16.msra.mxu0 %v1282
    %1515 = vmatpush.bf16.msra.mxu0 %v1278
    %1516 = vmatpush.bf16.msra.mxu0 %v1274
    %1517 = vmatpush.bf16.msra.mxu0 %v1270
    %1518 = vmatpush.bf16.msra.mxu0 %v1266
    %1519 = vmatpush.bf16.msra.mxu0 %v1262
    %1520 = vmatmul.bf16.gmra.mxu0 %v1003
    %v1521 = vpop.f32.mrf.mxu0
    %v1522 = vadd.f32 %v1503, %v1521
    %v1523 = vpop.f32.mrf.mxu0
    %v1524 = vadd.f32 %v1505, %v1523
    %1525 = vmatmul.bf16.gmra.mxu0 %v1006
    %v1526 = vpop.f32.mrf.mxu0
    %v1527 = vadd.f32 %v1508, %v1526
    %v1528 = vpop.f32.mrf.mxu0
    %v1529 = vadd.f32 %v1510, %v1528
    %1530 = vdwg.mxu0
    %1531 = vmatpush.bf16.msra.mxu0 0
    %1532 = vmatpush.bf16.msra.mxu0 0
    %1533 = vmatpush.bf16.msra.mxu0 0
    %1534 = vmatpush.bf16.msra.mxu0 0
    %1535 = vmatpush.bf16.msra.mxu0 0
    %1536 = vmatpush.bf16.msra.mxu0 0
    %1537 = vmatpush.bf16.msra.mxu0 %v1298
    %1538 = vmatpush.bf16.msra.mxu0 %v1294
    %1539 = vmatmul.bf16.gmra.mxu0 %v1374
    %v1540 = vpop.f32.mrf.mxu0
    %v1541 = vadd.f32 %v1522, %v1540
    %v1542 = vpop.f32.mrf.mxu0
    %v1543 = vadd.f32 %v1524, %v1542
    %1544 = vmatmul.bf16.gmra.mxu0 %v1377
    %v1545 = vpop.f32.mrf.mxu0
    %v1546 = vadd.f32 %v1527, %v1545
    %v1547 = vpop.f32.mrf.mxu0
    %v1548 = vadd.f32 %v1529, %v1547
    %1549 = vdwg.mxu0
    %1550 = vmatpush.bf16.msra.mxu0 %v1259
    %1551 = vmatpush.bf16.msra.mxu0 %v1255
    %1552 = vmatpush.bf16.msra.mxu0 %v1251
    %1553 = vmatpush.bf16.msra.mxu0 %v1247
    %1554 = vmatpush.bf16.msra.mxu0 %v1243
    %1555 = vmatpush.bf16.msra.mxu0 %v1239
    %1556 = vmatpush.bf16.msra.mxu0 %v1235
    %1557 = vmatpush.bf16.msra.mxu0 %v1231
    %1558 = vmatmul.bf16.gmra.mxu0 %v1002
    %v1559 = vpop.f32.mrf.mxu0
    %v1560 = vadd.f32 0.0, %v1559
    %v1561 = vpop.f32.mrf.mxu0
    %v1562 = vadd.f32 0.0, %v1561
    %1563 = vmatmul.bf16.gmra.mxu0 %v1005
    %v1564 = vpop.f32.mrf.mxu0
    %v1565 = vadd.f32 0.0, %v1564
    %v1566 = vpop.f32.mrf.mxu0
    %v1567 = vadd.f32 0.0, %v1566
    %1568 = vdwg.mxu0
    %1569 = vmatpush.bf16.msra.mxu0 %v1291
    %1570 = vmatpush.bf16.msra.mxu0 %v1287
    %1571 = vmatpush.bf16.msra.mxu0 %v1283
    %1572 = vmatpush.bf16.msra.mxu0 %v1279
    %1573 = vmatpush.bf16.msra.mxu0 %v1275
    %1574 = vmatpush.bf16.msra.mxu0 %v1271
    %1575 = vmatpush.bf16.msra.mxu0 %v1267
    %1576 = vmatpush.bf16.msra.mxu0 %v1263
    %1577 = vmatmul.bf16.gmra.mxu0 %v1003
    %v1578 = vpop.f32.mrf.mxu0
    %v1579 = vadd.f32 %v1560, %v1578
    %v1580 = vpop.f32.mrf.mxu0
    %v1581 = vadd.f32 %v1562, %v1580
    %1582 = vmatmul.bf16.gmra.mxu0 %v1006
    %v1583 = vpop.f32.mrf.mxu0
    %v1584 = vadd.f32 %v1565, %v1583
    %v1585 = vpop.f32.mrf.mxu0
    %v1586 = vadd.f32 %v1567, %v1585
    %1587 = vdwg.mxu0
    %1588 = vmatpush.bf16.msra.mxu0 0
    %1589 = vmatpush.bf16.msra.mxu0 0
    %1590 = vmatpush.bf16.msra.mxu0 0
    %1591 = vmatpush.bf16.msra.mxu0 0
    %1592 = vmatpush.bf16.msra.mxu0 0
    %1593 = vmatpush.bf16.msra.mxu0 0
    %1594 = vmatpush.bf16.msra.mxu0 %v1299
    %1595 = vmatpush.bf16.msra.mxu0 %v1295
    %1596 = vmatmul.bf16.gmra.mxu0 %v1374
    %v1597 = vpop.f32.mrf.mxu0
    %v1598 = vadd.f32 %v1579, %v1597
    %v1599 = vpop.f32.mrf.mxu0
    %v1600 = vadd.f32 %v1581, %v1599
    %1601 = vmatmul.bf16.gmra.mxu0 %v1377
    %v1602 = vpop.f32.mrf.mxu0
    %v1603 = vadd.f32 %v1584, %v1602
    %v1604 = vpop.f32.mrf.mxu0
    %v1605 = vadd.f32 %v1586, %v1604
    %1606 = vdwg.mxu0
    %1608 = vset.pattern.permute.xlu0 0
    %1609 = vperm.xlu0 %1608, %v90
    %v1610 = vpop.permute.xlu0 %1609
    %1613 = vset.pattern.permute.xlu0 0
    %1614 = vperm.xlu0 %1613, %v91
    %v1615 = vpop.permute.xlu0 %1614
    %1618 = vset.pattern.permute.xlu0 0
    %1619 = vperm.xlu0 %1618, %v92
    %v1620 = vpop.permute.xlu0 %1619
    %1623 = vset.pattern.permute.xlu0 0
    %1624 = vperm.xlu0 %1623, %v93
    %v1625 = vpop.permute.xlu0 %1624
    %v1627 = vmul.f32 %v1427, %v1610
    %v1628 = vmul.f32 %v1484, %v1610
    %v1629 = vmul.f32 %v1541, %v1610
    %v1630 = vmul.f32 %v1598, %v1610
    %v1631 = vmul.f32 %v1429, %v1615
    %v1632 = vmul.f32 %v1486, %v1615
    %v1633 = vmul.f32 %v1543, %v1615
    %v1634 = vmul.f32 %v1600, %v1615
    %v1635 = vmul.f32 %v1432, %v1620
    %v1636 = vmul.f32 %v1489, %v1620
    %v1637 = vmul.f32 %v1546, %v1620
    %v1638 = vmul.f32 %v1603, %v1620
    %v1639 = vmul.f32 %v1434, %v1625
    %v1640 = vmul.f32 %v1491, %v1625
    %v1641 = vmul.f32 %v1548, %v1625
    %v1642 = vmul.f32 %v1605, %v1625
    %1644 = vset.pattern.permute.xlu0 0
    %1645 = vperm.xlu0 %1644, %v94
    %v1646 = vpop.permute.xlu0 %1645
    %1649 = vset.pattern.permute.xlu0 0
    %1650 = vperm.xlu0 %1649, %v95
    %v1651 = vpop.permute.xlu0 %1650
    %1654 = vset.pattern.permute.xlu0 0
    %1655 = vperm.xlu0 %1654, %v96
    %v1656 = vpop.permute.xlu0 %1655
    %1659 = vset.pattern.permute.xlu0 0
    %1660 = vperm.xlu0 %1659, %v97
    %v1661 = vpop.permute.xlu0 %1660
    %v1663 = vadd.f32 %v1627, %v1646
    %v1664 = vadd.f32 %v1628, %v1646
    %v1665 = vadd.f32 %v1629, %v1646
    %v1666 = vadd.f32 %v1630, %v1646
    %v1667 = vadd.f32 %v1631, %v1651
    %v1668 = vadd.f32 %v1632, %v1651
    %v1669 = vadd.f32 %v1633, %v1651
    %v1670 = vadd.f32 %v1634, %v1651
    %v1671 = vadd.f32 %v1635, %v1656
    %v1672 = vadd.f32 %v1636, %v1656
    %v1673 = vadd.f32 %v1637, %v1656
    %v1674 = vadd.f32 %v1638, %v1656
    %v1675 = vadd.f32 %v1639, %v1661
    %v1676 = vadd.f32 %v1640, %v1661
    %v1677 = vadd.f32 %v1641, %v1661
    %v1678 = vadd.f32 %v1642, %v1661
    %v1679 = vmax.f32 %v1663, 0.0
    %v1680 = vmax.f32 %v1664, 0.0
    %v1681 = vmax.f32 %v1665, 0.0
    %v1682 = vmax.f32 %v1666, 0.0
    %v1683 = vmax.f32 %v1667, 0.0
    %v1684 = vmax.f32 %v1668, 0.0
    %v1685 = vmax.f32 %v1669, 0.0
    %v1686 = vmax.f32 %v1670, 0.0
    %v1687 = vmax.f32 %v1671, 0.0
    %v1688 = vmax.f32 %v1672, 0.0
    %v1689 = vmax.f32 %v1673, 0.0
    %v1690 = vmax.f32 %v1674, 0.0
    %v1691 = vmax.f32 %v1675, 0.0
    %v1692 = vmax.f32 %v1676, 0.0
    %v1693 = vmax.f32 %v1677, 0.0
    %v1694 = vmax.f32 %v1678, 0.0
    %1695 = vrot.lane.b32.xlu0 %v1679, 17
    %v1696 = vpop.permute.xlu0 %1695
    %1697 = vrot.lane.b32.xlu0 %v1683, 17
    %v1698 = vpop.permute.xlu0 %1697
    %1699 = vrot.lane.b32.xlu0 %v1687, 17
    %v1700 = vpop.permute.xlu0 %1699
    %1701 = vrot.lane.b32.xlu0 %v1691, 17
    %v1702 = vpop.permute.xlu0 %1701
    %1703 = vrot.lane.b32.xlu0 %v1680, 17
    %v1704 = vpop.permute.xlu0 %1703
    %1705 = vrot.lane.b32.xlu0 %v1684, 17
    %v1706 = vpop.permute.xlu0 %1705
    %1707 = vrot.lane.b32.xlu0 %v1688, 17
    %v1708 = vpop.permute.xlu0 %1707
    %1709 = vrot.lane.b32.xlu0 %v1692, 17
    %v1710 = vpop.permute.xlu0 %1709
    %1711 = vrot.lane.b32.xlu0 %v1681, 17
    %v1712 = vpop.permute.xlu0 %1711
    %1713 = vrot.lane.b32.xlu0 %v1685, 17
    %v1714 = vpop.permute.xlu0 %1713
    %1715 = vrot.lane.b32.xlu0 %v1689, 17
    %v1716 = vpop.permute.xlu0 %1715
    %1717 = vrot.lane.b32.xlu0 %v1693, 17
    %v1718 = vpop.permute.xlu0 %1717
    %1719 = vrot.lane.b32.xlu0 %v1682, 17
    %v1720 = vpop.permute.xlu0 %1719
    %1721 = vrot.lane.b32.xlu0 %v1686, 17
    %v1722 = vpop.permute.xlu0 %1721
    %1723 = vrot.lane.b32.xlu0 %v1690, 17
    %v1724 = vpop.permute.xlu0 %1723
    %1725 = vrot.lane.b32.xlu0 %v1694, 17
    %v1726 = vpop.permute.xlu0 %1725
    %v1727 = vsel %vm206, %v1712, %v1720
    %v1728 = vsel %vm206, %v1714, %v1722
    %v1729 = vsel %vm206, %v1716, %v1724
    %v1730 = vsel %vm206, %v1718, %v1726
    %v1731 = vsel %vm206, %v1704, %v1712
    %v1732 = vsel %vm206, %v1706, %v1714
    %v1733 = vsel %vm206, %v1708, %v1716
    %v1734 = vsel %vm206, %v1710, %v1718
    %v1735 = vsel %vm206, %v1696, %v1704
    %v1736 = vsel %vm206, %v1698, %v1706
    %v1737 = vsel %vm206, %v1700, %v1708
    %v1738 = vsel %vm206, %v1702, %v1710
    %v1739 = vsel %vm206, %v1720, %v1696
    %v1740 = vsel %vm206, %v1722, %v1698
    %v1741 = vsel %vm206, %v1724, %v1700
    %v1742 = vsel %vm206, %v1726, %v1702
    %v1744 = vperm.slane %v141, 0
    %v1745 = vperm.slane %v141, 1
    %v1746 = vperm.slane %v141, 2
    %v1747 = vperm.slane %v141, 3
    %v1752 = vmul.f32 %v1739, %v1744
    %v1753 = vmul.f32 %v1735, %v1745
    %v1754 = vmul.f32 %v1731, %v1746
    %v1755 = vmul.f32 %v1727, %v1747
    %v1756 = vmul.f32 %v1740, %v1744
    %v1757 = vmul.f32 %v1736, %v1745
    %v1758 = vmul.f32 %v1732, %v1746
    %v1759 = vmul.f32 %v1728, %v1747
    %v1760 = vmul.f32 %v1741, %v1744
    %v1761 = vmul.f32 %v1737, %v1745
    %v1762 = vmul.f32 %v1733, %v1746
    %v1763 = vmul.f32 %v1729, %v1747
    %v1764 = vmul.f32 %v1742, %v1744
    %v1765 = vmul.f32 %v1738, %v1745
    %v1766 = vmul.f32 %v1734, %v1746
    %v1767 = vmul.f32 %v1730, %v1747
    %v1768 = vpack.c.bf16 %v1753, %v1752
    %v1769 = vpack.c.bf16 %v1755, %v1754
    %v1770 = vpack.c.bf16 %v1757, %v1756
    %v1771 = vpack.c.bf16 %v1759, %v1758
    %v1772 = vpack.c.bf16 %v1761, %v1760
    %v1773 = vpack.c.bf16 %v1763, %v1762
    %v1774 = vpack.c.bf16 %v1765, %v1764
    %v1775 = vpack.c.bf16 %v1767, %v1766
    %1776 = vst [vmem:[#allocation3] sm:$0xff] %v1768
    %1777 = vst [vmem:[#allocation3 + $0x8] sm:$0xff] %v1769
    %1778 = vst [vmem:[#allocation3 + $0x10] sm:$0xff] %v1770
    %1779 = vst [vmem:[#allocation3 + $0x18] sm:$0xff] %v1771
    %1780 = vst [vmem:[#allocation3 + $0x20] sm:$0xff] %v1772
    %1781 = vst [vmem:[#allocation3 + $0x28] sm:$0xff] %v1773
    %1782 = vst [vmem:[#allocation3 + $0x30] sm:$0xff] %v1774
    %1783 = vst [vmem:[#allocation3 + $0x38] sm:$0xff] %v1775
    %1784 = vrot.lane.b32.xlu0 %v1679, 16
    %v1785 = vpop.permute.xlu0 %1784
    %1786 = vrot.lane.b32.xlu0 %v1683, 16
    %v1787 = vpop.permute.xlu0 %1786
    %1788 = vrot.lane.b32.xlu0 %v1687, 16
    %v1789 = vpop.permute.xlu0 %1788
    %1790 = vrot.lane.b32.xlu0 %v1691, 16
    %v1791 = vpop.permute.xlu0 %1790
    %1792 = vrot.lane.b32.xlu0 %v1680, 16
    %v1793 = vpop.permute.xlu0 %1792
    %1794 = vrot.lane.b32.xlu0 %v1684, 16
    %v1795 = vpop.permute.xlu0 %1794
    %1796 = vrot.lane.b32.xlu0 %v1688, 16
    %v1797 = vpop.permute.xlu0 %1796
    %1798 = vrot.lane.b32.xlu0 %v1692, 16
    %v1799 = vpop.permute.xlu0 %1798
    %1800 = vrot.lane.b32.xlu0 %v1681, 16
    %v1801 = vpop.permute.xlu0 %1800
    %1802 = vrot.lane.b32.xlu0 %v1685, 16
    %v1803 = vpop.permute.xlu0 %1802
    %1804 = vrot.lane.b32.xlu0 %v1689, 16
    %v1805 = vpop.permute.xlu0 %1804
    %1806 = vrot.lane.b32.xlu0 %v1693, 16
    %v1807 = vpop.permute.xlu0 %1806
    %1808 = vrot.lane.b32.xlu0 %v1682, 16
    %v1809 = vpop.permute.xlu0 %1808
    %1810 = vrot.lane.b32.xlu0 %v1686, 16
    %v1811 = vpop.permute.xlu0 %1810
    %1812 = vrot.lane.b32.xlu0 %v1690, 16
    %v1813 = vpop.permute.xlu0 %1812
    %1814 = vrot.lane.b32.xlu0 %v1694, 16
    %v1815 = vpop.permute.xlu0 %1814
    %v1816 = vsel %vm296, %v1801, %v1809
    %v1817 = vsel %vm296, %v1803, %v1811
    %v1818 = vsel %vm296, %v1805, %v1813
    %v1819 = vsel %vm296, %v1807, %v1815
    %v1820 = vsel %vm296, %v1793, %v1801
    %v1821 = vsel %vm296, %v1795, %v1803
    %v1822 = vsel %vm296, %v1797, %v1805
    %v1823 = vsel %vm296, %v1799, %v1807
    %v1824 = vsel %vm296, %v1785, %v1793
    %v1825 = vsel %vm296, %v1787, %v1795
    %v1826 = vsel %vm296, %v1789, %v1797
    %v1827 = vsel %vm296, %v1791, %v1799
    %v1828 = vsel %vm296, %v1809, %v1785
    %v1829 = vsel %vm296, %v1811, %v1787
    %v1830 = vsel %vm296, %v1813, %v1789
    %v1831 = vsel %vm296, %v1815, %v1791
    %v1833 = vperm.slane %v143, 0
    %v1834 = vperm.slane %v143, 1
    %v1835 = vperm.slane %v143, 2
    %v1836 = vperm.slane %v143, 3
    %v1841 = vmul.f32 %v1828, %v1833
    %v1842 = vmul.f32 %v1824, %v1834
    %v1843 = vmul.f32 %v1820, %v1835
    %v1844 = vmul.f32 %v1816, %v1836
    %v1845 = vmul.f32 %v1829, %v1833
    %v1846 = vmul.f32 %v1825, %v1834
    %v1847 = vmul.f32 %v1821, %v1835
    %v1848 = vmul.f32 %v1817, %v1836
    %v1849 = vmul.f32 %v1830, %v1833
    %v1850 = vmul.f32 %v1826, %v1834
    %v1851 = vmul.f32 %v1822, %v1835
    %v1852 = vmul.f32 %v1818, %v1836
    %v1853 = vmul.f32 %v1831, %v1833
    %v1854 = vmul.f32 %v1827, %v1834
    %v1855 = vmul.f32 %v1823, %v1835
    %v1856 = vmul.f32 %v1819, %v1836
    %v1857 = vpack.c.bf16 %v1842, %v1841
    %v1858 = vpack.c.bf16 %v1844, %v1843
    %v1859 = vpack.c.bf16 %v1846, %v1845
    %v1860 = vpack.c.bf16 %v1848, %v1847
    %v1861 = vpack.c.bf16 %v1850, %v1849
    %v1862 = vpack.c.bf16 %v1852, %v1851
    %v1863 = vpack.c.bf16 %v1854, %v1853
    %v1864 = vpack.c.bf16 %v1856, %v1855
    %1865 = vst [vmem:[#allocation3 + $0x40] sm:$0xff] %v1857
    %1866 = vst [vmem:[#allocation3 + $0x48] sm:$0xff] %v1858
    %1867 = vst [vmem:[#allocation3 + $0x50] sm:$0xff] %v1859
    %1868 = vst [vmem:[#allocation3 + $0x58] sm:$0xff] %v1860
    %1869 = vst [vmem:[#allocation3 + $0x60] sm:$0xff] %v1861
    %1870 = vst [vmem:[#allocation3 + $0x68] sm:$0xff] %v1862
    %1871 = vst [vmem:[#allocation3 + $0x70] sm:$0xff] %v1863
    %1872 = vst [vmem:[#allocation3 + $0x78] sm:$0xff] %v1864
    %1873 = vrot.lane.b32.xlu0 %v1679, 15
    %v1874 = vpop.permute.xlu0 %1873
    %1875 = vrot.lane.b32.xlu0 %v1683, 15
    %v1876 = vpop.permute.xlu0 %1875
    %1877 = vrot.lane.b32.xlu0 %v1687, 15
    %v1878 = vpop.permute.xlu0 %1877
    %1879 = vrot.lane.b32.xlu0 %v1691, 15
    %v1880 = vpop.permute.xlu0 %1879
    %1881 = vrot.lane.b32.xlu0 %v1680, 15
    %v1882 = vpop.permute.xlu0 %1881
    %1883 = vrot.lane.b32.xlu0 %v1684, 15
    %v1884 = vpop.permute.xlu0 %1883
    %1885 = vrot.lane.b32.xlu0 %v1688, 15
    %v1886 = vpop.permute.xlu0 %1885
    %1887 = vrot.lane.b32.xlu0 %v1692, 15
    %v1888 = vpop.permute.xlu0 %1887
    %1889 = vrot.lane.b32.xlu0 %v1681, 15
    %v1890 = vpop.permute.xlu0 %1889
    %1891 = vrot.lane.b32.xlu0 %v1685, 15
    %v1892 = vpop.permute.xlu0 %1891
    %1893 = vrot.lane.b32.xlu0 %v1689, 15
    %v1894 = vpop.permute.xlu0 %1893
    %1895 = vrot.lane.b32.xlu0 %v1693, 15
    %v1896 = vpop.permute.xlu0 %1895
    %1897 = vrot.lane.b32.xlu0 %v1682, 15
    %v1898 = vpop.permute.xlu0 %1897
    %1899 = vrot.lane.b32.xlu0 %v1686, 15
    %v1900 = vpop.permute.xlu0 %1899
    %1901 = vrot.lane.b32.xlu0 %v1690, 15
    %v1902 = vpop.permute.xlu0 %1901
    %1903 = vrot.lane.b32.xlu0 %v1694, 15
    %v1904 = vpop.permute.xlu0 %1903
    %v1905 = vsel %vm386, %v1890, %v1898
    %v1906 = vsel %vm386, %v1892, %v1900
    %v1907 = vsel %vm386, %v1894, %v1902
    %v1908 = vsel %vm386, %v1896, %v1904
    %v1909 = vsel %vm386, %v1882, %v1890
    %v1910 = vsel %vm386, %v1884, %v1892
    %v1911 = vsel %vm386, %v1886, %v1894
    %v1912 = vsel %vm386, %v1888, %v1896
    %v1913 = vsel %vm386, %v1874, %v1882
    %v1914 = vsel %vm386, %v1876, %v1884
    %v1915 = vsel %vm386, %v1878, %v1886
    %v1916 = vsel %vm386, %v1880, %v1888
    %v1917 = vsel %vm386, %v1898, %v1874
    %v1918 = vsel %vm386, %v1900, %v1876
    %v1919 = vsel %vm386, %v1902, %v1878
    %v1920 = vsel %vm386, %v1904, %v1880
    %v1922 = vperm.slane %v145, 0
    %v1923 = vperm.slane %v145, 1
    %v1924 = vperm.slane %v145, 2
    %v1925 = vperm.slane %v145, 3
    %v1930 = vmul.f32 %v1917, %v1922
    %v1931 = vmul.f32 %v1913, %v1923
    %v1932 = vmul.f32 %v1909, %v1924
    %v1933 = vmul.f32 %v1905, %v1925
    %v1934 = vmul.f32 %v1918, %v1922
    %v1935 = vmul.f32 %v1914, %v1923
    %v1936 = vmul.f32 %v1910, %v1924
    %v1937 = vmul.f32 %v1906, %v1925
    %v1938 = vmul.f32 %v1919, %v1922
    %v1939 = vmul.f32 %v1915, %v1923
    %v1940 = vmul.f32 %v1911, %v1924
    %v1941 = vmul.f32 %v1907, %v1925
    %v1942 = vmul.f32 %v1920, %v1922
    %v1943 = vmul.f32 %v1916, %v1923
    %v1944 = vmul.f32 %v1912, %v1924
    %v1945 = vmul.f32 %v1908, %v1925
    %v1946 = vpack.c.bf16 %v1931, %v1930
    %v1947 = vpack.c.bf16 %v1933, %v1932
    %v1948 = vpack.c.bf16 %v1935, %v1934
    %v1949 = vpack.c.bf16 %v1937, %v1936
    %v1950 = vpack.c.bf16 %v1939, %v1938
    %v1951 = vpack.c.bf16 %v1941, %v1940
    %v1952 = vpack.c.bf16 %v1943, %v1942
    %v1953 = vpack.c.bf16 %v1945, %v1944
    %1954 = vst [vmem:[#allocation3 + $0x80] sm:$0xff] %v1946
    %1955 = vst [vmem:[#allocation3 + $0x88] sm:$0xff] %v1947
    %1956 = vst [vmem:[#allocation3 + $0x90] sm:$0xff] %v1948
    %1957 = vst [vmem:[#allocation3 + $0x98] sm:$0xff] %v1949
    %1958 = vst [vmem:[#allocation3 + $0xa0] sm:$0xff] %v1950
    %1959 = vst [vmem:[#allocation3 + $0xa8] sm:$0xff] %v1951
    %1960 = vst [vmem:[#allocation3 + $0xb0] sm:$0xff] %v1952
    %1961 = vst [vmem:[#allocation3 + $0xb8] sm:$0xff] %v1953
    %1962 = vrot.lane.b32.xlu0 %v1679, 1
    %v1963 = vpop.permute.xlu0 %1962
    %1964 = vrot.lane.b32.xlu0 %v1683, 1
    %v1965 = vpop.permute.xlu0 %1964
    %1966 = vrot.lane.b32.xlu0 %v1687, 1
    %v1967 = vpop.permute.xlu0 %1966
    %1968 = vrot.lane.b32.xlu0 %v1691, 1
    %v1969 = vpop.permute.xlu0 %1968
    %1970 = vrot.lane.b32.xlu0 %v1680, 1
    %v1971 = vpop.permute.xlu0 %1970
    %1972 = vrot.lane.b32.xlu0 %v1684, 1
    %v1973 = vpop.permute.xlu0 %1972
    %1974 = vrot.lane.b32.xlu0 %v1688, 1
    %v1975 = vpop.permute.xlu0 %1974
    %1976 = vrot.lane.b32.xlu0 %v1692, 1
    %v1977 = vpop.permute.xlu0 %1976
    %1978 = vrot.lane.b32.xlu0 %v1681, 1
    %v1979 = vpop.permute.xlu0 %1978
    %1980 = vrot.lane.b32.xlu0 %v1685, 1
    %v1981 = vpop.permute.xlu0 %1980
    %1982 = vrot.lane.b32.xlu0 %v1689, 1
    %v1983 = vpop.permute.xlu0 %1982
    %1984 = vrot.lane.b32.xlu0 %v1693, 1
    %v1985 = vpop.permute.xlu0 %1984
    %1986 = vrot.lane.b32.xlu0 %v1682, 1
    %v1987 = vpop.permute.xlu0 %1986
    %1988 = vrot.lane.b32.xlu0 %v1686, 1
    %v1989 = vpop.permute.xlu0 %1988
    %1990 = vrot.lane.b32.xlu0 %v1690, 1
    %v1991 = vpop.permute.xlu0 %1990
    %1992 = vrot.lane.b32.xlu0 %v1694, 1
    %v1993 = vpop.permute.xlu0 %1992
    %v1994 = vsel %vm476, %v1979, %v1987
    %v1995 = vsel %vm476, %v1981, %v1989
    %v1996 = vsel %vm476, %v1983, %v1991
    %v1997 = vsel %vm476, %v1985, %v1993
    %v1998 = vsel %vm476, %v1971, %v1979
    %v1999 = vsel %vm476, %v1973, %v1981
    %v2000 = vsel %vm476, %v1975, %v1983
    %v2001 = vsel %vm476, %v1977, %v1985
    %v2002 = vsel %vm476, %v1963, %v1971
    %v2003 = vsel %vm476, %v1965, %v1973
    %v2004 = vsel %vm476, %v1967, %v1975
    %v2005 = vsel %vm476, %v1969, %v1977
    %v2006 = vsel %vm476, %v1987, %v1963
    %v2007 = vsel %vm476, %v1989, %v1965
    %v2008 = vsel %vm476, %v1991, %v1967
    %v2009 = vsel %vm476, %v1993, %v1969
    %v2011 = vperm.slane %v147, 0
    %v2012 = vperm.slane %v147, 1
    %v2013 = vperm.slane %v147, 2
    %v2014 = vperm.slane %v147, 3
    %v2019 = vmul.f32 %v2006, %v2011
    %v2020 = vmul.f32 %v2002, %v2012
    %v2021 = vmul.f32 %v1998, %v2013
    %v2022 = vmul.f32 %v1994, %v2014
    %v2023 = vmul.f32 %v2007, %v2011
    %v2024 = vmul.f32 %v2003, %v2012
    %v2025 = vmul.f32 %v1999, %v2013
    %v2026 = vmul.f32 %v1995, %v2014
    %v2027 = vmul.f32 %v2008, %v2011
    %v2028 = vmul.f32 %v2004, %v2012
    %v2029 = vmul.f32 %v2000, %v2013
    %v2030 = vmul.f32 %v1996, %v2014
    %v2031 = vmul.f32 %v2009, %v2011
    %v2032 = vmul.f32 %v2005, %v2012
    %v2033 = vmul.f32 %v2001, %v2013
    %v2034 = vmul.f32 %v1997, %v2014
    %v2035 = vpack.c.bf16 %v2020, %v2019
    %v2036 = vpack.c.bf16 %v2022, %v2021
    %v2037 = vpack.c.bf16 %v2024, %v2023
    %v2038 = vpack.c.bf16 %v2026, %v2025
    %v2039 = vpack.c.bf16 %v2028, %v2027
    %v2040 = vpack.c.bf16 %v2030, %v2029
    %v2041 = vpack.c.bf16 %v2032, %v2031
    %v2042 = vpack.c.bf16 %v2034, %v2033
    %2043 = vst [vmem:[#allocation3 + $0xc0] sm:$0xff] %v2035
    %2044 = vst [vmem:[#allocation3 + $0xc8] sm:$0xff] %v2036
    %2045 = vst [vmem:[#allocation3 + $0xd0] sm:$0xff] %v2037
    %2046 = vst [vmem:[#allocation3 + $0xd8] sm:$0xff] %v2038
    %2047 = vst [vmem:[#allocation3 + $0xe0] sm:$0xff] %v2039
    %2048 = vst [vmem:[#allocation3 + $0xe8] sm:$0xff] %v2040
    %2049 = vst [vmem:[#allocation3 + $0xf0] sm:$0xff] %v2041
    %2050 = vst [vmem:[#allocation3 + $0xf8] sm:$0xff] %v2042
    %v2051 = vpack.c.bf16 %v1680, %v1679
    %v2052 = vpack.c.bf16 %v1682, %v1681
    %v2053 = vpack.c.bf16 %v1684, %v1683
    %v2054 = vpack.c.bf16 %v1686, %v1685
    %v2055 = vpack.c.bf16 %v1688, %v1687
    %v2056 = vpack.c.bf16 %v1690, %v1689
    %v2057 = vpack.c.bf16 %v1692, %v1691
    %v2058 = vpack.c.bf16 %v1694, %v1693
    %2059 = vst [vmem:[#allocation3 + $0x100] sm:$0xff] %v2051
    %2060 = vst [vmem:[#allocation3 + $0x108] sm:$0xff] %v2052
    %2061 = vst [vmem:[#allocation3 + $0x110] sm:$0xff] %v2053
    %2062 = vst [vmem:[#allocation3 + $0x118] sm:$0xff] %v2054
    %2063 = vst [vmem:[#allocation3 + $0x120] sm:$0xff] %v2055
    %2064 = vst [vmem:[#allocation3 + $0x128] sm:$0xff] %v2056
    %2065 = vst [vmem:[#allocation3 + $0x130] sm:$0xff] %v2057
    %2066 = vst [vmem:[#allocation3 + $0x138] sm:$0xff] %v2058
    %2067 = vrot.lane.b32.xlu0 %v1679, 127
    %v2068 = vpop.permute.xlu0 %2067
    %2069 = vrot.lane.b32.xlu0 %v1683, 127
    %v2070 = vpop.permute.xlu0 %2069
    %2071 = vrot.lane.b32.xlu0 %v1687, 127
    %v2072 = vpop.permute.xlu0 %2071
    %2073 = vrot.lane.b32.xlu0 %v1691, 127
    %v2074 = vpop.permute.xlu0 %2073
    %2075 = vrot.lane.b32.xlu0 %v1680, 127
    %v2076 = vpop.permute.xlu0 %2075
    %2077 = vrot.lane.b32.xlu0 %v1684, 127
    %v2078 = vpop.permute.xlu0 %2077
    %2079 = vrot.lane.b32.xlu0 %v1688, 127
    %v2080 = vpop.permute.xlu0 %2079
    %2081 = vrot.lane.b32.xlu0 %v1692, 127
    %v2082 = vpop.permute.xlu0 %2081
    %2083 = vrot.lane.b32.xlu0 %v1681, 127
    %v2084 = vpop.permute.xlu0 %2083
    %2085 = vrot.lane.b32.xlu0 %v1685, 127
    %v2086 = vpop.permute.xlu0 %2085
    %2087 = vrot.lane.b32.xlu0 %v1689, 127
    %v2088 = vpop.permute.xlu0 %2087
    %2089 = vrot.lane.b32.xlu0 %v1693, 127
    %v2090 = vpop.permute.xlu0 %2089
    %2091 = vrot.lane.b32.xlu0 %v1682, 127
    %v2092 = vpop.permute.xlu0 %2091
    %2093 = vrot.lane.b32.xlu0 %v1686, 127
    %v2094 = vpop.permute.xlu0 %2093
    %2095 = vrot.lane.b32.xlu0 %v1690, 127
    %v2096 = vpop.permute.xlu0 %2095
    %2097 = vrot.lane.b32.xlu0 %v1694, 127
    %v2098 = vpop.permute.xlu0 %2097
    %v2099 = vsel %vm582, %v2084, %v2092
    %v2100 = vsel %vm582, %v2086, %v2094
    %v2101 = vsel %vm582, %v2088, %v2096
    %v2102 = vsel %vm582, %v2090, %v2098
    %v2103 = vsel %vm582, %v2076, %v2084
    %v2104 = vsel %vm582, %v2078, %v2086
    %v2105 = vsel %vm582, %v2080, %v2088
    %v2106 = vsel %vm582, %v2082, %v2090
    %v2107 = vsel %vm582, %v2068, %v2076
    %v2108 = vsel %vm582, %v2070, %v2078
    %v2109 = vsel %vm582, %v2072, %v2080
    %v2110 = vsel %vm582, %v2074, %v2082
    %v2111 = vsel %vm582, %v2092, %v2068
    %v2112 = vsel %vm582, %v2094, %v2070
    %v2113 = vsel %vm582, %v2096, %v2072
    %v2114 = vsel %vm582, %v2098, %v2074
    %v2116 = vperm.slane %v149, 0
    %v2117 = vperm.slane %v149, 1
    %v2118 = vperm.slane %v149, 2
    %v2119 = vperm.slane %v149, 3
    %v2124 = vmul.f32 %v2107, %v2116
    %v2125 = vmul.f32 %v2103, %v2117
    %v2126 = vmul.f32 %v2099, %v2118
    %v2127 = vmul.f32 %v2111, %v2119
    %v2128 = vmul.f32 %v2108, %v2116
    %v2129 = vmul.f32 %v2104, %v2117
    %v2130 = vmul.f32 %v2100, %v2118
    %v2131 = vmul.f32 %v2112, %v2119
    %v2132 = vmul.f32 %v2109, %v2116
    %v2133 = vmul.f32 %v2105, %v2117
    %v2134 = vmul.f32 %v2101, %v2118
    %v2135 = vmul.f32 %v2113, %v2119
    %v2136 = vmul.f32 %v2110, %v2116
    %v2137 = vmul.f32 %v2106, %v2117
    %v2138 = vmul.f32 %v2102, %v2118
    %v2139 = vmul.f32 %v2114, %v2119
    %v2140 = vpack.c.bf16 %v2125, %v2124
    %v2141 = vpack.c.bf16 %v2127, %v2126
    %v2142 = vpack.c.bf16 %v2129, %v2128
    %v2143 = vpack.c.bf16 %v2131, %v2130
    %v2144 = vpack.c.bf16 %v2133, %v2132
    %v2145 = vpack.c.bf16 %v2135, %v2134
    %v2146 = vpack.c.bf16 %v2137, %v2136
    %v2147 = vpack.c.bf16 %v2139, %v2138
    %2148 = vst [vmem:[#allocation3 + $0x140] sm:$0xff] %v2140
    %2149 = vst [vmem:[#allocation3 + $0x148] sm:$0xff] %v2141
    %2150 = vst [vmem:[#allocation3 + $0x150] sm:$0xff] %v2142
    %2151 = vst [vmem:[#allocation3 + $0x158] sm:$0xff] %v2143
    %2152 = vst [vmem:[#allocation3 + $0x160] sm:$0xff] %v2144
    %2153 = vst [vmem:[#allocation3 + $0x168] sm:$0xff] %v2145
    %2154 = vst [vmem:[#allocation3 + $0x170] sm:$0xff] %v2146
    %2155 = vst [vmem:[#allocation3 + $0x178] sm:$0xff] %v2147
    %2156 = vrot.lane.b32.xlu0 %v1679, 113
    %v2157 = vpop.permute.xlu0 %2156
    %2158 = vrot.lane.b32.xlu0 %v1683, 113
    %v2159 = vpop.permute.xlu0 %2158
    %2160 = vrot.lane.b32.xlu0 %v1687, 113
    %v2161 = vpop.permute.xlu0 %2160
    %2162 = vrot.lane.b32.xlu0 %v1691, 113
    %v2163 = vpop.permute.xlu0 %2162
    %2164 = vrot.lane.b32.xlu0 %v1680, 113
    %v2165 = vpop.permute.xlu0 %2164
    %2166 = vrot.lane.b32.xlu0 %v1684, 113
    %v2167 = vpop.permute.xlu0 %2166
    %2168 = vrot.lane.b32.xlu0 %v1688, 113
    %v2169 = vpop.permute.xlu0 %2168
    %2170 = vrot.lane.b32.xlu0 %v1692, 113
    %v2171 = vpop.permute.xlu0 %2170
    %2172 = vrot.lane.b32.xlu0 %v1681, 113
    %v2173 = vpop.permute.xlu0 %2172
    %2174 = vrot.lane.b32.xlu0 %v1685, 113
    %v2175 = vpop.permute.xlu0 %2174
    %2176 = vrot.lane.b32.xlu0 %v1689, 113
    %v2177 = vpop.permute.xlu0 %2176
    %2178 = vrot.lane.b32.xlu0 %v1693, 113
    %v2179 = vpop.permute.xlu0 %2178
    %2180 = vrot.lane.b32.xlu0 %v1682, 113
    %v2181 = vpop.permute.xlu0 %2180
    %2182 = vrot.lane.b32.xlu0 %v1686, 113
    %v2183 = vpop.permute.xlu0 %2182
    %2184 = vrot.lane.b32.xlu0 %v1690, 113
    %v2185 = vpop.permute.xlu0 %2184
    %2186 = vrot.lane.b32.xlu0 %v1694, 113
    %v2187 = vpop.permute.xlu0 %2186
    %v2188 = vsel %vm672, %v2173, %v2181
    %v2189 = vsel %vm672, %v2175, %v2183
    %v2190 = vsel %vm672, %v2177, %v2185
    %v2191 = vsel %vm672, %v2179, %v2187
    %v2192 = vsel %vm672, %v2165, %v2173
    %v2193 = vsel %vm672, %v2167, %v2175
    %v2194 = vsel %vm672, %v2169, %v2177
    %v2195 = vsel %vm672, %v2171, %v2179
    %v2196 = vsel %vm672, %v2157, %v2165
    %v2197 = vsel %vm672, %v2159, %v2167
    %v2198 = vsel %vm672, %v2161, %v2169
    %v2199 = vsel %vm672, %v2163, %v2171
    %v2200 = vsel %vm672, %v2181, %v2157
    %v2201 = vsel %vm672, %v2183, %v2159
    %v2202 = vsel %vm672, %v2185, %v2161
    %v2203 = vsel %vm672, %v2187, %v2163
    %v2205 = vperm.slane %v151, 0
    %v2206 = vperm.slane %v151, 1
    %v2207 = vperm.slane %v151, 2
    %v2208 = vperm.slane %v151, 3
    %v2213 = vmul.f32 %v2196, %v2205
    %v2214 = vmul.f32 %v2192, %v2206
    %v2215 = vmul.f32 %v2188, %v2207
    %v2216 = vmul.f32 %v2200, %v2208
    %v2217 = vmul.f32 %v2197, %v2205
    %v2218 = vmul.f32 %v2193, %v2206
    %v2219 = vmul.f32 %v2189, %v2207
    %v2220 = vmul.f32 %v2201, %v2208
    %v2221 = vmul.f32 %v2198, %v2205
    %v2222 = vmul.f32 %v2194, %v2206
    %v2223 = vmul.f32 %v2190, %v2207
    %v2224 = vmul.f32 %v2202, %v2208
    %v2225 = vmul.f32 %v2199, %v2205
    %v2226 = vmul.f32 %v2195, %v2206
    %v2227 = vmul.f32 %v2191, %v2207
    %v2228 = vmul.f32 %v2203, %v2208
    %v2229 = vpack.c.bf16 %v2214, %v2213
    %v2230 = vpack.c.bf16 %v2216, %v2215
    %v2231 = vpack.c.bf16 %v2218, %v2217
    %v2232 = vpack.c.bf16 %v2220, %v2219
    %v2233 = vpack.c.bf16 %v2222, %v2221
    %v2234 = vpack.c.bf16 %v2224, %v2223
    %v2235 = vpack.c.bf16 %v2226, %v2225
    %v2236 = vpack.c.bf16 %v2228, %v2227
    %2237 = vst [vmem:[#allocation3 + $0x180] sm:$0xff] %v2229
    %2238 = vst [vmem:[#allocation3 + $0x188] sm:$0xff] %v2230
    %2239 = vst [vmem:[#allocation3 + $0x190] sm:$0xff] %v2231
    %2240 = vst [vmem:[#allocation3 + $0x198] sm:$0xff] %v2232
    %2241 = vst [vmem:[#allocation3 + $0x1a0] sm:$0xff] %v2233
    %2242 = vst [vmem:[#allocation3 + $0x1a8] sm:$0xff] %v2234
    %2243 = vst [vmem:[#allocation3 + $0x1b0] sm:$0xff] %v2235
    %2244 = vst [vmem:[#allocation3 + $0x1b8] sm:$0xff] %v2236
    %2245 = vrot.lane.b32.xlu0 %v1679, 112
    %v2246 = vpop.permute.xlu0 %2245
    %2247 = vrot.lane.b32.xlu0 %v1683, 112
    %v2248 = vpop.permute.xlu0 %2247
    %2249 = vrot.lane.b32.xlu0 %v1687, 112
    %v2250 = vpop.permute.xlu0 %2249
    %2251 = vrot.lane.b32.xlu0 %v1691, 112
    %v2252 = vpop.permute.xlu0 %2251
    %2253 = vrot.lane.b32.xlu0 %v1680, 112
    %v2254 = vpop.permute.xlu0 %2253
    %2255 = vrot.lane.b32.xlu0 %v1684, 112
    %v2256 = vpop.permute.xlu0 %2255
    %2257 = vrot.lane.b32.xlu0 %v1688, 112
    %v2258 = vpop.permute.xlu0 %2257
    %2259 = vrot.lane.b32.xlu0 %v1692, 112
    %v2260 = vpop.permute.xlu0 %2259
    %2261 = vrot.lane.b32.xlu0 %v1681, 112
    %v2262 = vpop.permute.xlu0 %2261
    %2263 = vrot.lane.b32.xlu0 %v1685, 112
    %v2264 = vpop.permute.xlu0 %2263
    %2265 = vrot.lane.b32.xlu0 %v1689, 112
    %v2266 = vpop.permute.xlu0 %2265
    %2267 = vrot.lane.b32.xlu0 %v1693, 112
    %v2268 = vpop.permute.xlu0 %2267
    %2269 = vrot.lane.b32.xlu0 %v1682, 112
    %v2270 = vpop.permute.xlu0 %2269
    %2271 = vrot.lane.b32.xlu0 %v1686, 112
    %v2272 = vpop.permute.xlu0 %2271
    %2273 = vrot.lane.b32.xlu0 %v1690, 112
    %v2274 = vpop.permute.xlu0 %2273
    %2275 = vrot.lane.b32.xlu0 %v1694, 112
    %v2276 = vpop.permute.xlu0 %2275
    %v2277 = vsel %vm762, %v2262, %v2270
    %v2278 = vsel %vm762, %v2264, %v2272
    %v2279 = vsel %vm762, %v2266, %v2274
    %v2280 = vsel %vm762, %v2268, %v2276
    %v2281 = vsel %vm762, %v2254, %v2262
    %v2282 = vsel %vm762, %v2256, %v2264
    %v2283 = vsel %vm762, %v2258, %v2266
    %v2284 = vsel %vm762, %v2260, %v2268
    %v2285 = vsel %vm762, %v2246, %v2254
    %v2286 = vsel %vm762, %v2248, %v2256
    %v2287 = vsel %vm762, %v2250, %v2258
    %v2288 = vsel %vm762, %v2252, %v2260
    %v2289 = vsel %vm762, %v2270, %v2246
    %v2290 = vsel %vm762, %v2272, %v2248
    %v2291 = vsel %vm762, %v2274, %v2250
    %v2292 = vsel %vm762, %v2276, %v2252
    %v2294 = vperm.slane %v153, 0
    %v2295 = vperm.slane %v153, 1
    %v2296 = vperm.slane %v153, 2
    %v2297 = vperm.slane %v153, 3
    %v2302 = vmul.f32 %v2285, %v2294
    %v2303 = vmul.f32 %v2281, %v2295
    %v2304 = vmul.f32 %v2277, %v2296
    %v2305 = vmul.f32 %v2289, %v2297
    %v2306 = vmul.f32 %v2286, %v2294
    %v2307 = vmul.f32 %v2282, %v2295
    %v2308 = vmul.f32 %v2278, %v2296
    %v2309 = vmul.f32 %v2290, %v2297
    %v2310 = vmul.f32 %v2287, %v2294
    %v2311 = vmul.f32 %v2283, %v2295
    %v2312 = vmul.f32 %v2279, %v2296
    %v2313 = vmul.f32 %v2291, %v2297
    %v2314 = vmul.f32 %v2288, %v2294
    %v2315 = vmul.f32 %v2284, %v2295
    %v2316 = vmul.f32 %v2280, %v2296
    %v2317 = vmul.f32 %v2292, %v2297
    %v2318 = vpack.c.bf16 %v2303, %v2302
    %v2319 = vpack.c.bf16 %v2305, %v2304
    %v2320 = vpack.c.bf16 %v2307, %v2306
    %v2321 = vpack.c.bf16 %v2309, %v2308
    %v2322 = vpack.c.bf16 %v2311, %v2310
    %v2323 = vpack.c.bf16 %v2313, %v2312
    %v2324 = vpack.c.bf16 %v2315, %v2314
    %v2325 = vpack.c.bf16 %v2317, %v2316
    %2326 = vst [vmem:[#allocation3 + $0x1c0] sm:$0xff] %v2318
    %2327 = vst [vmem:[#allocation3 + $0x1c8] sm:$0xff] %v2319
    %2328 = vst [vmem:[#allocation3 + $0x1d0] sm:$0xff] %v2320
    %2329 = vst [vmem:[#allocation3 + $0x1d8] sm:$0xff] %v2321
    %2330 = vst [vmem:[#allocation3 + $0x1e0] sm:$0xff] %v2322
    %2331 = vst [vmem:[#allocation3 + $0x1e8] sm:$0xff] %v2323
    %2332 = vst [vmem:[#allocation3 + $0x1f0] sm:$0xff] %v2324
    %2333 = vst [vmem:[#allocation3 + $0x1f8] sm:$0xff] %v2325
    %2334 = vrot.lane.b32.xlu0 %v1679, 111
    %v2335 = vpop.permute.xlu0 %2334
    %2336 = vrot.lane.b32.xlu0 %v1683, 111
    %v2337 = vpop.permute.xlu0 %2336
    %2338 = vrot.lane.b32.xlu0 %v1687, 111
    %v2339 = vpop.permute.xlu0 %2338
    %2340 = vrot.lane.b32.xlu0 %v1691, 111
    %v2341 = vpop.permute.xlu0 %2340
    %2342 = vrot.lane.b32.xlu0 %v1680, 111
    %v2343 = vpop.permute.xlu0 %2342
    %2344 = vrot.lane.b32.xlu0 %v1684, 111
    %v2345 = vpop.permute.xlu0 %2344
    %2346 = vrot.lane.b32.xlu0 %v1688, 111
    %v2347 = vpop.permute.xlu0 %2346
    %2348 = vrot.lane.b32.xlu0 %v1692, 111
    %v2349 = vpop.permute.xlu0 %2348
    %2350 = vrot.lane.b32.xlu0 %v1681, 111
    %v2351 = vpop.permute.xlu0 %2350
    %2352 = vrot.lane.b32.xlu0 %v1685, 111
    %v2353 = vpop.permute.xlu0 %2352
    %2354 = vrot.lane.b32.xlu0 %v1689, 111
    %v2355 = vpop.permute.xlu0 %2354
    %2356 = vrot.lane.b32.xlu0 %v1693, 111
    %v2357 = vpop.permute.xlu0 %2356
    %2358 = vrot.lane.b32.xlu0 %v1682, 111
    %v2359 = vpop.permute.xlu0 %2358
    %2360 = vrot.lane.b32.xlu0 %v1686, 111
    %v2361 = vpop.permute.xlu0 %2360
    %2362 = vrot.lane.b32.xlu0 %v1690, 111
    %v2363 = vpop.permute.xlu0 %2362
    %2364 = vrot.lane.b32.xlu0 %v1694, 111
    %v2365 = vpop.permute.xlu0 %2364
    %v2366 = vsel %vm852, %v2351, %v2359
    %v2367 = vsel %vm852, %v2353, %v2361
    %v2368 = vsel %vm852, %v2355, %v2363
    %v2369 = vsel %vm852, %v2357, %v2365
    %v2370 = vsel %vm852, %v2343, %v2351
    %v2371 = vsel %vm852, %v2345, %v2353
    %v2372 = vsel %vm852, %v2347, %v2355
    %v2373 = vsel %vm852, %v2349, %v2357
    %v2374 = vsel %vm852, %v2335, %v2343
    %v2375 = vsel %vm852, %v2337, %v2345
    %v2376 = vsel %vm852, %v2339, %v2347
    %v2377 = vsel %vm852, %v2341, %v2349
    %v2378 = vsel %vm852, %v2359, %v2335
    %v2379 = vsel %vm852, %v2361, %v2337
    %v2380 = vsel %vm852, %v2363, %v2339
    %v2381 = vsel %vm852, %v2365, %v2341
    %v2383 = vperm.slane %v155, 0
    %v2384 = vperm.slane %v155, 1
    %v2385 = vperm.slane %v155, 2
    %v2386 = vperm.slane %v155, 3
    %v2391 = vmul.f32 %v2374, %v2383
    %v2392 = vmul.f32 %v2370, %v2384
    %v2393 = vmul.f32 %v2366, %v2385
    %v2394 = vmul.f32 %v2378, %v2386
    %v2395 = vmul.f32 %v2375, %v2383
    %v2396 = vmul.f32 %v2371, %v2384
    %v2397 = vmul.f32 %v2367, %v2385
    %v2398 = vmul.f32 %v2379, %v2386
    %v2399 = vmul.f32 %v2376, %v2383
    %v2400 = vmul.f32 %v2372, %v2384
    %v2401 = vmul.f32 %v2368, %v2385
    %v2402 = vmul.f32 %v2380, %v2386
    %v2403 = vmul.f32 %v2377, %v2383
    %v2404 = vmul.f32 %v2373, %v2384
    %v2405 = vmul.f32 %v2369, %v2385
    %v2406 = vmul.f32 %v2381, %v2386
    %v2407 = vpack.c.bf16 %v2392, %v2391
    %v2408 = vpack.c.bf16 %v2394, %v2393
    %v2409 = vpack.c.bf16 %v2396, %v2395
    %v2410 = vpack.c.bf16 %v2398, %v2397
    %v2411 = vpack.c.bf16 %v2400, %v2399
    %v2412 = vpack.c.bf16 %v2402, %v2401
    %v2413 = vpack.c.bf16 %v2404, %v2403
    %v2414 = vpack.c.bf16 %v2406, %v2405
    %2415 = vst [vmem:[#allocation3 + $0x200] sm:$0xff] %v2407
    %2416 = vst [vmem:[#allocation3 + $0x208] sm:$0xff] %v2408
    %2417 = vst [vmem:[#allocation3 + $0x210] sm:$0xff] %v2409
    %2418 = vst [vmem:[#allocation3 + $0x218] sm:$0xff] %v2410
    %2419 = vst [vmem:[#allocation3 + $0x220] sm:$0xff] %v2411
    %2420 = vst [vmem:[#allocation3 + $0x228] sm:$0xff] %v2412
    %2421 = vst [vmem:[#allocation3 + $0x230] sm:$0xff] %v2413
    %2422 = vst [vmem:[#allocation3 + $0x238] sm:$0xff] %v2414
    %v2423 = vld [vmem:[#allocation3] sm:$0xff]
    %v2424 = vld [vmem:[#allocation3 + $0x8] sm:$0xff]
    %v2425 = vld [vmem:[#allocation3 + $0x10] sm:$0xff]
    %v2426 = vld [vmem:[#allocation3 + $0x18] sm:$0xff]
    %v2427 = vld [vmem:[#allocation3 + $0x20] sm:$0xff]
    %v2428 = vld [vmem:[#allocation3 + $0x28] sm:$0xff]
    %v2429 = vld [vmem:[#allocation3 + $0x30] sm:$0xff]
    %v2430 = vld [vmem:[#allocation3 + $0x38] sm:$0xff]
    %v2431 = vld [vmem:[#allocation3 + $0x40] sm:$0xff]
    %v2432 = vld [vmem:[#allocation3 + $0x48] sm:$0xff]
    %v2433 = vld [vmem:[#allocation3 + $0x50] sm:$0xff]
    %v2434 = vld [vmem:[#allocation3 + $0x58] sm:$0xff]
    %v2435 = vld [vmem:[#allocation3 + $0x60] sm:$0xff]
    %v2436 = vld [vmem:[#allocation3 + $0x68] sm:$0xff]
    %v2437 = vld [vmem:[#allocation3 + $0x70] sm:$0xff]
    %v2438 = vld [vmem:[#allocation3 + $0x78] sm:$0xff]
    %v2439 = vld [vmem:[#allocation3 + $0x80] sm:$0xff]
    %v2440 = vld [vmem:[#allocation3 + $0x88] sm:$0xff]
    %v2441 = vld [vmem:[#allocation3 + $0x90] sm:$0xff]
    %v2442 = vld [vmem:[#allocation3 + $0x98] sm:$0xff]
    %v2443 = vld [vmem:[#allocation3 + $0xa0] sm:$0xff]
    %v2444 = vld [vmem:[#allocation3 + $0xa8] sm:$0xff]
    %v2445 = vld [vmem:[#allocation3 + $0xb0] sm:$0xff]
    %v2446 = vld [vmem:[#allocation3 + $0xb8] sm:$0xff]
    %v2447 = vld [vmem:[#allocation3 + $0xc0] sm:$0xff]
    %v2448 = vld [vmem:[#allocation3 + $0xc8] sm:$0xff]
    %v2449 = vld [vmem:[#allocation3 + $0xd0] sm:$0xff]
    %v2450 = vld [vmem:[#allocation3 + $0xd8] sm:$0xff]
    %v2451 = vld [vmem:[#allocation3 + $0xe0] sm:$0xff]
    %v2452 = vld [vmem:[#allocation3 + $0xe8] sm:$0xff]
    %v2453 = vld [vmem:[#allocation3 + $0xf0] sm:$0xff]
    %v2454 = vld [vmem:[#allocation3 + $0xf8] sm:$0xff]
    %v2455 = vld [vmem:[#allocation3 + $0x100] sm:$0xff]
    %v2456 = vld [vmem:[#allocation3 + $0x108] sm:$0xff]
    %v2457 = vld [vmem:[#allocation3 + $0x110] sm:$0xff]
    %v2458 = vld [vmem:[#allocation3 + $0x118] sm:$0xff]
    %v2459 = vld [vmem:[#allocation3 + $0x120] sm:$0xff]
    %v2460 = vld [vmem:[#allocation3 + $0x128] sm:$0xff]
    %v2461 = vld [vmem:[#allocation3 + $0x130] sm:$0xff]
    %v2462 = vld [vmem:[#allocation3 + $0x138] sm:$0xff]
    %v2463 = vld [vmem:[#allocation3 + $0x140] sm:$0xff]
    %v2464 = vld [vmem:[#allocation3 + $0x148] sm:$0xff]
    %v2465 = vld [vmem:[#allocation3 + $0x150] sm:$0xff]
    %v2466 = vld [vmem:[#allocation3 + $0x158] sm:$0xff]
    %v2467 = vld [vmem:[#allocation3 + $0x160] sm:$0xff]
    %v2468 = vld [vmem:[#allocation3 + $0x168] sm:$0xff]
    %v2469 = vld [vmem:[#allocation3 + $0x170] sm:$0xff]
    %v2470 = vld [vmem:[#allocation3 + $0x178] sm:$0xff]
    %v2471 = vld [vmem:[#allocation3 + $0x180] sm:$0xff]
    %v2472 = vld [vmem:[#allocation3 + $0x188] sm:$0xff]
    %v2473 = vld [vmem:[#allocation3 + $0x190] sm:$0xff]
    %v2474 = vld [vmem:[#allocation3 + $0x198] sm:$0xff]
    %v2475 = vld [vmem:[#allocation3 + $0x1a0] sm:$0xff]
    %v2476 = vld [vmem:[#allocation3 + $0x1a8] sm:$0xff]
    %v2477 = vld [vmem:[#allocation3 + $0x1b0] sm:$0xff]
    %v2478 = vld [vmem:[#allocation3 + $0x1b8] sm:$0xff]
    %v2479 = vld [vmem:[#allocation3 + $0x1c0] sm:$0xff]
    %v2480 = vld [vmem:[#allocation3 + $0x1c8] sm:$0xff]
    %v2481 = vld [vmem:[#allocation3 + $0x1d0] sm:$0xff]
    %v2482 = vld [vmem:[#allocation3 + $0x1d8] sm:$0xff]
    %v2483 = vld [vmem:[#allocation3 + $0x1e0] sm:$0xff]
    %v2484 = vld [vmem:[#allocation3 + $0x1e8] sm:$0xff]
    %v2485 = vld [vmem:[#allocation3 + $0x1f0] sm:$0xff]
    %v2486 = vld [vmem:[#allocation3 + $0x1f8] sm:$0xff]
    %v2487 = vld [vmem:[#allocation3 + $0x200] sm:$0xff]
    %v2488 = vld [vmem:[#allocation3 + $0x208] sm:$0xff]
    %v2489 = vld [vmem:[#allocation3 + $0x210] sm:$0xff]
    %v2490 = vld [vmem:[#allocation3 + $0x218] sm:$0xff]
    %v2491 = vld [vmem:[#allocation3 + $0x220] sm:$0xff]
    %v2492 = vld [vmem:[#allocation3 + $0x228] sm:$0xff]
    %v2493 = vld [vmem:[#allocation3 + $0x230] sm:$0xff]
    %v2494 = vld [vmem:[#allocation3 + $0x238] sm:$0xff]
    %v2503 = vunpack.c.l.b16 %v82
    %v2504 = vunpack.c.h.b16 %v82
    %v2505 = vunpack.c.l.b16 %v83
    %v2506 = vunpack.c.l.b16 %v84
    %v2507 = vunpack.c.h.b16 %v84
    %v2508 = vunpack.c.l.b16 %v85
    %v2509 = vunpack.c.l.b16 %v86
    %v2510 = vunpack.c.h.b16 %v86
    %v2511 = vunpack.c.l.b16 %v87
    %v2512 = vunpack.c.l.b16 %v88
    %v2513 = vunpack.c.h.b16 %v88
    %v2514 = vunpack.c.l.b16 %v89
    %v2515 = vpack.c.b16 %v2506, %v2503
    %v2516 = vpack.c.b16 %v2507, %v2504
    %v2517 = vpack.c.b16 %v2508, %v2505
    %v2518 = vpack.c.b16 %v2512, %v2509
    %v2519 = vpack.c.b16 %v2513, %v2510
    %v2520 = vpack.c.b16 %v2514, %v2511
    %v2597 = vunpack.c.l.b16 %v2423
    %v2598 = vunpack.c.h.b16 %v2423
    %v2599 = vunpack.c.l.b16 %v2424
    %v2600 = vunpack.c.h.b16 %v2424
    %v2601 = vunpack.c.l.b16 %v2425
    %v2602 = vunpack.c.h.b16 %v2425
    %v2603 = vunpack.c.l.b16 %v2426
    %v2604 = vunpack.c.h.b16 %v2426
    %v2605 = vunpack.c.l.b16 %v2427
    %v2606 = vunpack.c.h.b16 %v2427
    %v2607 = vunpack.c.l.b16 %v2428
    %v2608 = vunpack.c.h.b16 %v2428
    %v2609 = vunpack.c.l.b16 %v2429
    %v2610 = vunpack.c.h.b16 %v2429
    %v2611 = vunpack.c.l.b16 %v2430
    %v2612 = vunpack.c.h.b16 %v2430
    %v2613 = vunpack.c.l.b16 %v2431
    %v2614 = vunpack.c.h.b16 %v2431
    %v2615 = vunpack.c.l.b16 %v2432
    %v2616 = vunpack.c.h.b16 %v2432
    %v2617 = vunpack.c.l.b16 %v2433
    %v2618 = vunpack.c.h.b16 %v2433
    %v2619 = vunpack.c.l.b16 %v2434
    %v2620 = vunpack.c.h.b16 %v2434
    %v2621 = vunpack.c.l.b16 %v2435
    %v2622 = vunpack.c.h.b16 %v2435
    %v2623 = vunpack.c.l.b16 %v2436
    %v2624 = vunpack.c.h.b16 %v2436
    %v2625 = vunpack.c.l.b16 %v2437
    %v2626 = vunpack.c.h.b16 %v2437
    %v2627 = vunpack.c.l.b16 %v2438
    %v2628 = vunpack.c.h.b16 %v2438
    %v2629 = vunpack.c.l.b16 %v2439
    %v2630 = vunpack.c.h.b16 %v2439
    %v2631 = vunpack.c.l.b16 %v2440
    %v2632 = vunpack.c.h.b16 %v2440
    %v2633 = vunpack.c.l.b16 %v2441
    %v2634 = vunpack.c.h.b16 %v2441
    %v2635 = vunpack.c.l.b16 %v2442
    %v2636 = vunpack.c.h.b16 %v2442
    %v2637 = vunpack.c.l.b16 %v2443
    %v2638 = vunpack.c.h.b16 %v2443
    %v2639 = vunpack.c.l.b16 %v2444
    %v2640 = vunpack.c.h.b16 %v2444
    %v2641 = vunpack.c.l.b16 %v2445
    %v2642 = vunpack.c.h.b16 %v2445
    %v2643 = vunpack.c.l.b16 %v2446
    %v2644 = vunpack.c.h.b16 %v2446
    %v2645 = vunpack.c.l.b16 %v2447
    %v2646 = vunpack.c.h.b16 %v2447
    %v2647 = vunpack.c.l.b16 %v2448
    %v2648 = vunpack.c.h.b16 %v2448
    %v2649 = vunpack.c.l.b16 %v2449
    %v2650 = vunpack.c.h.b16 %v2449
    %v2651 = vunpack.c.l.b16 %v2450
    %v2652 = vunpack.c.h.b16 %v2450
    %v2653 = vunpack.c.l.b16 %v2451
    %v2654 = vunpack.c.h.b16 %v2451
    %v2655 = vunpack.c.l.b16 %v2452
    %v2656 = vunpack.c.h.b16 %v2452
    %v2657 = vunpack.c.l.b16 %v2453
    %v2658 = vunpack.c.h.b16 %v2453
    %v2659 = vunpack.c.l.b16 %v2454
    %v2660 = vunpack.c.h.b16 %v2454
    %v2661 = vunpack.c.l.b16 %v2455
    %v2662 = vunpack.c.h.b16 %v2455
    %v2663 = vunpack.c.l.b16 %v2456
    %v2664 = vunpack.c.h.b16 %v2456
    %v2665 = vunpack.c.l.b16 %v2457
    %v2666 = vunpack.c.h.b16 %v2457
    %v2667 = vunpack.c.l.b16 %v2458
    %v2668 = vunpack.c.h.b16 %v2458
    %v2669 = vunpack.c.l.b16 %v2459
    %v2670 = vunpack.c.h.b16 %v2459
    %v2671 = vunpack.c.l.b16 %v2460
    %v2672 = vunpack.c.h.b16 %v2460
    %v2673 = vunpack.c.l.b16 %v2461
    %v2674 = vunpack.c.h.b16 %v2461
    %v2675 = vunpack.c.l.b16 %v2462
    %v2676 = vunpack.c.h.b16 %v2462
    %v2677 = vunpack.c.l.b16 %v2463
    %v2678 = vunpack.c.h.b16 %v2463
    %v2679 = vunpack.c.l.b16 %v2464
    %v2680 = vunpack.c.h.b16 %v2464
    %v2681 = vunpack.c.l.b16 %v2465
    %v2682 = vunpack.c.h.b16 %v2465
    %v2683 = vunpack.c.l.b16 %v2466
    %v2684 = vunpack.c.h.b16 %v2466
    %v2685 = vunpack.c.l.b16 %v2467
    %v2686 = vunpack.c.h.b16 %v2467
    %v2687 = vunpack.c.l.b16 %v2468
    %v2688 = vunpack.c.h.b16 %v2468
    %v2689 = vunpack.c.l.b16 %v2469
    %v2690 = vunpack.c.h.b16 %v2469
    %v2691 = vunpack.c.l.b16 %v2470
    %v2692 = vunpack.c.h.b16 %v2470
    %v2693 = vunpack.c.l.b16 %v2471
    %v2694 = vunpack.c.h.b16 %v2471
    %v2695 = vunpack.c.l.b16 %v2472
    %v2696 = vunpack.c.h.b16 %v2472
    %v2697 = vunpack.c.l.b16 %v2473
    %v2698 = vunpack.c.h.b16 %v2473
    %v2699 = vunpack.c.l.b16 %v2474
    %v2700 = vunpack.c.h.b16 %v2474
    %v2701 = vunpack.c.l.b16 %v2475
    %v2702 = vunpack.c.h.b16 %v2475
    %v2703 = vunpack.c.l.b16 %v2476
    %v2704 = vunpack.c.h.b16 %v2476
    %v2705 = vunpack.c.l.b16 %v2477
    %v2706 = vunpack.c.h.b16 %v2477
    %v2707 = vunpack.c.l.b16 %v2478
    %v2708 = vunpack.c.h.b16 %v2478
    %v2709 = vunpack.c.l.b16 %v2479
    %v2710 = vunpack.c.h.b16 %v2479
    %v2711 = vunpack.c.l.b16 %v2480
    %v2712 = vunpack.c.h.b16 %v2480
    %v2713 = vunpack.c.l.b16 %v2481
    %v2714 = vunpack.c.h.b16 %v2481
    %v2715 = vunpack.c.l.b16 %v2482
    %v2716 = vunpack.c.h.b16 %v2482
    %v2717 = vunpack.c.l.b16 %v2483
    %v2718 = vunpack.c.h.b16 %v2483
    %v2719 = vunpack.c.l.b16 %v2484
    %v2720 = vunpack.c.h.b16 %v2484
    %v2721 = vunpack.c.l.b16 %v2485
    %v2722 = vunpack.c.h.b16 %v2485
    %v2723 = vunpack.c.l.b16 %v2486
    %v2724 = vunpack.c.h.b16 %v2486
    %v2725 = vunpack.c.l.b16 %v2487
    %v2726 = vunpack.c.h.b16 %v2487
    %v2727 = vunpack.c.l.b16 %v2488
    %v2728 = vunpack.c.h.b16 %v2488
    %v2729 = vunpack.c.l.b16 %v2489
    %v2730 = vunpack.c.h.b16 %v2489
    %v2731 = vunpack.c.l.b16 %v2490
    %v2732 = vunpack.c.h.b16 %v2490
    %v2733 = vunpack.c.l.b16 %v2491
    %v2734 = vunpack.c.h.b16 %v2491
    %v2735 = vunpack.c.l.b16 %v2492
    %v2736 = vunpack.c.h.b16 %v2492
    %v2737 = vunpack.c.l.b16 %v2493
    %v2738 = vunpack.c.h.b16 %v2493
    %v2739 = vunpack.c.l.b16 %v2494
    %v2740 = vunpack.c.h.b16 %v2494
    %v2741 = vpack.c.b16 %v2601, %v2597
    %v2742 = vpack.c.b16 %v2602, %v2598
    %v2743 = vpack.c.b16 %v2603, %v2599
    %v2744 = vpack.c.b16 %v2604, %v2600
    %v2745 = vpack.c.b16 %v2609, %v2605
    %v2746 = vpack.c.b16 %v2610, %v2606
    %v2747 = vpack.c.b16 %v2611, %v2607
    %v2748 = vpack.c.b16 %v2612, %v2608
    %v2749 = vpack.c.b16 %v2617, %v2613
    %v2750 = vpack.c.b16 %v2618, %v2614
    %v2751 = vpack.c.b16 %v2619, %v2615
    %v2752 = vpack.c.b16 %v2620, %v2616
    %v2753 = vpack.c.b16 %v2625, %v2621
    %v2754 = vpack.c.b16 %v2626, %v2622
    %v2755 = vpack.c.b16 %v2627, %v2623
    %v2756 = vpack.c.b16 %v2628, %v2624
    %v2757 = vpack.c.b16 %v2633, %v2629
    %v2758 = vpack.c.b16 %v2634, %v2630
    %v2759 = vpack.c.b16 %v2635, %v2631
    %v2760 = vpack.c.b16 %v2636, %v2632
    %v2761 = vpack.c.b16 %v2641, %v2637
    %v2762 = vpack.c.b16 %v2642, %v2638
    %v2763 = vpack.c.b16 %v2643, %v2639
    %v2764 = vpack.c.b16 %v2644, %v2640
    %v2765 = vpack.c.b16 %v2649, %v2645
    %v2766 = vpack.c.b16 %v2650, %v2646
    %v2767 = vpack.c.b16 %v2651, %v2647
    %v2768 = vpack.c.b16 %v2652, %v2648
    %v2769 = vpack.c.b16 %v2657, %v2653
    %v2770 = vpack.c.b16 %v2658, %v2654
    %v2771 = vpack.c.b16 %v2659, %v2655
    %v2772 = vpack.c.b16 %v2660, %v2656
    %v2773 = vpack.c.b16 %v2665, %v2661
    %v2774 = vpack.c.b16 %v2666, %v2662
    %v2775 = vpack.c.b16 %v2667, %v2663
    %v2776 = vpack.c.b16 %v2668, %v2664
    %v2777 = vpack.c.b16 %v2673, %v2669
    %v2778 = vpack.c.b16 %v2674, %v2670
    %v2779 = vpack.c.b16 %v2675, %v2671
    %v2780 = vpack.c.b16 %v2676, %v2672
    %v2781 = vpack.c.b16 %v2681, %v2677
    %v2782 = vpack.c.b16 %v2682, %v2678
    %v2783 = vpack.c.b16 %v2683, %v2679
    %v2784 = vpack.c.b16 %v2684, %v2680
    %v2785 = vpack.c.b16 %v2689, %v2685
    %v2786 = vpack.c.b16 %v2690, %v2686
    %v2787 = vpack.c.b16 %v2691, %v2687
    %v2788 = vpack.c.b16 %v2692, %v2688
    %v2789 = vpack.c.b16 %v2697, %v2693
    %v2790 = vpack.c.b16 %v2698, %v2694
    %v2791 = vpack.c.b16 %v2699, %v2695
    %v2792 = vpack.c.b16 %v2700, %v2696
    %v2793 = vpack.c.b16 %v2705, %v2701
    %v2794 = vpack.c.b16 %v2706, %v2702
    %v2795 = vpack.c.b16 %v2707, %v2703
    %v2796 = vpack.c.b16 %v2708, %v2704
    %v2797 = vpack.c.b16 %v2713, %v2709
    %v2798 = vpack.c.b16 %v2714, %v2710
    %v2799 = vpack.c.b16 %v2715, %v2711
    %v2800 = vpack.c.b16 %v2716, %v2712
    %v2801 = vpack.c.b16 %v2721, %v2717
    %v2802 = vpack.c.b16 %v2722, %v2718
    %v2803 = vpack.c.b16 %v2723, %v2719
    %v2804 = vpack.c.b16 %v2724, %v2720
    %v2805 = vpack.c.b16 %v2729, %v2725
    %v2806 = vpack.c.b16 %v2730, %v2726
    %v2807 = vpack.c.b16 %v2731, %v2727
    %v2808 = vpack.c.b16 %v2732, %v2728
    %v2809 = vpack.c.b16 %v2737, %v2733
    %v2810 = vpack.c.b16 %v2738, %v2734
    %v2811 = vpack.c.b16 %v2739, %v2735
    %v2812 = vpack.c.b16 %v2740, %v2736
    %v2886 = vsel %vm1372, %v2517, 0
    %v2889 = vsel %vm1372, %v2520, 0
    %2891 = vmatpush.bf16.msra.mxu0 %v2769
    %2892 = vmatpush.bf16.msra.mxu0 %v2765
    %2893 = vmatpush.bf16.msra.mxu0 %v2761
    %2894 = vmatpush.bf16.msra.mxu0 %v2757
    %2895 = vmatpush.bf16.msra.mxu0 %v2753
    %2896 = vmatpush.bf16.msra.mxu0 %v2749
    %2897 = vmatpush.bf16.msra.mxu0 %v2745
    %2898 = vmatpush.bf16.msra.mxu0 %v2741
    %2899 = vmatmul.bf16.gmra.mxu0 %v2515
    %v2900 = vpop.f32.mrf.mxu0
    %v2901 = vadd.f32 0.0, %v2900
    %v2902 = vpop.f32.mrf.mxu0
    %v2903 = vadd.f32 0.0, %v2902
    %2904 = vmatmul.bf16.gmra.mxu0 %v2518
    %v2905 = vpop.f32.mrf.mxu0
    %v2906 = vadd.f32 0.0, %v2905
    %v2907 = vpop.f32.mrf.mxu0
    %v2908 = vadd.f32 0.0, %v2907
    %2909 = vdwg.mxu0
    %2910 = vmatpush.bf16.msra.mxu0 %v2801
    %2911 = vmatpush.bf16.msra.mxu0 %v2797
    %2912 = vmatpush.bf16.msra.mxu0 %v2793
    %2913 = vmatpush.bf16.msra.mxu0 %v2789
    %2914 = vmatpush.bf16.msra.mxu0 %v2785
    %2915 = vmatpush.bf16.msra.mxu0 %v2781
    %2916 = vmatpush.bf16.msra.mxu0 %v2777
    %2917 = vmatpush.bf16.msra.mxu0 %v2773
    %2918 = vmatmul.bf16.gmra.mxu0 %v2516
    %v2919 = vpop.f32.mrf.mxu0
    %v2920 = vadd.f32 %v2901, %v2919
    %v2921 = vpop.f32.mrf.mxu0
    %v2922 = vadd.f32 %v2903, %v2921
    %2923 = vmatmul.bf16.gmra.mxu0 %v2519
    %v2924 = vpop.f32.mrf.mxu0
    %v2925 = vadd.f32 %v2906, %v2924
    %v2926 = vpop.f32.mrf.mxu0
    %v2927 = vadd.f32 %v2908, %v2926
    %2928 = vdwg.mxu0
    %2929 = vmatpush.bf16.msra.mxu0 0
    %2930 = vmatpush.bf16.msra.mxu0 0
    %2931 = vmatpush.bf16.msra.mxu0 0
    %2932 = vmatpush.bf16.msra.mxu0 0
    %2933 = vmatpush.bf16.msra.mxu0 0
    %2934 = vmatpush.bf16.msra.mxu0 0
    %2935 = vmatpush.bf16.msra.mxu0 %v2809
    %2936 = vmatpush.bf16.msra.mxu0 %v2805
    %2937 = vmatmul.bf16.gmra.mxu0 %v2886
    %v2938 = vpop.f32.mrf.mxu0
    %v2939 = vadd.f32 %v2920, %v2938
    %v2940 = vpop.f32.mrf.mxu0
    %v2941 = vadd.f32 %v2922, %v2940
    %2942 = vmatmul.bf16.gmra.mxu0 %v2889
    %v2943 = vpop.f32.mrf.mxu0
    %v2944 = vadd.f32 %v2925, %v2943
    %v2945 = vpop.f32.mrf.mxu0
    %v2946 = vadd.f32 %v2927, %v2945
    %2947 = vdwg.mxu0
    %2948 = vmatpush.bf16.msra.mxu0 %v2770
    %2949 = vmatpush.bf16.msra.mxu0 %v2766
    %2950 = vmatpush.bf16.msra.mxu0 %v2762
    %2951 = vmatpush.bf16.msra.mxu0 %v2758
    %2952 = vmatpush.bf16.msra.mxu0 %v2754
    %2953 = vmatpush.bf16.msra.mxu0 %v2750
    %2954 = vmatpush.bf16.msra.mxu0 %v2746
    %2955 = vmatpush.bf16.msra.mxu0 %v2742
    %2956 = vmatmul.bf16.gmra.mxu0 %v2515
    %v2957 = vpop.f32.mrf.mxu0
    %v2958 = vadd.f32 0.0, %v2957
    %v2959 = vpop.f32.mrf.mxu0
    %v2960 = vadd.f32 0.0, %v2959
    %2961 = vmatmul.bf16.gmra.mxu0 %v2518
    %v2962 = vpop.f32.mrf.mxu0
    %v2963 = vadd.f32 0.0, %v2962
    %v2964 = vpop.f32.mrf.mxu0
    %v2965 = vadd.f32 0.0, %v2964
    %2966 = vdwg.mxu0
    %2967 = vmatpush.bf16.msra.mxu0 %v2802
    %2968 = vmatpush.bf16.msra.mxu0 %v2798
    %2969 = vmatpush.bf16.msra.mxu0 %v2794
    %2970 = vmatpush.bf16.msra.mxu0 %v2790
    %2971 = vmatpush.bf16.msra.mxu0 %v2786
    %2972 = vmatpush.bf16.msra.mxu0 %v2782
    %2973 = vmatpush.bf16.msra.mxu0 %v2778
    %2974 = vmatpush.bf16.msra.mxu0 %v2774
    %2975 = vmatmul.bf16.gmra.mxu0 %v2516
    %v2976 = vpop.f32.mrf.mxu0
    %v2977 = vadd.f32 %v2958, %v2976
    %v2978 = vpop.f32.mrf.mxu0
    %v2979 = vadd.f32 %v2960, %v2978
    %2980 = vmatmul.bf16.gmra.mxu0 %v2519
    %v2981 = vpop.f32.mrf.mxu0
    %v2982 = vadd.f32 %v2963, %v2981
    %v2983 = vpop.f32.mrf.mxu0
    %v2984 = vadd.f32 %v2965, %v2983
    %2985 = vdwg.mxu0
    %2986 = vmatpush.bf16.msra.mxu0 0
    %2987 = vmatpush.bf16.msra.mxu0 0
    %2988 = vmatpush.bf16.msra.mxu0 0
    %2989 = vmatpush.bf16.msra.mxu0 0
    %2990 = vmatpush.bf16.msra.mxu0 0
    %2991 = vmatpush.bf16.msra.mxu0 0
    %2992 = vmatpush.bf16.msra.mxu0 %v2810
    %2993 = vmatpush.bf16.msra.mxu0 %v2806
    %2994 = vmatmul.bf16.gmra.mxu0 %v2886
    %v2995 = vpop.f32.mrf.mxu0
    %v2996 = vadd.f32 %v2977, %v2995
    %v2997 = vpop.f32.mrf.mxu0
    %v2998 = vadd.f32 %v2979, %v2997
    %2999 = vmatmul.bf16.gmra.mxu0 %v2889
    %v3000 = vpop.f32.mrf.mxu0
    %v3001 = vadd.f32 %v2982, %v3000
    %v3002 = vpop.f32.mrf.mxu0
    %v3003 = vadd.f32 %v2984, %v3002
    %3004 = vdwg.mxu0
    %3005 = vmatpush.bf16.msra.mxu0 %v2771
    %3006 = vmatpush.bf16.msra.mxu0 %v2767
    %3007 = vmatpush.bf16.msra.mxu0 %v2763
    %3008 = vmatpush.bf16.msra.mxu0 %v2759
    %3009 = vmatpush.bf16.msra.mxu0 %v2755
    %3010 = vmatpush.bf16.msra.mxu0 %v2751
    %3011 = vmatpush.bf16.msra.mxu0 %v2747
    %3012 = vmatpush.bf16.msra.mxu0 %v2743
    %3013 = vmatmul.bf16.gmra.mxu0 %v2515
    %v3014 = vpop.f32.mrf.mxu0
    %v3015 = vadd.f32 0.0, %v3014
    %v3016 = vpop.f32.mrf.mxu0
    %v3017 = vadd.f32 0.0, %v3016
    %3018 = vmatmul.bf16.gmra.mxu0 %v2518
    %v3019 = vpop.f32.mrf.mxu0
    %v3020 = vadd.f32 0.0, %v3019
    %v3021 = vpop.f32.mrf.mxu0
    %v3022 = vadd.f32 0.0, %v3021
    %3023 = vdwg.mxu0
    %3024 = vmatpush.bf16.msra.mxu0 %v2803
    %3025 = vmatpush.bf16.msra.mxu0 %v2799
    %3026 = vmatpush.bf16.msra.mxu0 %v2795
    %3027 = vmatpush.bf16.msra.mxu0 %v2791
    %3028 = vmatpush.bf16.msra.mxu0 %v2787
    %3029 = vmatpush.bf16.msra.mxu0 %v2783
    %3030 = vmatpush.bf16.msra.mxu0 %v2779
    %3031 = vmatpush.bf16.msra.mxu0 %v2775
    %3032 = vmatmul.bf16.gmra.mxu0 %v2516
    %v3033 = vpop.f32.mrf.mxu0
    %v3034 = vadd.f32 %v3015, %v3033
    %v3035 = vpop.f32.mrf.mxu0
    %v3036 = vadd.f32 %v3017, %v3035
    %3037 = vmatmul.bf16.gmra.mxu0 %v2519
    %v3038 = vpop.f32.mrf.mxu0
    %v3039 = vadd.f32 %v3020, %v3038
    %v3040 = vpop.f32.mrf.mxu0
    %v3041 = vadd.f32 %v3022, %v3040
    %3042 = vdwg.mxu0
    %3043 = vmatpush.bf16.msra.mxu0 0
    %3044 = vmatpush.bf16.msra.mxu0 0
    %3045 = vmatpush.bf16.msra.mxu0 0
    %3046 = vmatpush.bf16.msra.mxu0 0
    %3047 = vmatpush.bf16.msra.mxu0 0
    %3048 = vmatpush.bf16.msra.mxu0 0
    %3049 = vmatpush.bf16.msra.mxu0 %v2811
    %3050 = vmatpush.bf16.msra.mxu0 %v2807
    %3051 = vmatmul.bf16.gmra.mxu0 %v2886
    %v3052 = vpop.f32.mrf.mxu0
    %v3053 = vadd.f32 %v3034, %v3052
    %v3054 = vpop.f32.mrf.mxu0
    %v3055 = vadd.f32 %v3036, %v3054
    %3056 = vmatmul.bf16.gmra.mxu0 %v2889
    %v3057 = vpop.f32.mrf.mxu0
    %v3058 = vadd.f32 %v3039, %v3057
    %v3059 = vpop.f32.mrf.mxu0
    %v3060 = vadd.f32 %v3041, %v3059
    %3061 = vdwg.mxu0
    %3062 = vmatpush.bf16.msra.mxu0 %v2772
    %3063 = vmatpush.bf16.msra.mxu0 %v2768
    %3064 = vmatpush.bf16.msra.mxu0 %v2764
    %3065 = vmatpush.bf16.msra.mxu0 %v2760
    %3066 = vmatpush.bf16.msra.mxu0 %v2756
    %3067 = vmatpush.bf16.msra.mxu0 %v2752
    %3068 = vmatpush.bf16.msra.mxu0 %v2748
    %3069 = vmatpush.bf16.msra.mxu0 %v2744
    %3070 = vmatmul.bf16.gmra.mxu0 %v2515
    %v3071 = vpop.f32.mrf.mxu0
    %v3072 = vadd.f32 0.0, %v3071
    %v3073 = vpop.f32.mrf.mxu0
    %v3074 = vadd.f32 0.0, %v3073
    %3075 = vmatmul.bf16.gmra.mxu0 %v2518
    %v3076 = vpop.f32.mrf.mxu0
    %v3077 = vadd.f32 0.0, %v3076
    %v3078 = vpop.f32.mrf.mxu0
    %v3079 = vadd.f32 0.0, %v3078
    %3080 = vdwg.mxu0
    %3081 = vmatpush.bf16.msra.mxu0 %v2804
    %3082 = vmatpush.bf16.msra.mxu0 %v2800
    %3083 = vmatpush.bf16.msra.mxu0 %v2796
    %3084 = vmatpush.bf16.msra.mxu0 %v2792
    %3085 = vmatpush.bf16.msra.mxu0 %v2788
    %3086 = vmatpush.bf16.msra.mxu0 %v2784
    %3087 = vmatpush.bf16.msra.mxu0 %v2780
    %3088 = vmatpush.bf16.msra.mxu0 %v2776
    %3089 = vmatmul.bf16.gmra.mxu0 %v2516
    %v3090 = vpop.f32.mrf.mxu0
    %v3091 = vadd.f32 %v3072, %v3090
    %v3092 = vpop.f32.mrf.mxu0
    %v3093 = vadd.f32 %v3074, %v3092
    %3094 = vmatmul.bf16.gmra.mxu0 %v2519
    %v3095 = vpop.f32.mrf.mxu0
    %v3096 = vadd.f32 %v3077, %v3095
    %v3097 = vpop.f32.mrf.mxu0
    %v3098 = vadd.f32 %v3079, %v3097
    %3099 = vdwg.mxu0
    %3100 = vmatpush.bf16.msra.mxu0 0
    %3101 = vmatpush.bf16.msra.mxu0 0
    %3102 = vmatpush.bf16.msra.mxu0 0
    %3103 = vmatpush.bf16.msra.mxu0 0
    %3104 = vmatpush.bf16.msra.mxu0 0
    %3105 = vmatpush.bf16.msra.mxu0 0
    %3106 = vmatpush.bf16.msra.mxu0 %v2812
    %3107 = vmatpush.bf16.msra.mxu0 %v2808
    %3108 = vmatmul.bf16.gmra.mxu0 %v2886
    %v3109 = vpop.f32.mrf.mxu0
    %v3110 = vadd.f32 %v3091, %v3109
    %v3111 = vpop.f32.mrf.mxu0
    %v3112 = vadd.f32 %v3093, %v3111
    %3113 = vmatmul.bf16.gmra.mxu0 %v2889
    %v3114 = vpop.f32.mrf.mxu0
    %v3115 = vadd.f32 %v3096, %v3114
    %v3116 = vpop.f32.mrf.mxu0
    %v3117 = vadd.f32 %v3098, %v3116
    %3118 = vdwg.mxu0
    %3120 = vset.pattern.permute.xlu0 0
    %3121 = vperm.xlu0 %3120, %v98
    %v3122 = vpop.permute.xlu0 %3121
    %3125 = vset.pattern.permute.xlu0 0
    %3126 = vperm.xlu0 %3125, %v99
    %v3127 = vpop.permute.xlu0 %3126
    %3130 = vset.pattern.permute.xlu0 0
    %3131 = vperm.xlu0 %3130, %v100
    %v3132 = vpop.permute.xlu0 %3131
    %3135 = vset.pattern.permute.xlu0 0
    %3136 = vperm.xlu0 %3135, %v101
    %v3137 = vpop.permute.xlu0 %3136
    %v3139 = vmul.f32 %v2939, %v3122
    %v3140 = vmul.f32 %v2996, %v3122
    %v3141 = vmul.f32 %v3053, %v3122
    %v3142 = vmul.f32 %v3110, %v3122
    %v3143 = vmul.f32 %v2941, %v3127
    %v3144 = vmul.f32 %v2998, %v3127
    %v3145 = vmul.f32 %v3055, %v3127
    %v3146 = vmul.f32 %v3112, %v3127
    %v3147 = vmul.f32 %v2944, %v3132
    %v3148 = vmul.f32 %v3001, %v3132
    %v3149 = vmul.f32 %v3058, %v3132
    %v3150 = vmul.f32 %v3115, %v3132
    %v3151 = vmul.f32 %v2946, %v3137
    %v3152 = vmul.f32 %v3003, %v3137
    %v3153 = vmul.f32 %v3060, %v3137
    %v3154 = vmul.f32 %v3117, %v3137
    %3156 = vset.pattern.permute.xlu0 0
    %3157 = vperm.xlu0 %3156, %v102
    %v3158 = vpop.permute.xlu0 %3157
    %3161 = vset.pattern.permute.xlu0 0
    %3162 = vperm.xlu0 %3161, %v103
    %v3163 = vpop.permute.xlu0 %3162
    %3166 = vset.pattern.permute.xlu0 0
    %3167 = vperm.xlu0 %3166, %v104
    %v3168 = vpop.permute.xlu0 %3167
    %3171 = vset.pattern.permute.xlu0 0
    %3172 = vperm.xlu0 %3171, %v105
    %v3173 = vpop.permute.xlu0 %3172
    %v3175 = vadd.f32 %v3139, %v3158
    %v3176 = vadd.f32 %v3140, %v3158
    %v3177 = vadd.f32 %v3141, %v3158
    %v3178 = vadd.f32 %v3142, %v3158
    %v3179 = vadd.f32 %v3143, %v3163
    %v3180 = vadd.f32 %v3144, %v3163
    %v3181 = vadd.f32 %v3145, %v3163
    %v3182 = vadd.f32 %v3146, %v3163
    %v3183 = vadd.f32 %v3147, %v3168
    %v3184 = vadd.f32 %v3148, %v3168
    %v3185 = vadd.f32 %v3149, %v3168
    %v3186 = vadd.f32 %v3150, %v3168
    %v3187 = vadd.f32 %v3151, %v3173
    %v3188 = vadd.f32 %v3152, %v3173
    %v3189 = vadd.f32 %v3153, %v3173
    %v3190 = vadd.f32 %v3154, %v3173
    %v3191 = vadd.f32 %v3175, %v3176
    %3192 = vadd.xlane.f32.xlu0 %v3191
    %v3193 = vpop.xlane.xlu0 %3192
    %v3194 = vadd.f32 %v3179, %v3180
    %3195 = vadd.xlane.f32.xlu0 %v3194
    %v3196 = vpop.xlane.xlu0 %3195
    %v3197 = vadd.f32 %v3183, %v3184
    %3198 = vadd.xlane.f32.xlu0 %v3197
    %v3199 = vpop.xlane.xlu0 %3198
    %v3200 = vadd.f32 %v3187, %v3188
    %3201 = vadd.xlane.f32.xlu0 %v3200
    %v3202 = vpop.xlane.xlu0 %3201
    %v3203 = vrcp.pop 256.0
    %v3204 = vmul.f32 256.0, %v3203
    %v3205 = vsub.f32 1.0, %v3204
    %v3206 = vmul.f32 %v3203, %v3205
    %v3207 = vadd.f32 %v3203, %v3206
    %vm3208 = vweird.f32 %v3203
    %v3209 = vsel %vm3208, %v3203, %v3207
    %v3210 = vmul.f32 %v3193, %v3209
    %v3211 = vmul.f32 %v3196, %v3209
    %v3212 = vmul.f32 %v3199, %v3209
    %v3213 = vmul.f32 %v3202, %v3209
    %v3214 = vadd.f32 %v3177, %v3178
    %3215 = vadd.xlane.f32.xlu0 %v3214
    %v3216 = vpop.xlane.xlu0 %3215
    %v3217 = vadd.f32 %v3181, %v3182
    %3218 = vadd.xlane.f32.xlu0 %v3217
    %v3219 = vpop.xlane.xlu0 %3218
    %v3220 = vadd.f32 %v3185, %v3186
    %3221 = vadd.xlane.f32.xlu0 %v3220
    %v3222 = vpop.xlane.xlu0 %3221
    %v3223 = vadd.f32 %v3189, %v3190
    %3224 = vadd.xlane.f32.xlu0 %v3223
    %v3225 = vpop.xlane.xlu0 %3224
    %v3226 = vmul.f32 %v3216, %v3209
    %v3227 = vmul.f32 %v3219, %v3209
    %v3228 = vmul.f32 %v3222, %v3209
    %v3229 = vmul.f32 %v3225, %v3209
    %vm3230 = vcmask 7168
    %v3231 = vsel %vm3230, %v3210, %v3226
    %v3232 = vsel %vm3230, %v3211, %v3227
    %v3233 = vsel %vm3230, %v3212, %v3228
    %v3234 = vsel %vm3230, %v3213, %v3229
    %3236 = vset.pattern.permute.xlu0 0
    %3237 = vperm.xlu0 %3236, %v107
    %v3238 = vpop.permute.xlu0 %3237
    %v3241 = vsel %vm1372, %v106, 0
    %3243 = vmatpush.msra.mxu0 0.0
    %3244 = vmatpush.msra.mxu0 0.0
    %3245 = vmatpush.msra.mxu0 0.0
    %3246 = vmatpush.msra.mxu0 0.0
    %3247 = vmatpush.msra.mxu0 0.0
    %3248 = vmatpush.msra.mxu0 0.0
    %3249 = vmatpush.msra.mxu0 0.0
    %3250 = vmatpush.msra.mxu0 0.0
    %3251 = vmatpush.msra.mxu0 0.0
    %3252 = vmatpush.msra.mxu0 0.0
    %3253 = vmatpush.msra.mxu0 0.0
    %3254 = vmatpush.msra.mxu0 0.0
    %3255 = vmatpush.msra.mxu0 %v3234
    %3256 = vmatpush.msra.mxu0 %v3233
    %3257 = vmatpush.msra.mxu0 %v3232
    %3258 = vmatpush.msra.mxu0 %v3231
    %3259 = vmatmul.f32.gmra.mxu0 %v3241
    %v3260 = vpop.f32.mrf.mxu0
    %v3261 = vadd.f32 %v3238, %v3260
    %3262 = vdwg.mxu0
    %3264 = vset.pattern.permute.xlu0 0
    %3265 = vperm.xlu0 %3264, %v108
    %v3266 = vpop.permute.xlu0 %3265
    %v3268 = vmul.f32 %v3261, %v3266
    %3270 = vset.pattern.permute.xlu0 0
    %3271 = vperm.xlu0 %3270, %v109
    %v3272 = vpop.permute.xlu0 %3271
    %v3274 = vadd.f32 %v3268, %v3272
    %v3275 = vmax.f32 %v3274, 0.0
    %3277 = vset.pattern.permute.xlu0 0
    %3278 = vperm.xlu0 %3277, %v114
    %v3279 = vpop.permute.xlu0 %3278
    %3282 = vset.pattern.permute.xlu0 0
    %3283 = vperm.xlu0 %3282, %v115
    %v3284 = vpop.permute.xlu0 %3283
    %3287 = vset.pattern.permute.xlu0 0
    %3288 = vperm.xlu0 %3287, %v116
    %v3289 = vpop.permute.xlu0 %3288
    %3292 = vset.pattern.permute.xlu0 0
    %3293 = vperm.xlu0 %3292, %v117
    %v3294 = vpop.permute.xlu0 %3293
    %vm3296 = vcmask 15360
    %v3298 = vsel %vm3296, %v110, 0
    %v3301 = vsel %vm3296, %v111, 0
    %v3304 = vsel %vm3296, %v112, 0
    %v3307 = vsel %vm3296, %v113, 0
    %vm3309 = vcmask 1041408
    %v3311 = vsel %vm3309, %v3275, 0
    %3313 = vmatpush.msra.mxu0 0.0
    %3314 = vmatpush.msra.mxu0 0.0
    %3315 = vmatpush.msra.mxu0 0.0
    %3316 = vmatpush.msra.mxu0 0.0
    %3317 = vmatpush.msra.mxu0 0.0
    %3318 = vmatpush.msra.mxu0 0.0
    %3319 = vmatpush.msra.mxu0 0.0
    %3320 = vmatpush.msra.mxu0 0.0
    %3321 = vmatpush.msra.mxu0 0.0
    %3322 = vmatpush.msra.mxu0 0.0
    %3323 = vmatpush.msra.mxu0 0.0
    %3324 = vmatpush.msra.mxu0 0.0
    %3325 = vmatpush.msra.mxu0 0.0
    %3326 = vmatpush.msra.mxu0 0.0
    %3327 = vmatpush.msra.mxu0 0.0
    %3328 = vmatpush.msra.mxu0 %v3311
    %3329 = vmatmul.f32.gmra.mxu0 %v3298
    %v3330 = vpop.f32.mrf.mxu0
    %v3331 = vadd.f32 %v3279, %v3330
    %3332 = vmatmul.f32.gmra.mxu0 %v3301
    %v3333 = vpop.f32.mrf.mxu0
    %v3334 = vadd.f32 %v3284, %v3333
    %3335 = vmatmul.f32.gmra.mxu0 %v3304
    %v3336 = vpop.f32.mrf.mxu0
    %v3337 = vadd.f32 %v3289, %v3336
    %3338 = vmatmul.f32.gmra.mxu0 %v3307
    %v3339 = vpop.f32.mrf.mxu0
    %v3340 = vadd.f32 %v3294, %v3339
    %3341 = vdwg.mxu0
    %3343 = vset.pattern.permute.xlu0 0
    %3344 = vperm.xlu0 %3343, %v118
    %v3345 = vpop.permute.xlu0 %3344
    %3348 = vset.pattern.permute.xlu0 0
    %3349 = vperm.xlu0 %3348, %v119
    %v3350 = vpop.permute.xlu0 %3349
    %3353 = vset.pattern.permute.xlu0 0
    %3354 = vperm.xlu0 %3353, %v120
    %v3355 = vpop.permute.xlu0 %3354
    %3358 = vset.pattern.permute.xlu0 0
    %3359 = vperm.xlu0 %3358, %v121
    %v3360 = vpop.permute.xlu0 %3359
    %v3362 = vmul.f32 %v3331, %v3345
    %v3363 = vmul.f32 %v3334, %v3350
    %v3364 = vmul.f32 %v3337, %v3355
    %v3365 = vmul.f32 %v3340, %v3360
    %3367 = vset.pattern.permute.xlu0 0
    %3368 = vperm.xlu0 %3367, %v122
    %v3369 = vpop.permute.xlu0 %3368
    %3372 = vset.pattern.permute.xlu0 0
    %3373 = vperm.xlu0 %3372, %v123
    %v3374 = vpop.permute.xlu0 %3373
    %3377 = vset.pattern.permute.xlu0 0
    %3378 = vperm.xlu0 %3377, %v124
    %v3379 = vpop.permute.xlu0 %3378
    %3382 = vset.pattern.permute.xlu0 0
    %3383 = vperm.xlu0 %3382, %v125
    %v3384 = vpop.permute.xlu0 %3383
    %v3386 = vadd.f32 %v3362, %v3369
    %v3387 = vadd.f32 %v3363, %v3374
    %v3388 = vadd.f32 %v3364, %v3379
    %v3389 = vadd.f32 %v3365, %v3384
    %v3390 = vsub.f32 0.0, %v3386
    %v3391 = vsub.f32 0.0, %v3387
    %v3392 = vsub.f32 0.0, %v3388
    %v3393 = vsub.f32 0.0, %v3389
    %v3394 = vmul.f32 %v3390, 1.442695
    %v3395 = vpow.pop %v3394
    %v3396 = vmul.f32 %v3391, 1.442695
    %v3397 = vpow.pop %v3396
    %v3398 = vmul.f32 %v3392, 1.442695
    %v3399 = vpow.pop %v3398
    %v3400 = vmul.f32 %v3393, 1.442695
    %v3401 = vpow.pop %v3400
    %v3402 = vadd.f32 %v3395, 1.0
    %v3403 = vadd.f32 %v3397, 1.0
    %v3404 = vadd.f32 %v3399, 1.0
    %v3405 = vadd.f32 %v3401, 1.0
    %v3406 = vrcp.pop %v3402
    %v3407 = vmul.f32 %v3402, %v3406
    %v3408 = vsub.f32 1.0, %v3407
    %v3409 = vmul.f32 %v3406, %v3408
    %v3410 = vadd.f32 %v3406, %v3409
    %vm3411 = vweird.f32 %v3402
    %vm3412 = vweird.f32 %v3406
    %vm3413 = vmor %vm3411, %vm3412
    %v3414 = vsel %vm3413, %v3406, %v3410
    %v3415 = vand.u32 2147483647, %v3402
    %vm3416 = vcmp.eq.f32.partialorder %v3415, 8.507059e+37
    %v3417 = vand.u32 %v3402, 2147483648
    %v3418 = vor.u32 1.1754944e-38, %v3417
    %v3419 = vsel %vm3416, %v3418, %v3414
    %v3420 = vmul.f32 1.0, %v3419
    %v3421 = vrcp.pop %v3403
    %v3422 = vmul.f32 %v3403, %v3421
    %v3423 = vsub.f32 1.0, %v3422
    %v3424 = vmul.f32 %v3421, %v3423
    %v3425 = vadd.f32 %v3421, %v3424
    %vm3426 = vweird.f32 %v3403
    %vm3427 = vweird.f32 %v3421
    %vm3428 = vmor %vm3426, %vm3427
    %v3429 = vsel %vm3428, %v3421, %v3425
    %v3430 = vand.u32 2147483647, %v3403
    %vm3431 = vcmp.eq.f32.partialorder %v3430, 8.507059e+37
    %v3432 = vand.u32 %v3403, 2147483648
    %v3433 = vor.u32 1.1754944e-38, %v3432
    %v3434 = vsel %vm3431, %v3433, %v3429
    %v3435 = vmul.f32 1.0, %v3434
    %v3436 = vrcp.pop %v3404
    %v3437 = vmul.f32 %v3404, %v3436
    %v3438 = vsub.f32 1.0, %v3437
    %v3439 = vmul.f32 %v3436, %v3438
    %v3440 = vadd.f32 %v3436, %v3439
    %vm3441 = vweird.f32 %v3404
    %vm3442 = vweird.f32 %v3436
    %vm3443 = vmor %vm3441, %vm3442
    %v3444 = vsel %vm3443, %v3436, %v3440
    %v3445 = vand.u32 2147483647, %v3404
    %vm3446 = vcmp.eq.f32.partialorder %v3445, 8.507059e+37
    %v3447 = vand.u32 %v3404, 2147483648
    %v3448 = vor.u32 1.1754944e-38, %v3447
    %v3449 = vsel %vm3446, %v3448, %v3444
    %v3450 = vmul.f32 1.0, %v3449
    %v3451 = vrcp.pop %v3405
    %v3452 = vmul.f32 %v3405, %v3451
    %v3453 = vsub.f32 1.0, %v3452
    %v3454 = vmul.f32 %v3451, %v3453
    %v3455 = vadd.f32 %v3451, %v3454
    %vm3456 = vweird.f32 %v3405
    %vm3457 = vweird.f32 %v3451
    %vm3458 = vmor %vm3456, %vm3457
    %v3459 = vsel %vm3458, %v3451, %v3455
    %v3460 = vand.u32 2147483647, %v3405
    %vm3461 = vcmp.eq.f32.partialorder %v3460, 8.507059e+37
    %v3462 = vand.u32 %v3405, 2147483648
    %v3463 = vor.u32 1.1754944e-38, %v3462
    %v3464 = vsel %vm3461, %v3463, %v3459
    %v3465 = vmul.f32 1.0, %v3464
    %3467 = vset.pattern.permute.xlu0 0
    %3468 = vperm.xlu0 %3467, %v3420
    %v3469 = vpop.permute.xlu0 %3468
    %3472 = vset.pattern.permute.xlu0 0
    %3473 = vperm.xlu0 %3472, %v3435
    %v3474 = vpop.permute.xlu0 %3473
    %3477 = vset.pattern.permute.xlu0 0
    %3478 = vperm.xlu0 %3477, %v3450
    %v3479 = vpop.permute.xlu0 %3478
    %3482 = vset.pattern.permute.xlu0 0
    %3483 = vperm.xlu0 %3482, %v3465
    %v3484 = vpop.permute.xlu0 %3483
    %v3486 = vmul.f32 %v3175, %v3469
    %v3487 = vmul.f32 %v3176, %v3469
    %v3488 = vmul.f32 %v3179, %v3474
    %v3489 = vmul.f32 %v3180, %v3474
    %v3490 = vmul.f32 %v3183, %v3479
    %v3491 = vmul.f32 %v3184, %v3479
    %v3492 = vmul.f32 %v3187, %v3484
    %v3493 = vmul.f32 %v3188, %v3484
    %v3494 = vadd.f32 %v3486, %v156
    %v3495 = vadd.f32 %v3487, %v157
    %v3496 = vadd.f32 %v3488, %v160
    %v3497 = vadd.f32 %v3489, %v161
    %v3498 = vadd.f32 %v3490, %v164
    %v3499 = vadd.f32 %v3491, %v165
    %v3500 = vadd.f32 %v3492, %v168
    %v3501 = vadd.f32 %v3493, %v169
    %v3502 = vmax.f32 %v3494, 0.0
    %v3503 = vmax.f32 %v3495, 0.0
    %v3504 = vmax.f32 %v3496, 0.0
    %v3505 = vmax.f32 %v3497, 0.0
    %v3506 = vmax.f32 %v3498, 0.0
    %v3507 = vmax.f32 %v3499, 0.0
    %v3508 = vmax.f32 %v3500, 0.0
    %v3509 = vmax.f32 %v3501, 0.0
    %3510 = vset.pattern.permute.xlu0 1
    %3511 = vperm.xlu0 %3510, %v3420
    %v3512 = vpop.permute.xlu0 %3511
    %3514 = vset.pattern.permute.xlu0 1
    %3515 = vperm.xlu0 %3514, %v3435
    %v3516 = vpop.permute.xlu0 %3515
    %3518 = vset.pattern.permute.xlu0 1
    %3519 = vperm.xlu0 %3518, %v3450
    %v3520 = vpop.permute.xlu0 %3519
    %3522 = vset.pattern.permute.xlu0 1
    %3523 = vperm.xlu0 %3522, %v3465
    %v3524 = vpop.permute.xlu0 %3523
    %v3526 = vmul.f32 %v3177, %v3512
    %v3527 = vmul.f32 %v3178, %v3512
    %v3528 = vmul.f32 %v3181, %v3516
    %v3529 = vmul.f32 %v3182, %v3516
    %v3530 = vmul.f32 %v3185, %v3520
    %v3531 = vmul.f32 %v3186, %v3520
    %v3532 = vmul.f32 %v3189, %v3524
    %v3533 = vmul.f32 %v3190, %v3524
    %v3534 = vadd.f32 %v3526, %v158
    %v3535 = vadd.f32 %v3527, %v159
    %v3536 = vadd.f32 %v3528, %v162
    %v3537 = vadd.f32 %v3529, %v163
    %v3538 = vadd.f32 %v3530, %v166
    %v3539 = vadd.f32 %v3531, %v167
    %v3540 = vadd.f32 %v3532, %v170
    %v3541 = vadd.f32 %v3533, %v171
    %v3542 = vmax.f32 %v3534, 0.0
    %v3543 = vmax.f32 %v3535, 0.0
    %v3544 = vmax.f32 %v3536, 0.0
    %v3545 = vmax.f32 %v3537, 0.0
    %v3546 = vmax.f32 %v3538, 0.0
    %v3547 = vmax.f32 %v3539, 0.0
    %v3548 = vmax.f32 %v3540, 0.0
    %v3549 = vmax.f32 %v3541, 0.0
    %3550 = vst [vmem:[#allocation7] sm:$0xff] %v3502
    %3551 = vst [vmem:[#allocation7 + $0x8] sm:$0xff] %v3503
    %3552 = vst [vmem:[#allocation7 + $0x10] sm:$0xff] %v3542
    %3553 = vst [vmem:[#allocation7 + $0x18] sm:$0xff] %v3543
    %3554 = vst [vmem:[#allocation7 + $0x20] sm:$0xff] %v3504
    %3555 = vst [vmem:[#allocation7 + $0x28] sm:$0xff] %v3505
    %3556 = vst [vmem:[#allocation7 + $0x30] sm:$0xff] %v3544
    %3557 = vst [vmem:[#allocation7 + $0x38] sm:$0xff] %v3545
    %3558 = vst [vmem:[#allocation7 + $0x40] sm:$0xff] %v3506
    %3559 = vst [vmem:[#allocation7 + $0x48] sm:$0xff] %v3507
    %3560 = vst [vmem:[#allocation7 + $0x50] sm:$0xff] %v3546
    %3561 = vst [vmem:[#allocation7 + $0x58] sm:$0xff] %v3547
    %3562 = vst [vmem:[#allocation7 + $0x60] sm:$0xff] %v3508
    %3563 = vst [vmem:[#allocation7 + $0x68] sm:$0xff] %v3509
    %3564 = vst [vmem:[#allocation7 + $0x70] sm:$0xff] %v3548
    %3565 = vst [vmem:[#allocation7 + $0x78] sm:$0xff] %v3549
    // Predicated region
    $region74: #{tpu_custom_call.1} parent=1 // pred_check
      _
    $region75: #{tpu_custom_call.1} parent=1 // pred_check_branch
      %3567 = sbr.rel (0) target = $region77
    $region76: #{tpu_custom_call.1} parent=1 // pred_region
      %3569 = vsyncadd [#allocation6], 0
      %s3570 = sshll.u32 [#allocation7], 4
      %s3571 = int_to_ptr.vmem [resolvable:$true] %s3570
      %s3572 = sshll.u32 %s17, 4
      %s3573 = int_to_ptr.hbm [resolvable:$true] %s3572
      %3578 = dma.vmem_to_hbm [thread:$0]  %s3571, 2048, %s3573, [#allocation6], 512, 512, 32
    $region77: #{tpu_custom_call.1} parent=1 // pred_fallthru
      _
    // Predicated region
    $region78: #{tpu_custom_call.1} parent=1 // pred_check
      _
    $region79: #{tpu_custom_call.1} parent=1 // pred_check_branch
      %3580 = sbr.rel (0) target = $region81
    $region80: #{tpu_custom_call.1} parent=1 // pred_region
      %3582 = dma.done [#allocation6], 2048
    $region81: #{tpu_custom_call.1} parent=1 // pred_fallthru
      _
    %3583 = vsyncpa [#allocation5], 1
    %3584 = vsyncpa [#allocation6], 1

</llo_original>
